<compile_context>
chip_gen: v7x
topology: tpu7x:2x2x1
jax: 0.10.0
libtpu: 0.0.40
codegen_flags: <defaults>
</compile_context>

<pallas_src>
import jax
import jax.numpy as jnp
from jax.experimental import pallas as pl
from jax.experimental.pallas import tpu as pltpu

EMB_DIM = 512
HIDDEN_DIMS = (512, 512, 512, 512)
NUM_LAYERS = len(HIDDEN_DIMS)
LR_MUL = 1.0
NEG_SLOPE = 0.2


def _encoder_kernel(x_ref, w_ref, b_ref, o_ref):
    """Fused 4x (EqualLinear + LeakyReLU(0.2)) on a [tile_b, 512] activation tile.

    x_ref: [tile_b, 512] bf16 activation tile (EqualLinear scale pre-folded into weights).
    w_ref: [4, 512, 512] bf16 pre-scaled, transposed weights ((W * scale).T).
    b_ref: [4, 1, 512]  f32 biases (already * lr_mul).
    o_ref: [tile_b, 512] f32 output tile.
    """
    h = x_ref[...]  # bf16
    for l in range(NUM_LAYERS):
        # bf16 x bf16 MXU matmul, f32 accumulation.
        h = jnp.dot(h, w_ref[l], preferred_element_type=jnp.float32)
        h = h + b_ref[l]
        h = jnp.maximum(h, NEG_SLOPE * h)          # LeakyReLU(0.2) (slope < 1)
        if l != NUM_LAYERS - 1:
            h = h.astype(jnp.bfloat16)             # MXU-native operand for next layer
    o_ref[...] = h


def text_encoder_forward(clip_embedding, w_packed, b_packed, *, tile_b=None):
    """clip_embedding: [B, 512] float; w_packed: [L,512,512] bf16; b_packed: [L,1,512] f32."""
    B, D = clip_embedding.shape
    assert D == EMB_DIM
    L, _, out_dim = w_packed.shape

    # bf16 activations into the kernel (halves activation HBM traffic; scale is in W).
    x = clip_embedding.astype(jnp.bfloat16)

    if tile_b is None:
        if B <= 128:
            tile_b = B            # small batch: single tile
        elif B >= 512:
            tile_b = 512          # amortize ~0.35us per-grid-step overhead
        elif B >= 256:
            tile_b = 256
        else:
            tile_b = 128

    # Pad batch up to a tile multiple instead of falling back to a whole-batch tile.
    B_pad = pl.cdiv(B, tile_b) * tile_b
    if B_pad != B:
        x = jnp.pad(x, ((0, B_pad - B), (0, 0)))

    grid = (B_pad // tile_b,)

    out = pl.pallas_call(
        _encoder_kernel,
        out_shape=jax.ShapeDtypeStruct((B_pad, out_dim), jnp.float32),
        grid=grid,
        in_specs=[
            pl.BlockSpec((tile_b, D), lambda i: (i, 0)),
            # Constant index_maps -> packed weights/biases stay VMEM-resident across tiles.
            pl.BlockSpec((L, D, out_dim), lambda i: (0, 0, 0)),
            pl.BlockSpec((L, 1, out_dim), lambda i: (0, 0, 0)),
        ],
        out_specs=pl.BlockSpec((tile_b, out_dim), lambda i: (i, 0)),
        compiler_params=pltpu.CompilerParams(
            dimension_semantics=("parallel",),
            # ~2 MiB bf16 weights (x2 bufs) + activation tiles up to tile_b=512.
            vmem_limit_bytes=32 << 20,
        ),
    )(x, w_packed, b_packed)

    return out[:B] if B_pad != B else out


def init_raw_params(key):
    """Raw PyTorch-style EqualLinear params in f32: W (out,in) ~ N(0,1)/lr_mul, small b."""
    params = []
    in_dim = EMB_DIM
    for h_dim in HIDDEN_DIMS:
        key, wk, bk = jax.random.split(key, 3)
        w = jax.random.normal(wk, (h_dim, in_dim), jnp.float32) / LR_MUL
        b = 0.01 * jax.random.normal(bk, (h_dim,), jnp.float32)
        params.append((w, b))
        in_dim = h_dim
    return params


def pack_params(raw_params):
    """Fold EqualLinear scale (1/sqrt(in_dim) * lr_mul) into frozen bf16 weights and lr_mul
    into the f32 biases, then pack all layers into single arrays (fewer, larger DMAs)."""
    ws, bs = [], []
    for w, b in raw_params:
        scale = (1.0 / (w.shape[1] ** 0.5)) * LR_MUL
        ws.append((w.T * scale).astype(jnp.bfloat16))   # (in, out), pre-scaled
        bs.append((b * LR_MUL).reshape(1, -1))          # (1, out)
    return jnp.stack(ws), jnp.stack(bs)


def reference_forward_matched(clip_embedding, w_packed, b_packed):
    """Pure-JAX reference using the exact same bf16 quantization as the kernel."""
    h = clip_embedding.astype(jnp.bfloat16)
    n = w_packed.shape[0]
    for l in range(n):
        h = jnp.dot(h, w_packed[l], preferred_element_type=jnp.float32)
        h = h + b_packed[l]
        h = jnp.maximum(h, NEG_SLOPE * h)
        if l != n - 1:
            h = h.astype(jnp.bfloat16)
    return h


def reference_forward_f32(clip_embedding, raw_params):
    """End-to-end f32 reference with original PyTorch EqualLinear + LeakyReLU semantics."""
    h = clip_embedding.astype(jnp.float32)
    for w, b in raw_params:
        scale = (1.0 / (w.shape[1] ** 0.5)) * LR_MUL
        h = h @ (w * scale).T + b * LR_MUL
        h = jnp.where(h >= 0, h, NEG_SLOPE * h)
    return h


if __name__ == "__main__":
    key = jax.random.PRNGKey(0)
    key, xk = jax.random.split(key)

    B = 8  # small batch of "clip embeddings"
    # Stand-in for CLIP output (TODO(synk): real CLIP backbone not run here).
    clip_embedding = jax.random.normal(xk, (B, EMB_DIM), jnp.float32)

    raw_params = init_raw_params(key)
    w_packed, b_packed = pack_params(raw_params)

    out = text_encoder_forward(clip_embedding, w_packed, b_packed)
    out = jax.block_until_ready(out)
    assert out.shape == (B, HIDDEN_DIMS[-1])

    # Kernel vs reference with identical quantization (tight tolerance).
    ref = reference_forward_matched(clip_embedding, w_packed, b_packed)
    assert jnp.allclose(out, ref, atol=1e-3, rtol=1e-3), "mismatch vs matched-quant reference"

    # End-to-end check against full-f32 PyTorch-semantics math (only bf16 quantization error).
    ref32 = reference_forward_f32(clip_embedding, raw_params)
    max_err = float(jnp.max(jnp.abs(out - ref32)))
    assert max_err < 0.1, f"bf16 quantization error too large vs f32 reference: {max_err}"

    print("KERNEL_OK")
</pallas_src>

<mosaic_0001>
module attributes {stable_mosaic.version = 11 : i64} {
  func.func @_encoder_kernel(%arg0: i32, %arg1: memref<8x512xbf16, #tpu.memory_space<vmem>>, %arg2: memref<4x512x512xbf16, #tpu.memory_space<vmem>>, %arg3: memref<4x1x512xf32, #tpu.memory_space<vmem>>, %arg4: memref<8x512xf32, #tpu.memory_space<vmem>>) attributes {dimension_semantics = [#tpu.dimension_semantics<parallel>], iteration_bounds = array<i64: 1>, scalar_prefetch = 0 : i64, scratch_operands = 0 : i64, tpu.core_type = #tpu.core_type<tc>, window_params = [{transform_indices = @transform_0, window_bounds = array<i64: 8, 512>}, {pipeline_mode = #tpu.pipeline_mode<synchronous>, transform_indices = @transform_1, window_bounds = array<i64: 4, 512, 512>}, {pipeline_mode = #tpu.pipeline_mode<synchronous>, transform_indices = @transform_2, window_bounds = array<i64: 4, 1, 512>}, {transform_indices = @transform_3, window_bounds = array<i64: 8, 512>}]} {
    %c0 = arith.constant 0 : index
    %c0_0 = arith.constant 0 : index
    %0 = vector.load %arg1[%c0, %c0_0] : memref<8x512xbf16, #tpu.memory_space<vmem>>, vector<8x512xbf16>
    %c0_1 = arith.constant 0 : index
    %c0_2 = arith.constant 0 : index
    %c0_3 = arith.constant 0 : index
    %1 = vector.load %arg2[%c0_1, %c0_2, %c0_3] : memref<4x512x512xbf16, #tpu.memory_space<vmem>>, vector<1x512x512xbf16>
    %2 = vector.shape_cast %1 : vector<1x512x512xbf16> to vector<512x512xbf16>
    %cst = arith.constant dense<0.000000e+00> : vector<8x512xf32>
    %3 = tpu.matmul %0, %2, %cst {dimension_numbers = #tpu.dot_dimension_numbers<[1], [0], [0], [1], [0, 0, 1, 1], [], []>} : vector<8x512xbf16>, vector<512x512xbf16>, vector<8x512xf32> -> vector<8x512xf32>
    %c0_4 = arith.constant 0 : index
    %c0_5 = arith.constant 0 : index
    %c0_6 = arith.constant 0 : index
    %4 = vector.load %arg3[%c0_4, %c0_5, %c0_6] : memref<4x1x512xf32, #tpu.memory_space<vmem>>, vector<1x1x512xf32>
    %5 = vector.shape_cast %4 : vector<1x1x512xf32> to vector<1x512xf32>
    %6 = vector.broadcast %5 : vector<1x512xf32> to vector<8x512xf32>
    %7 = arith.addf %3, %6 : vector<8x512xf32>
    %cst_7 = arith.constant 2.000000e-01 : f32
    %8 = vector.broadcast %cst_7 : f32 to vector<8x512xf32>
    %9 = arith.mulf %8, %7 : vector<8x512xf32>
    %10 = arith.maximumf %7, %9 : vector<8x512xf32>
    %11 = arith.truncf %10 : vector<8x512xf32> to vector<8x512xbf16>
    %c1 = arith.constant 1 : index
    %c0_8 = arith.constant 0 : index
    %c0_9 = arith.constant 0 : index
    %12 = vector.load %arg2[%c1, %c0_8, %c0_9] : memref<4x512x512xbf16, #tpu.memory_space<vmem>>, vector<1x512x512xbf16>
    %13 = vector.shape_cast %12 : vector<1x512x512xbf16> to vector<512x512xbf16>
    %cst_10 = arith.constant dense<0.000000e+00> : vector<8x512xf32>
    %14 = tpu.matmul %11, %13, %cst_10 {dimension_numbers = #tpu.dot_dimension_numbers<[1], [0], [0], [1], [0, 0, 1, 1], [], []>} : vector<8x512xbf16>, vector<512x512xbf16>, vector<8x512xf32> -> vector<8x512xf32>
    %c1_11 = arith.constant 1 : index
    %c0_12 = arith.constant 0 : index
    %c0_13 = arith.constant 0 : index
    %15 = vector.load %arg3[%c1_11, %c0_12, %c0_13] : memref<4x1x512xf32, #tpu.memory_space<vmem>>, vector<1x1x512xf32>
    %16 = vector.shape_cast %15 : vector<1x1x512xf32> to vector<1x512xf32>
    %17 = vector.broadcast %16 : vector<1x512xf32> to vector<8x512xf32>
    %18 = arith.addf %14, %17 : vector<8x512xf32>
    %cst_14 = arith.constant 2.000000e-01 : f32
    %19 = vector.broadcast %cst_14 : f32 to vector<8x512xf32>
    %20 = arith.mulf %19, %18 : vector<8x512xf32>
    %21 = arith.maximumf %18, %20 : vector<8x512xf32>
    %22 = arith.truncf %21 : vector<8x512xf32> to vector<8x512xbf16>
    %c2 = arith.constant 2 : index
    %c0_15 = arith.constant 0 : index
    %c0_16 = arith.constant 0 : index
    %23 = vector.load %arg2[%c2, %c0_15, %c0_16] : memref<4x512x512xbf16, #tpu.memory_space<vmem>>, vector<1x512x512xbf16>
    %24 = vector.shape_cast %23 : vector<1x512x512xbf16> to vector<512x512xbf16>
    %cst_17 = arith.constant dense<0.000000e+00> : vector<8x512xf32>
    %25 = tpu.matmul %22, %24, %cst_17 {dimension_numbers = #tpu.dot_dimension_numbers<[1], [0], [0], [1], [0, 0, 1, 1], [], []>} : vector<8x512xbf16>, vector<512x512xbf16>, vector<8x512xf32> -> vector<8x512xf32>
    %c2_18 = arith.constant 2 : index
    %c0_19 = arith.constant 0 : index
    %c0_20 = arith.constant 0 : index
    %26 = vector.load %arg3[%c2_18, %c0_19, %c0_20] : memref<4x1x512xf32, #tpu.memory_space<vmem>>, vector<1x1x512xf32>
    %27 = vector.shape_cast %26 : vector<1x1x512xf32> to vector<1x512xf32>
    %28 = vector.broadcast %27 : vector<1x512xf32> to vector<8x512xf32>
    %29 = arith.addf %25, %28 : vector<8x512xf32>
    %cst_21 = arith.constant 2.000000e-01 : f32
    %30 = vector.broadcast %cst_21 : f32 to vector<8x512xf32>
    %31 = arith.mulf %30, %29 : vector<8x512xf32>
    %32 = arith.maximumf %29, %31 : vector<8x512xf32>
    %33 = arith.truncf %32 : vector<8x512xf32> to vector<8x512xbf16>
    %c3 = arith.constant 3 : index
    %c0_22 = arith.constant 0 : index
    %c0_23 = arith.constant 0 : index
    %34 = vector.load %arg2[%c3, %c0_22, %c0_23] : memref<4x512x512xbf16, #tpu.memory_space<vmem>>, vector<1x512x512xbf16>
    %35 = vector.shape_cast %34 : vector<1x512x512xbf16> to vector<512x512xbf16>
    %cst_24 = arith.constant dense<0.000000e+00> : vector<8x512xf32>
    %36 = tpu.matmul %33, %35, %cst_24 {dimension_numbers = #tpu.dot_dimension_numbers<[1], [0], [0], [1], [0, 0, 1, 1], [], []>} : vector<8x512xbf16>, vector<512x512xbf16>, vector<8x512xf32> -> vector<8x512xf32>
    %c3_25 = arith.constant 3 : index
    %c0_26 = arith.constant 0 : index
    %c0_27 = arith.constant 0 : index
    %37 = vector.load %arg3[%c3_25, %c0_26, %c0_27] : memref<4x1x512xf32, #tpu.memory_space<vmem>>, vector<1x1x512xf32>
    %38 = vector.shape_cast %37 : vector<1x1x512xf32> to vector<1x512xf32>
    %39 = vector.broadcast %38 : vector<1x512xf32> to vector<8x512xf32>
    %40 = arith.addf %36, %39 : vector<8x512xf32>
    %cst_28 = arith.constant 2.000000e-01 : f32
    %41 = vector.broadcast %cst_28 : f32 to vector<8x512xf32>
    %42 = arith.mulf %41, %40 : vector<8x512xf32>
    %43 = arith.maximumf %40, %42 : vector<8x512xf32>
    %c0_29 = arith.constant 0 : index
    %c0_30 = arith.constant 0 : index
    %44 = vector.load %arg4[%c0_29, %c0_30] : memref<8x512xf32, #tpu.memory_space<vmem>>, vector<8x512xf32>
    tpu.vector_store %arg4[%c0_29, %c0_30], %43 {strides = array<i32>} : memref<8x512xf32, #tpu.memory_space<vmem>>, vector<8x512xf32>,
    return
  }
  func.func @transform_0(%arg0: i32) -> (i32, i32) {
    %c0_i32 = arith.constant 0 : i32
    %c0_i32_0 = arith.constant 0 : i32
    return %arg0, %c0_i32 : i32, i32
  }
  func.func @transform_1(%arg0: i32) -> (i32, i32, i32) {
    %c0_i32 = arith.constant 0 : i32
    %c0_i32_0 = arith.constant 0 : i32
    %c0_i32_1 = arith.constant 0 : i32
    %c0_i32_2 = arith.constant 0 : i32
    return %c0_i32, %c0_i32_0, %c0_i32_1 : i32, i32, i32
  }
  func.func @transform_2(%arg0: i32) -> (i32, i32, i32) {
    %c0_i32 = arith.constant 0 : i32
    %c0_i32_0 = arith.constant 0 : i32
    %c0_i32_1 = arith.constant 0 : i32
    %c0_i32_2 = arith.constant 0 : i32
    return %c0_i32, %c0_i32_0, %c0_i32_1 : i32, i32, i32
  }
  func.func @transform_3(%arg0: i32) -> (i32, i32) {
    %c0_i32 = arith.constant 0 : i32
    %c0_i32_0 = arith.constant 0 : i32
    return %arg0, %c0_i32 : i32, i32
  }
}

</mosaic_0001>

<llo_original>
// kernel: tpu_custom_call.1
$region0: #{tpu_custom_call.1}
  #allocation0 [shape = 'u32[]', space=smem, size = 0x4, offset = 0x4, fixed_abs, tag = 'smem constant byte address 0x4 - core index']
  #allocation1 [shape = 'u32[144,128]{1,0:T(1,128)}', space=vmem, size = 0x12000, scoped, tag = 'internal scratch']
  %s0 = inlined_call_operand.hbm [shape: bf16[8,512], index: 0, kind: input, shape index: {}]
  %s1 = inlined_call_operand.hbm [shape: bf16[4,512,512], index: 1, kind: input, shape index: {}]
  %s2 = inlined_call_operand.hbm [shape: f32[4,1,512], index: 2, kind: input, shape index: {}]
  %s3 = inlined_call_operand.hbm [shape: f32[8,512], index: 3, kind: output, shape index: {}]
  %s4 = sld [smem:[#allocation0]]
  $region34: #{tpu_custom_call.1} parent=0
    _
  %s6 = ssub.s32 1, %s4
  %s7 = scalar_select 0, %s6, %s4
  $region1: #{tpu_custom_call.1} parent=0
    #allocation2 [shape = 'u8[8192]{0}', space=vmem, size = 0x2000, scoped, tag = 'input window, operand 0, single buffered']
    #allocation3 [shape = 's32[1]{0}', space=sflag, size = 0x4, scoped, tag = 'scoped memory for tpu_custom_call.1']
    #allocation4 [shape = 's32[1]{0}', space=sflag, size = 0x4, scoped, tag = 'scoped memory for tpu_custom_call.1']
    #allocation5 [shape = 'u8[2097152]{0}', space=vmem, size = 0x200000, scoped, tag = 'input window, operand 1, single buffered']
    #allocation6 [shape = 's32[1]{0}', space=sflag, size = 0x4, scoped, tag = 'scoped memory for tpu_custom_call.1']
    #allocation7 [shape = 'u8[8192]{0}', space=vmem, size = 0x2000, scoped, tag = 'input window, operand 2, single buffered']
    #allocation8 [shape = 'u8[16384]{0}', space=vmem, size = 0x4000, scoped, tag = 'output window, operand 0, single buffered']
    %8 = vsyncpa [#allocation3], 0
    %9 = vsyncpa [#allocation6], 0
    %10 = vsyncpa [#allocation4], 0
    // Predicated region
    $region2: #{tpu_custom_call.1} parent=1 // pred_check
      _
    $region3: #{tpu_custom_call.1} parent=1 // pred_check_branch
      %12 = sbr.rel (0) target = $region5
    $region4: #{tpu_custom_call.1} parent=1 // pred_region
      %s14 = ssub.s32 256, 256
      %15 = vsyncadd [#allocation3], %s14
      %s17 = sshll.u32 [#allocation2], 4
      %s18 = int_to_ptr.vmem [resolvable:$true] %s17
      %20 = dma.hbm_to_vmem [thread:$0]  %s0, 256, %s18, [#allocation3]
    $region5: #{tpu_custom_call.1} parent=1 // pred_fallthru
      _
    // Predicated region
    $region6: #{tpu_custom_call.1} parent=1 // pred_check
      _
    $region7: #{tpu_custom_call.1} parent=1 // pred_check_branch
      %22 = sbr.rel (0) target = $region9
    $region8: #{tpu_custom_call.1} parent=1 // pred_region
      %s24 = ssub.s32 65536, 65536
      %25 = vsyncadd [#allocation6], %s24
      %s26 = sshll.u32 [#allocation5], 4
      %s27 = int_to_ptr.vmem [resolvable:$true] %s26
      %32 = dma.hbm_to_vmem [thread:$0]  %s1, 65536, %s27, [#allocation6], 256, 256, 16
    $region9: #{tpu_custom_call.1} parent=1 // pred_fallthru
      _
    // Predicated region
    $region10: #{tpu_custom_call.1} parent=1 // pred_check
      _
    $region11: #{tpu_custom_call.1} parent=1 // pred_check_branch
      %34 = sbr.rel (0) target = $region13
    $region12: #{tpu_custom_call.1} parent=1 // pred_region
      %s36 = ssub.s32 256, 256
      %37 = vsyncadd [#allocation6], %s36
      %s38 = sshll.u32 [#allocation7], 4
      %s39 = int_to_ptr.vmem [resolvable:$true] %s38
      %44 = dma.hbm_to_vmem [thread:$0]  %s2, 256, %s39, [#allocation6], 64, 64, 4
    $region13: #{tpu_custom_call.1} parent=1 // pred_fallthru
      _
    // Predicated region
    $region14: #{tpu_custom_call.1} parent=1 // pred_check
      _
    $region15: #{tpu_custom_call.1} parent=1 // pred_check_branch
      %46 = sbr.rel (0) target = $region17
    $region16: #{tpu_custom_call.1} parent=1 // pred_region
      %47 = dma.done [#allocation3], 256
    $region17: #{tpu_custom_call.1} parent=1 // pred_fallthru
      _
    // Predicated region
    $region18: #{tpu_custom_call.1} parent=1 // pred_check
      _
    $region19: #{tpu_custom_call.1} parent=1 // pred_check_branch
      %49 = sbr.rel (0) target = $region21
    $region20: #{tpu_custom_call.1} parent=1 // pred_region
      %50 = dma.done [#allocation6], 65536
    $region21: #{tpu_custom_call.1} parent=1 // pred_fallthru
      _
    // Predicated region
    $region22: #{tpu_custom_call.1} parent=1 // pred_check
      _
    $region23: #{tpu_custom_call.1} parent=1 // pred_check_branch
      %52 = sbr.rel (0) target = $region25
    $region24: #{tpu_custom_call.1} parent=1 // pred_region
      %53 = dma.done [#allocation6], 256
    $region25: #{tpu_custom_call.1} parent=1 // pred_fallthru
      _
    %v54 = vld [vmem:[#allocation2] sm:$0xff]
    %v55 = vld [vmem:[#allocation2 + $0x8] sm:$0xff]
    %v56 = vld [vmem:[#allocation5] sm:$0xff]
    %v57 = vld [vmem:[#allocation5 + $0x8] sm:$0xff]
    %v58 = vld [vmem:[#allocation5 + $0x10] sm:$0xff]
    %v59 = vld [vmem:[#allocation5 + $0x18] sm:$0xff]
    %v60 = vld [vmem:[#allocation5 + $0x20] sm:$0xff]
    %v61 = vld [vmem:[#allocation5 + $0x28] sm:$0xff]
    %v62 = vld [vmem:[#allocation5 + $0x30] sm:$0xff]
    %v63 = vld [vmem:[#allocation5 + $0x38] sm:$0xff]
    %v64 = vld [vmem:[#allocation5 + $0x40] sm:$0xff]
    %v65 = vld [vmem:[#allocation5 + $0x48] sm:$0xff]
    %v66 = vld [vmem:[#allocation5 + $0x50] sm:$0xff]
    %v67 = vld [vmem:[#allocation5 + $0x58] sm:$0xff]
    %v68 = vld [vmem:[#allocation5 + $0x60] sm:$0xff]
    %v69 = vld [vmem:[#allocation5 + $0x68] sm:$0xff]
    %v70 = vld [vmem:[#allocation5 + $0x70] sm:$0xff]
    %v71 = vld [vmem:[#allocation5 + $0x78] sm:$0xff]
    %v72 = vld [vmem:[#allocation5 + $0x80] sm:$0xff]
    %v73 = vld [vmem:[#allocation5 + $0x88] sm:$0xff]
    %v74 = vld [vmem:[#allocation5 + $0x90] sm:$0xff]
    %v75 = vld [vmem:[#allocation5 + $0x98] sm:$0xff]
    %v76 = vld [vmem:[#allocation5 + $0xa0] sm:$0xff]
    %v77 = vld [vmem:[#allocation5 + $0xa8] sm:$0xff]
    %v78 = vld [vmem:[#allocation5 + $0xb0] sm:$0xff]
    %v79 = vld [vmem:[#allocation5 + $0xb8] sm:$0xff]
    %v80 = vld [vmem:[#allocation5 + $0xc0] sm:$0xff]
    %v81 = vld [vmem:[#allocation5 + $0xc8] sm:$0xff]
    %v82 = vld [vmem:[#allocation5 + $0xd0] sm:$0xff]
    %v83 = vld [vmem:[#allocation5 + $0xd8] sm:$0xff]
    %v84 = vld [vmem:[#allocation5 + $0xe0] sm:$0xff]
    %v85 = vld [vmem:[#allocation5 + $0xe8] sm:$0xff]
    %v86 = vld [vmem:[#allocation5 + $0xf0] sm:$0xff]
    %v87 = vld [vmem:[#allocation5 + $0xf8] sm:$0xff]
    %v88 = vld [vmem:[#allocation5 + $0x100] sm:$0xff]
    %v89 = vld [vmem:[#allocation5 + $0x108] sm:$0xff]
    %v90 = vld [vmem:[#allocation5 + $0x110] sm:$0xff]
    %v91 = vld [vmem:[#allocation5 + $0x118] sm:$0xff]
    %v92 = vld [vmem:[#allocation5 + $0x120] sm:$0xff]
    %v93 = vld [vmem:[#allocation5 + $0x128] sm:$0xff]
    %v94 = vld [vmem:[#allocation5 + $0x130] sm:$0xff]
    %v95 = vld [vmem:[#allocation5 + $0x138] sm:$0xff]
    %v96 = vld [vmem:[#allocation5 + $0x140] sm:$0xff]
    %v97 = vld [vmem:[#allocation5 + $0x148] sm:$0xff]
    %v98 = vld [vmem:[#allocation5 + $0x150] sm:$0xff]
    %v99 = vld [vmem:[#allocation5 + $0x158] sm:$0xff]
    %v100 = vld [vmem:[#allocation5 + $0x160] sm:$0xff]
    %v101 = vld [vmem:[#allocation5 + $0x168] sm:$0xff]
    %v102 = vld [vmem:[#allocation5 + $0x170] sm:$0xff]
    %v103 = vld [vmem:[#allocation5 + $0x178] sm:$0xff]
    %v104 = vld [vmem:[#allocation5 + $0x180] sm:$0xff]
    %v105 = vld [vmem:[#allocation5 + $0x188] sm:$0xff]
    %v106 = vld [vmem:[#allocation5 + $0x190] sm:$0xff]
    %v107 = vld [vmem:[#allocation5 + $0x198] sm:$0xff]
    %v108 = vld [vmem:[#allocation5 + $0x1a0] sm:$0xff]
    %v109 = vld [vmem:[#allocation5 + $0x1a8] sm:$0xff]
    %v110 = vld [vmem:[#allocation5 + $0x1b0] sm:$0xff]
    %v111 = vld [vmem:[#allocation5 + $0x1b8] sm:$0xff]
    %v112 = vld [vmem:[#allocation5 + $0x1c0] sm:$0xff]
    %v113 = vld [vmem:[#allocation5 + $0x1c8] sm:$0xff]
    %v114 = vld [vmem:[#allocation5 + $0x1d0] sm:$0xff]
    %v115 = vld [vmem:[#allocation5 + $0x1d8] sm:$0xff]
    %v116 = vld [vmem:[#allocation5 + $0x1e0] sm:$0xff]
    %v117 = vld [vmem:[#allocation5 + $0x1e8] sm:$0xff]
    %v118 = vld [vmem:[#allocation5 + $0x1f0] sm:$0xff]
    %v119 = vld [vmem:[#allocation5 + $0x1f8] sm:$0xff]
    %v120 = vld [vmem:[#allocation5 + $0x200] sm:$0xff]
    %v121 = vld [vmem:[#allocation5 + $0x208] sm:$0xff]
    %v122 = vld [vmem:[#allocation5 + $0x210] sm:$0xff]
    %v123 = vld [vmem:[#allocation5 + $0x218] sm:$0xff]
    %v124 = vld [vmem:[#allocation5 + $0x220] sm:$0xff]
    %v125 = vld [vmem:[#allocation5 + $0x228] sm:$0xff]
    %v126 = vld [vmem:[#allocation5 + $0x230] sm:$0xff]
    %v127 = vld [vmem:[#allocation5 + $0x238] sm:$0xff]
    %v128 = vld [vmem:[#allocation5 + $0x240] sm:$0xff]
    %v129 = vld [vmem:[#allocation5 + $0x248] sm:$0xff]
    %v130 = vld [vmem:[#allocation5 + $0x250] sm:$0xff]
    %v131 = vld [vmem:[#allocation5 + $0x258] sm:$0xff]
    %v132 = vld [vmem:[#allocation5 + $0x260] sm:$0xff]
    %v133 = vld [vmem:[#allocation5 + $0x268] sm:$0xff]
    %v134 = vld [vmem:[#allocation5 + $0x270] sm:$0xff]
    %v135 = vld [vmem:[#allocation5 + $0x278] sm:$0xff]
    %v136 = vld [vmem:[#allocation5 + $0x280] sm:$0xff]
    %v137 = vld [vmem:[#allocation5 + $0x288] sm:$0xff]
    %v138 = vld [vmem:[#allocation5 + $0x290] sm:$0xff]
    %v139 = vld [vmem:[#allocation5 + $0x298] sm:$0xff]
    %v140 = vld [vmem:[#allocation5 + $0x2a0] sm:$0xff]
    %v141 = vld [vmem:[#allocation5 + $0x2a8] sm:$0xff]
    %v142 = vld [vmem:[#allocation5 + $0x2b0] sm:$0xff]
    %v143 = vld [vmem:[#allocation5 + $0x2b8] sm:$0xff]
    %v144 = vld [vmem:[#allocation5 + $0x2c0] sm:$0xff]
    %v145 = vld [vmem:[#allocation5 + $0x2c8] sm:$0xff]
    %v146 = vld [vmem:[#allocation5 + $0x2d0] sm:$0xff]
    %v147 = vld [vmem:[#allocation5 + $0x2d8] sm:$0xff]
    %v148 = vld [vmem:[#allocation5 + $0x2e0] sm:$0xff]
    %v149 = vld [vmem:[#allocation5 + $0x2e8] sm:$0xff]
    %v150 = vld [vmem:[#allocation5 + $0x2f0] sm:$0xff]
    %v151 = vld [vmem:[#allocation5 + $0x2f8] sm:$0xff]
    %v152 = vld [vmem:[#allocation5 + $0x300] sm:$0xff]
    %v153 = vld [vmem:[#allocation5 + $0x308] sm:$0xff]
    %v154 = vld [vmem:[#allocation5 + $0x310] sm:$0xff]
    %v155 = vld [vmem:[#allocation5 + $0x318] sm:$0xff]
    %v156 = vld [vmem:[#allocation5 + $0x320] sm:$0xff]
    %v157 = vld [vmem:[#allocation5 + $0x328] sm:$0xff]
    %v158 = vld [vmem:[#allocation5 + $0x330] sm:$0xff]
    %v159 = vld [vmem:[#allocation5 + $0x338] sm:$0xff]
    %v160 = vld [vmem:[#allocation5 + $0x340] sm:$0xff]
    %v161 = vld [vmem:[#allocation5 + $0x348] sm:$0xff]
    %v162 = vld [vmem:[#allocation5 + $0x350] sm:$0xff]
    %v163 = vld [vmem:[#allocation5 + $0x358] sm:$0xff]
    %v164 = vld [vmem:[#allocation5 + $0x360] sm:$0xff]
    %v165 = vld [vmem:[#allocation5 + $0x368] sm:$0xff]
    %v166 = vld [vmem:[#allocation5 + $0x370] sm:$0xff]
    %v167 = vld [vmem:[#allocation5 + $0x378] sm:$0xff]
    %v168 = vld [vmem:[#allocation5 + $0x380] sm:$0xff]
    %v169 = vld [vmem:[#allocation5 + $0x388] sm:$0xff]
    %v170 = vld [vmem:[#allocation5 + $0x390] sm:$0xff]
    %v171 = vld [vmem:[#allocation5 + $0x398] sm:$0xff]
    %v172 = vld [vmem:[#allocation5 + $0x3a0] sm:$0xff]
    %v173 = vld [vmem:[#allocation5 + $0x3a8] sm:$0xff]
    %v174 = vld [vmem:[#allocation5 + $0x3b0] sm:$0xff]
    %v175 = vld [vmem:[#allocation5 + $0x3b8] sm:$0xff]
    %v176 = vld [vmem:[#allocation5 + $0x3c0] sm:$0xff]
    %v177 = vld [vmem:[#allocation5 + $0x3c8] sm:$0xff]
    %v178 = vld [vmem:[#allocation5 + $0x3d0] sm:$0xff]
    %v179 = vld [vmem:[#allocation5 + $0x3d8] sm:$0xff]
    %v180 = vld [vmem:[#allocation5 + $0x3e0] sm:$0xff]
    %v181 = vld [vmem:[#allocation5 + $0x3e8] sm:$0xff]
    %v182 = vld [vmem:[#allocation5 + $0x3f0] sm:$0xff]
    %v183 = vld [vmem:[#allocation5 + $0x3f8] sm:$0xff]
    %v184 = vld [vmem:[#allocation7] sm:$0xf]
    %v186 = vlaneseq
    %v187 = vshrl.u32 %v186, 7
    %v188 = vsub.s32 0, %v187
    %v189 = vrot.slane %v184, %v188
    %v190 = vlaneseq
    %v191 = vshrl.u32 %v190, 7
    %v192 = vsub.s32 1, %v191
    %v193 = vrot.slane %v184, %v192
    %v194 = vlaneseq
    %v195 = vshrl.u32 %v194, 7
    %v196 = vsub.s32 2, %v195
    %v197 = vrot.slane %v184, %v196
    %v198 = vlaneseq
    %v199 = vshrl.u32 %v198, 7
    %v200 = vsub.s32 3, %v199
    %v201 = vrot.slane %v184, %v200
    %v208 = vunpack.c.l.b16 %v54
    %v209 = vunpack.c.h.b16 %v54
    %v210 = vunpack.c.l.b16 %v55
    %v211 = vunpack.c.h.b16 %v55
    %v212 = vpack.c.b16 %v208, %v208
    %v213 = vpack.c.b16 %v209, %v209
    %v214 = vpack.c.b16 %v210, %v210
    %v215 = vpack.c.b16 %v211, %v211
    %v348 = vunpack.c.l.b16 %v56
    %v349 = vunpack.c.h.b16 %v56
    %v350 = vunpack.c.l.b16 %v57
    %v351 = vunpack.c.h.b16 %v57
    %v352 = vunpack.c.l.b16 %v58
    %v353 = vunpack.c.h.b16 %v58
    %v354 = vunpack.c.l.b16 %v59
    %v355 = vunpack.c.h.b16 %v59
    %v356 = vunpack.c.l.b16 %v60
    %v357 = vunpack.c.h.b16 %v60
    %v358 = vunpack.c.l.b16 %v61
    %v359 = vunpack.c.h.b16 %v61
    %v360 = vunpack.c.l.b16 %v62
    %v361 = vunpack.c.h.b16 %v62
    %v362 = vunpack.c.l.b16 %v63
    %v363 = vunpack.c.h.b16 %v63
    %v364 = vunpack.c.l.b16 %v64
    %v365 = vunpack.c.h.b16 %v64
    %v366 = vunpack.c.l.b16 %v65
    %v367 = vunpack.c.h.b16 %v65
    %v368 = vunpack.c.l.b16 %v66
    %v369 = vunpack.c.h.b16 %v66
    %v370 = vunpack.c.l.b16 %v67
    %v371 = vunpack.c.h.b16 %v67
    %v372 = vunpack.c.l.b16 %v68
    %v373 = vunpack.c.h.b16 %v68
    %v374 = vunpack.c.l.b16 %v69
    %v375 = vunpack.c.h.b16 %v69
    %v376 = vunpack.c.l.b16 %v70
    %v377 = vunpack.c.h.b16 %v70
    %v378 = vunpack.c.l.b16 %v71
    %v379 = vunpack.c.h.b16 %v71
    %v380 = vunpack.c.l.b16 %v72
    %v381 = vunpack.c.h.b16 %v72
    %v382 = vunpack.c.l.b16 %v73
    %v383 = vunpack.c.h.b16 %v73
    %v384 = vunpack.c.l.b16 %v74
    %v385 = vunpack.c.h.b16 %v74
    %v386 = vunpack.c.l.b16 %v75
    %v387 = vunpack.c.h.b16 %v75
    %v388 = vunpack.c.l.b16 %v76
    %v389 = vunpack.c.h.b16 %v76
    %v390 = vunpack.c.l.b16 %v77
    %v391 = vunpack.c.h.b16 %v77
    %v392 = vunpack.c.l.b16 %v78
    %v393 = vunpack.c.h.b16 %v78
    %v394 = vunpack.c.l.b16 %v79
    %v395 = vunpack.c.h.b16 %v79
    %v396 = vunpack.c.l.b16 %v80
    %v397 = vunpack.c.h.b16 %v80
    %v398 = vunpack.c.l.b16 %v81
    %v399 = vunpack.c.h.b16 %v81
    %v400 = vunpack.c.l.b16 %v82
    %v401 = vunpack.c.h.b16 %v82
    %v402 = vunpack.c.l.b16 %v83
    %v403 = vunpack.c.h.b16 %v83
    %v404 = vunpack.c.l.b16 %v84
    %v405 = vunpack.c.h.b16 %v84
    %v406 = vunpack.c.l.b16 %v85
    %v407 = vunpack.c.h.b16 %v85
    %v408 = vunpack.c.l.b16 %v86
    %v409 = vunpack.c.h.b16 %v86
    %v410 = vunpack.c.l.b16 %v87
    %v411 = vunpack.c.h.b16 %v87
    %v412 = vunpack.c.l.b16 %v88
    %v413 = vunpack.c.h.b16 %v88
    %v414 = vunpack.c.l.b16 %v89
    %v415 = vunpack.c.h.b16 %v89
    %v416 = vunpack.c.l.b16 %v90
    %v417 = vunpack.c.h.b16 %v90
    %v418 = vunpack.c.l.b16 %v91
    %v419 = vunpack.c.h.b16 %v91
    %v420 = vunpack.c.l.b16 %v92
    %v421 = vunpack.c.h.b16 %v92
    %v422 = vunpack.c.l.b16 %v93
    %v423 = vunpack.c.h.b16 %v93
    %v424 = vunpack.c.l.b16 %v94
    %v425 = vunpack.c.h.b16 %v94
    %v426 = vunpack.c.l.b16 %v95
    %v427 = vunpack.c.h.b16 %v95
    %v428 = vunpack.c.l.b16 %v96
    %v429 = vunpack.c.h.b16 %v96
    %v430 = vunpack.c.l.b16 %v97
    %v431 = vunpack.c.h.b16 %v97
    %v432 = vunpack.c.l.b16 %v98
    %v433 = vunpack.c.h.b16 %v98
    %v434 = vunpack.c.l.b16 %v99
    %v435 = vunpack.c.h.b16 %v99
    %v436 = vunpack.c.l.b16 %v100
    %v437 = vunpack.c.h.b16 %v100
    %v438 = vunpack.c.l.b16 %v101
    %v439 = vunpack.c.h.b16 %v101
    %v440 = vunpack.c.l.b16 %v102
    %v441 = vunpack.c.h.b16 %v102
    %v442 = vunpack.c.l.b16 %v103
    %v443 = vunpack.c.h.b16 %v103
    %v444 = vunpack.c.l.b16 %v104
    %v445 = vunpack.c.h.b16 %v104
    %v446 = vunpack.c.l.b16 %v105
    %v447 = vunpack.c.h.b16 %v105
    %v448 = vunpack.c.l.b16 %v106
    %v449 = vunpack.c.h.b16 %v106
    %v450 = vunpack.c.l.b16 %v107
    %v451 = vunpack.c.h.b16 %v107
    %v452 = vunpack.c.l.b16 %v108
    %v453 = vunpack.c.h.b16 %v108
    %v454 = vunpack.c.l.b16 %v109
    %v455 = vunpack.c.h.b16 %v109
    %v456 = vunpack.c.l.b16 %v110
    %v457 = vunpack.c.h.b16 %v110
    %v458 = vunpack.c.l.b16 %v111
    %v459 = vunpack.c.h.b16 %v111
    %v460 = vunpack.c.l.b16 %v112
    %v461 = vunpack.c.h.b16 %v112
    %v462 = vunpack.c.l.b16 %v113
    %v463 = vunpack.c.h.b16 %v113
    %v464 = vunpack.c.l.b16 %v114
    %v465 = vunpack.c.h.b16 %v114
    %v466 = vunpack.c.l.b16 %v115
    %v467 = vunpack.c.h.b16 %v115
    %v468 = vunpack.c.l.b16 %v116
    %v469 = vunpack.c.h.b16 %v116
    %v470 = vunpack.c.l.b16 %v117
    %v471 = vunpack.c.h.b16 %v117
    %v472 = vunpack.c.l.b16 %v118
    %v473 = vunpack.c.h.b16 %v118
    %v474 = vunpack.c.l.b16 %v119
    %v475 = vunpack.c.h.b16 %v119
    %v476 = vunpack.c.l.b16 %v120
    %v477 = vunpack.c.h.b16 %v120
    %v478 = vunpack.c.l.b16 %v121
    %v479 = vunpack.c.h.b16 %v121
    %v480 = vunpack.c.l.b16 %v122
    %v481 = vunpack.c.h.b16 %v122
    %v482 = vunpack.c.l.b16 %v123
    %v483 = vunpack.c.h.b16 %v123
    %v484 = vunpack.c.l.b16 %v124
    %v485 = vunpack.c.h.b16 %v124
    %v486 = vunpack.c.l.b16 %v125
    %v487 = vunpack.c.h.b16 %v125
    %v488 = vunpack.c.l.b16 %v126
    %v489 = vunpack.c.h.b16 %v126
    %v490 = vunpack.c.l.b16 %v127
    %v491 = vunpack.c.h.b16 %v127
    %v492 = vunpack.c.l.b16 %v128
    %v493 = vunpack.c.h.b16 %v128
    %v494 = vunpack.c.l.b16 %v129
    %v495 = vunpack.c.h.b16 %v129
    %v496 = vunpack.c.l.b16 %v130
    %v497 = vunpack.c.h.b16 %v130
    %v498 = vunpack.c.l.b16 %v131
    %v499 = vunpack.c.h.b16 %v131
    %v500 = vunpack.c.l.b16 %v132
    %v501 = vunpack.c.h.b16 %v132
    %v502 = vunpack.c.l.b16 %v133
    %v503 = vunpack.c.h.b16 %v133
    %v504 = vunpack.c.l.b16 %v134
    %v505 = vunpack.c.h.b16 %v134
    %v506 = vunpack.c.l.b16 %v135
    %v507 = vunpack.c.h.b16 %v135
    %v508 = vunpack.c.l.b16 %v136
    %v509 = vunpack.c.h.b16 %v136
    %v510 = vunpack.c.l.b16 %v137
    %v511 = vunpack.c.h.b16 %v137
    %v512 = vunpack.c.l.b16 %v138
    %v513 = vunpack.c.h.b16 %v138
    %v514 = vunpack.c.l.b16 %v139
    %v515 = vunpack.c.h.b16 %v139
    %v516 = vunpack.c.l.b16 %v140
    %v517 = vunpack.c.h.b16 %v140
    %v518 = vunpack.c.l.b16 %v141
    %v519 = vunpack.c.h.b16 %v141
    %v520 = vunpack.c.l.b16 %v142
    %v521 = vunpack.c.h.b16 %v142
    %v522 = vunpack.c.l.b16 %v143
    %v523 = vunpack.c.h.b16 %v143
    %v524 = vunpack.c.l.b16 %v144
    %v525 = vunpack.c.h.b16 %v144
    %v526 = vunpack.c.l.b16 %v145
    %v527 = vunpack.c.h.b16 %v145
    %v528 = vunpack.c.l.b16 %v146
    %v529 = vunpack.c.h.b16 %v146
    %v530 = vunpack.c.l.b16 %v147
    %v531 = vunpack.c.h.b16 %v147
    %v532 = vunpack.c.l.b16 %v148
    %v533 = vunpack.c.h.b16 %v148
    %v534 = vunpack.c.l.b16 %v149
    %v535 = vunpack.c.h.b16 %v149
    %v536 = vunpack.c.l.b16 %v150
    %v537 = vunpack.c.h.b16 %v150
    %v538 = vunpack.c.l.b16 %v151
    %v539 = vunpack.c.h.b16 %v151
    %v540 = vunpack.c.l.b16 %v152
    %v541 = vunpack.c.h.b16 %v152
    %v542 = vunpack.c.l.b16 %v153
    %v543 = vunpack.c.h.b16 %v153
    %v544 = vunpack.c.l.b16 %v154
    %v545 = vunpack.c.h.b16 %v154
    %v546 = vunpack.c.l.b16 %v155
    %v547 = vunpack.c.h.b16 %v155
    %v548 = vunpack.c.l.b16 %v156
    %v549 = vunpack.c.h.b16 %v156
    %v550 = vunpack.c.l.b16 %v157
    %v551 = vunpack.c.h.b16 %v157
    %v552 = vunpack.c.l.b16 %v158
    %v553 = vunpack.c.h.b16 %v158
    %v554 = vunpack.c.l.b16 %v159
    %v555 = vunpack.c.h.b16 %v159
    %v556 = vunpack.c.l.b16 %v160
    %v557 = vunpack.c.h.b16 %v160
    %v558 = vunpack.c.l.b16 %v161
    %v559 = vunpack.c.h.b16 %v161
    %v560 = vunpack.c.l.b16 %v162
    %v561 = vunpack.c.h.b16 %v162
    %v562 = vunpack.c.l.b16 %v163
    %v563 = vunpack.c.h.b16 %v163
    %v564 = vunpack.c.l.b16 %v164
    %v565 = vunpack.c.h.b16 %v164
    %v566 = vunpack.c.l.b16 %v165
    %v567 = vunpack.c.h.b16 %v165
    %v568 = vunpack.c.l.b16 %v166
    %v569 = vunpack.c.h.b16 %v166
    %v570 = vunpack.c.l.b16 %v167
    %v571 = vunpack.c.h.b16 %v167
    %v572 = vunpack.c.l.b16 %v168
    %v573 = vunpack.c.h.b16 %v168
    %v574 = vunpack.c.l.b16 %v169
    %v575 = vunpack.c.h.b16 %v169
    %v576 = vunpack.c.l.b16 %v170
    %v577 = vunpack.c.h.b16 %v170
    %v578 = vunpack.c.l.b16 %v171
    %v579 = vunpack.c.h.b16 %v171
    %v580 = vunpack.c.l.b16 %v172
    %v581 = vunpack.c.h.b16 %v172
    %v582 = vunpack.c.l.b16 %v173
    %v583 = vunpack.c.h.b16 %v173
    %v584 = vunpack.c.l.b16 %v174
    %v585 = vunpack.c.h.b16 %v174
    %v586 = vunpack.c.l.b16 %v175
    %v587 = vunpack.c.h.b16 %v175
    %v588 = vunpack.c.l.b16 %v176
    %v589 = vunpack.c.h.b16 %v176
    %v590 = vunpack.c.l.b16 %v177
    %v591 = vunpack.c.h.b16 %v177
    %v592 = vunpack.c.l.b16 %v178
    %v593 = vunpack.c.h.b16 %v178
    %v594 = vunpack.c.l.b16 %v179
    %v595 = vunpack.c.h.b16 %v179
    %v596 = vunpack.c.l.b16 %v180
    %v597 = vunpack.c.h.b16 %v180
    %v598 = vunpack.c.l.b16 %v181
    %v599 = vunpack.c.h.b16 %v181
    %v600 = vunpack.c.l.b16 %v182
    %v601 = vunpack.c.h.b16 %v182
    %v602 = vunpack.c.l.b16 %v183
    %v603 = vunpack.c.h.b16 %v183
    %v604 = vpack.c.b16 %v352, %v348
    %v605 = vpack.c.b16 %v353, %v349
    %v606 = vpack.c.b16 %v354, %v350
    %v607 = vpack.c.b16 %v355, %v351
    %v608 = vpack.c.b16 %v360, %v356
    %v609 = vpack.c.b16 %v361, %v357
    %v610 = vpack.c.b16 %v362, %v358
    %v611 = vpack.c.b16 %v363, %v359
    %v612 = vpack.c.b16 %v368, %v364
    %v613 = vpack.c.b16 %v369, %v365
    %v614 = vpack.c.b16 %v370, %v366
    %v615 = vpack.c.b16 %v371, %v367
    %v616 = vpack.c.b16 %v376, %v372
    %v617 = vpack.c.b16 %v377, %v373
    %v618 = vpack.c.b16 %v378, %v374
    %v619 = vpack.c.b16 %v379, %v375
    %v620 = vpack.c.b16 %v384, %v380
    %v621 = vpack.c.b16 %v385, %v381
    %v622 = vpack.c.b16 %v386, %v382
    %v623 = vpack.c.b16 %v387, %v383
    %v624 = vpack.c.b16 %v392, %v388
    %v625 = vpack.c.b16 %v393, %v389
    %v626 = vpack.c.b16 %v394, %v390
    %v627 = vpack.c.b16 %v395, %v391
    %v628 = vpack.c.b16 %v400, %v396
    %v629 = vpack.c.b16 %v401, %v397
    %v630 = vpack.c.b16 %v402, %v398
    %v631 = vpack.c.b16 %v403, %v399
    %v632 = vpack.c.b16 %v408, %v404
    %v633 = vpack.c.b16 %v409, %v405
    %v634 = vpack.c.b16 %v410, %v406
    %v635 = vpack.c.b16 %v411, %v407
    %v636 = vpack.c.b16 %v416, %v412
    %v637 = vpack.c.b16 %v417, %v413
    %v638 = vpack.c.b16 %v418, %v414
    %v639 = vpack.c.b16 %v419, %v415
    %v640 = vpack.c.b16 %v424, %v420
    %v641 = vpack.c.b16 %v425, %v421
    %v642 = vpack.c.b16 %v426, %v422
    %v643 = vpack.c.b16 %v427, %v423
    %v644 = vpack.c.b16 %v432, %v428
    %v645 = vpack.c.b16 %v433, %v429
    %v646 = vpack.c.b16 %v434, %v430
    %v647 = vpack.c.b16 %v435, %v431
    %v648 = vpack.c.b16 %v440, %v436
    %v649 = vpack.c.b16 %v441, %v437
    %v650 = vpack.c.b16 %v442, %v438
    %v651 = vpack.c.b16 %v443, %v439
    %v652 = vpack.c.b16 %v448, %v444
    %v653 = vpack.c.b16 %v449, %v445
    %v654 = vpack.c.b16 %v450, %v446
    %v655 = vpack.c.b16 %v451, %v447
    %v656 = vpack.c.b16 %v456, %v452
    %v657 = vpack.c.b16 %v457, %v453
    %v658 = vpack.c.b16 %v458, %v454
    %v659 = vpack.c.b16 %v459, %v455
    %v660 = vpack.c.b16 %v464, %v460
    %v661 = vpack.c.b16 %v465, %v461
    %v662 = vpack.c.b16 %v466, %v462
    %v663 = vpack.c.b16 %v467, %v463
    %v664 = vpack.c.b16 %v472, %v468
    %v665 = vpack.c.b16 %v473, %v469
    %v666 = vpack.c.b16 %v474, %v470
    %v667 = vpack.c.b16 %v475, %v471
    %v668 = vpack.c.b16 %v480, %v476
    %v669 = vpack.c.b16 %v481, %v477
    %v670 = vpack.c.b16 %v482, %v478
    %v671 = vpack.c.b16 %v483, %v479
    %v672 = vpack.c.b16 %v488, %v484
    %v673 = vpack.c.b16 %v489, %v485
    %v674 = vpack.c.b16 %v490, %v486
    %v675 = vpack.c.b16 %v491, %v487
    %v676 = vpack.c.b16 %v496, %v492
    %v677 = vpack.c.b16 %v497, %v493
    %v678 = vpack.c.b16 %v498, %v494
    %v679 = vpack.c.b16 %v499, %v495
    %v680 = vpack.c.b16 %v504, %v500
    %v681 = vpack.c.b16 %v505, %v501
    %v682 = vpack.c.b16 %v506, %v502
    %v683 = vpack.c.b16 %v507, %v503
    %v684 = vpack.c.b16 %v512, %v508
    %v685 = vpack.c.b16 %v513, %v509
    %v686 = vpack.c.b16 %v514, %v510
    %v687 = vpack.c.b16 %v515, %v511
    %v688 = vpack.c.b16 %v520, %v516
    %v689 = vpack.c.b16 %v521, %v517
    %v690 = vpack.c.b16 %v522, %v518
    %v691 = vpack.c.b16 %v523, %v519
    %v692 = vpack.c.b16 %v528, %v524
    %v693 = vpack.c.b16 %v529, %v525
    %v694 = vpack.c.b16 %v530, %v526
    %v695 = vpack.c.b16 %v531, %v527
    %v696 = vpack.c.b16 %v536, %v532
    %v697 = vpack.c.b16 %v537, %v533
    %v698 = vpack.c.b16 %v538, %v534
    %v699 = vpack.c.b16 %v539, %v535
    %v700 = vpack.c.b16 %v544, %v540
    %v701 = vpack.c.b16 %v545, %v541
    %v702 = vpack.c.b16 %v546, %v542
    %v703 = vpack.c.b16 %v547, %v543
    %v704 = vpack.c.b16 %v552, %v548
    %v705 = vpack.c.b16 %v553, %v549
    %v706 = vpack.c.b16 %v554, %v550
    %v707 = vpack.c.b16 %v555, %v551
    %v708 = vpack.c.b16 %v560, %v556
    %v709 = vpack.c.b16 %v561, %v557
    %v710 = vpack.c.b16 %v562, %v558
    %v711 = vpack.c.b16 %v563, %v559
    %v712 = vpack.c.b16 %v568, %v564
    %v713 = vpack.c.b16 %v569, %v565
    %v714 = vpack.c.b16 %v570, %v566
    %v715 = vpack.c.b16 %v571, %v567
    %v716 = vpack.c.b16 %v576, %v572
    %v717 = vpack.c.b16 %v577, %v573
    %v718 = vpack.c.b16 %v578, %v574
    %v719 = vpack.c.b16 %v579, %v575
    %v720 = vpack.c.b16 %v584, %v580
    %v721 = vpack.c.b16 %v585, %v581
    %v722 = vpack.c.b16 %v586, %v582
    %v723 = vpack.c.b16 %v587, %v583
    %v724 = vpack.c.b16 %v592, %v588
    %v725 = vpack.c.b16 %v593, %v589
    %v726 = vpack.c.b16 %v594, %v590
    %v727 = vpack.c.b16 %v595, %v591
    %v728 = vpack.c.b16 %v600, %v596
    %v729 = vpack.c.b16 %v601, %v597
    %v730 = vpack.c.b16 %v602, %v598
    %v731 = vpack.c.b16 %v603, %v599
    %860 = vmatprep.subr.bf16.mxu0 %v605
    %861 = vmatpush1.bf16.msra.mxu0 %v604
    %862 = vmatprep.subr.bf16.mxu0 %v609
    %863 = vmatpush1.bf16.msra.mxu0 %v608
    %864 = vmatprep.subr.bf16.mxu0 %v613
    %865 = vmatpush1.bf16.msra.mxu0 %v612
    %866 = vmatprep.subr.bf16.mxu0 %v617
    %867 = vmatpush1.bf16.msra.mxu0 %v616
    %868 = vmatprep.subr.bf16.mxu0 %v621
    %869 = vmatpush1.bf16.msra.mxu0 %v620
    %870 = vmatprep.subr.bf16.mxu0 %v625
    %871 = vmatpush1.bf16.msra.mxu0 %v624
    %872 = vmatprep.subr.bf16.mxu0 %v629
    %873 = vmatpush1.bf16.msra.mxu0 %v628
    %874 = vmatprep.subr.bf16.mxu0 %v633
    %875 = vmatpush1.bf16.msra.mxu0 %v632
    %876 = vmatprep.subr.bf16.mxu0 %v637
    %877 = vmatpush1.bf16.msra.mxu0 %v636
    %878 = vmatprep.subr.bf16.mxu0 %v641
    %879 = vmatpush1.bf16.msra.mxu0 %v640
    %880 = vmatprep.subr.bf16.mxu0 %v645
    %881 = vmatpush1.bf16.msra.mxu0 %v644
    %882 = vmatprep.subr.bf16.mxu0 %v649
    %883 = vmatpush1.bf16.msra.mxu0 %v648
    %884 = vmatprep.subr.bf16.mxu0 %v653
    %885 = vmatpush1.bf16.msra.mxu0 %v652
    %886 = vmatprep.subr.bf16.mxu0 %v657
    %887 = vmatpush1.bf16.msra.mxu0 %v656
    %888 = vmatprep.subr.bf16.mxu0 %v661
    %889 = vmatpush1.bf16.msra.mxu0 %v660
    %890 = vmatprep.subr.bf16.mxu0 %v665
    %891 = vmatpush1.bf16.msra.mxu0 %v664
    %892 = vmatprep.mubr.bf16.mxu0 %v213
    %893 = vmatmul.mubr.bf16.gmra.mrb[0].mxu0 %v212
    %v894 = vpop.f32.mrb[0].mxu0
    %v895 = vadd.f32 %v189, %v894
    %v896 = vpop.f32.mrb[0].mxu0
    %v897 = vadd.f32 %v193, %v896
    %v898 = vpop.f32.mrb[0].mxu0
    %v899 = vpop.f32.mrb[0].mxu0
    %900 = vdwg.mxu0
    %901 = vmatprep.subr.bf16.mxu0 %v669
    %902 = vmatpush1.bf16.msra.mxu0 %v668
    %903 = vmatprep.subr.bf16.mxu0 %v673
    %904 = vmatpush1.bf16.msra.mxu0 %v672
    %905 = vmatprep.subr.bf16.mxu0 %v677
    %906 = vmatpush1.bf16.msra.mxu0 %v676
    %907 = vmatprep.subr.bf16.mxu0 %v681
    %908 = vmatpush1.bf16.msra.mxu0 %v680
    %909 = vmatprep.subr.bf16.mxu0 %v685
    %910 = vmatpush1.bf16.msra.mxu0 %v684
    %911 = vmatprep.subr.bf16.mxu0 %v689
    %912 = vmatpush1.bf16.msra.mxu0 %v688
    %913 = vmatprep.subr.bf16.mxu0 %v693
    %914 = vmatpush1.bf16.msra.mxu0 %v692
    %915 = vmatprep.subr.bf16.mxu0 %v697
    %916 = vmatpush1.bf16.msra.mxu0 %v696
    %917 = vmatprep.subr.bf16.mxu0 %v701
    %918 = vmatpush1.bf16.msra.mxu0 %v700
    %919 = vmatprep.subr.bf16.mxu0 %v705
    %920 = vmatpush1.bf16.msra.mxu0 %v704
    %921 = vmatprep.subr.bf16.mxu0 %v709
    %922 = vmatpush1.bf16.msra.mxu0 %v708
    %923 = vmatprep.subr.bf16.mxu0 %v713
    %924 = vmatpush1.bf16.msra.mxu0 %v712
    %925 = vmatprep.subr.bf16.mxu0 %v717
    %926 = vmatpush1.bf16.msra.mxu0 %v716
    %927 = vmatprep.subr.bf16.mxu0 %v721
    %928 = vmatpush1.bf16.msra.mxu0 %v720
    %929 = vmatprep.subr.bf16.mxu0 %v725
    %930 = vmatpush1.bf16.msra.mxu0 %v724
    %931 = vmatprep.subr.bf16.mxu0 %v729
    %932 = vmatpush1.bf16.msra.mxu0 %v728
    %933 = vmatprep.mubr.bf16.mxu0 %v215
    %934 = vmatmul.mubr.bf16.gmra.mrb[0].mxu0 %v214
    %v935 = vpop.f32.mrb[0].mxu0
    %v936 = vadd.f32 %v895, %v935
    %v937 = vpop.f32.mrb[0].mxu0
    %v938 = vadd.f32 %v897, %v937
    %v939 = vpop.f32.mrb[0].mxu0
    %v940 = vpop.f32.mrb[0].mxu0
    %941 = vdwg.mxu0
    %942 = vmatprep.subr.bf16.mxu0 %v607
    %943 = vmatpush1.bf16.msra.mxu0 %v606
    %944 = vmatprep.subr.bf16.mxu0 %v611
    %945 = vmatpush1.bf16.msra.mxu0 %v610
    %946 = vmatprep.subr.bf16.mxu0 %v615
    %947 = vmatpush1.bf16.msra.mxu0 %v614
    %948 = vmatprep.subr.bf16.mxu0 %v619
    %949 = vmatpush1.bf16.msra.mxu0 %v618
    %950 = vmatprep.subr.bf16.mxu0 %v623
    %951 = vmatpush1.bf16.msra.mxu0 %v622
    %952 = vmatprep.subr.bf16.mxu0 %v627
    %953 = vmatpush1.bf16.msra.mxu0 %v626
    %954 = vmatprep.subr.bf16.mxu0 %v631
    %955 = vmatpush1.bf16.msra.mxu0 %v630
    %956 = vmatprep.subr.bf16.mxu0 %v635
    %957 = vmatpush1.bf16.msra.mxu0 %v634
    %958 = vmatprep.subr.bf16.mxu0 %v639
    %959 = vmatpush1.bf16.msra.mxu0 %v638
    %960 = vmatprep.subr.bf16.mxu0 %v643
    %961 = vmatpush1.bf16.msra.mxu0 %v642
    %962 = vmatprep.subr.bf16.mxu0 %v647
    %963 = vmatpush1.bf16.msra.mxu0 %v646
    %964 = vmatprep.subr.bf16.mxu0 %v651
    %965 = vmatpush1.bf16.msra.mxu0 %v650
    %966 = vmatprep.subr.bf16.mxu0 %v655
    %967 = vmatpush1.bf16.msra.mxu0 %v654
    %968 = vmatprep.subr.bf16.mxu0 %v659
    %969 = vmatpush1.bf16.msra.mxu0 %v658
    %970 = vmatprep.subr.bf16.mxu0 %v663
    %971 = vmatpush1.bf16.msra.mxu0 %v662
    %972 = vmatprep.subr.bf16.mxu0 %v667
    %973 = vmatpush1.bf16.msra.mxu0 %v666
    %974 = vmatprep.mubr.bf16.mxu0 %v213
    %975 = vmatmul.mubr.bf16.gmra.mrb[0].mxu0 %v212
    %v976 = vpop.f32.mrb[0].mxu0
    %v977 = vadd.f32 %v197, %v976
    %v978 = vpop.f32.mrb[0].mxu0
    %v979 = vadd.f32 %v201, %v978
    %v980 = vpop.f32.mrb[0].mxu0
    %v981 = vpop.f32.mrb[0].mxu0
    %982 = vdwg.mxu0
    %983 = vmatprep.subr.bf16.mxu0 %v671
    %984 = vmatpush1.bf16.msra.mxu0 %v670
    %985 = vmatprep.subr.bf16.mxu0 %v675
    %986 = vmatpush1.bf16.msra.mxu0 %v674
    %987 = vmatprep.subr.bf16.mxu0 %v679
    %988 = vmatpush1.bf16.msra.mxu0 %v678
    %989 = vmatprep.subr.bf16.mxu0 %v683
    %990 = vmatpush1.bf16.msra.mxu0 %v682
    %991 = vmatprep.subr.bf16.mxu0 %v687
    %992 = vmatpush1.bf16.msra.mxu0 %v686
    %993 = vmatprep.subr.bf16.mxu0 %v691
    %994 = vmatpush1.bf16.msra.mxu0 %v690
    %995 = vmatprep.subr.bf16.mxu0 %v695
    %996 = vmatpush1.bf16.msra.mxu0 %v694
    %997 = vmatprep.subr.bf16.mxu0 %v699
    %998 = vmatpush1.bf16.msra.mxu0 %v698
    %999 = vmatprep.subr.bf16.mxu0 %v703
    %1000 = vmatpush1.bf16.msra.mxu0 %v702
    %1001 = vmatprep.subr.bf16.mxu0 %v707
    %1002 = vmatpush1.bf16.msra.mxu0 %v706
    %1003 = vmatprep.subr.bf16.mxu0 %v711
    %1004 = vmatpush1.bf16.msra.mxu0 %v710
    %1005 = vmatprep.subr.bf16.mxu0 %v715
    %1006 = vmatpush1.bf16.msra.mxu0 %v714
    %1007 = vmatprep.subr.bf16.mxu0 %v719
    %1008 = vmatpush1.bf16.msra.mxu0 %v718
    %1009 = vmatprep.subr.bf16.mxu0 %v723
    %1010 = vmatpush1.bf16.msra.mxu0 %v722
    %1011 = vmatprep.subr.bf16.mxu0 %v727
    %1012 = vmatpush1.bf16.msra.mxu0 %v726
    %1013 = vmatprep.subr.bf16.mxu0 %v731
    %1014 = vmatpush1.bf16.msra.mxu0 %v730
    %1015 = vmatprep.mubr.bf16.mxu0 %v215
    %1016 = vmatmul.mubr.bf16.gmra.mrb[0].mxu0 %v214
    %v1017 = vpop.f32.mrb[0].mxu0
    %v1018 = vadd.f32 %v977, %v1017
    %v1019 = vpop.f32.mrb[0].mxu0
    %v1020 = vadd.f32 %v979, %v1019
    %v1021 = vpop.f32.mrb[0].mxu0
    %v1022 = vpop.f32.mrb[0].mxu0
    %1023 = vdwg.mxu0
    %v1024 = vmul.f32 %v936, 0.2
    %v1025 = vmul.f32 %v938, 0.2
    %v1026 = vmul.f32 %v1018, 0.2
    %v1027 = vmul.f32 %v1020, 0.2
    %v1028 = vmax.f32 %v936, %v1024
    %v1029 = vmax.f32 %v938, %v1025
    %v1030 = vmax.f32 %v1018, %v1026
    %v1031 = vmax.f32 %v1020, %v1027
    %v1032 = vpack.c.bf16 %v1028, %v1028
    %v1033 = vpack.c.bf16 %v1029, %v1029
    %v1034 = vpack.c.bf16 %v1030, %v1030
    %v1035 = vpack.c.bf16 %v1031, %v1031
    %s1036 = scalar_lea.vmem [#allocation5], 1024
    %v1037 = vld [vmem:[%s1036] sm:$0xff]
    %v1038 = vld [vmem:[%s1036 + $0x8] sm:$0xff]
    %v1039 = vld [vmem:[%s1036 + $0x10] sm:$0xff]
    %v1040 = vld [vmem:[%s1036 + $0x18] sm:$0xff]
    %v1041 = vld [vmem:[%s1036 + $0x20] sm:$0xff]
    %v1042 = vld [vmem:[%s1036 + $0x28] sm:$0xff]
    %v1043 = vld [vmem:[%s1036 + $0x30] sm:$0xff]
    %v1044 = vld [vmem:[%s1036 + $0x38] sm:$0xff]
    %v1045 = vld [vmem:[%s1036 + $0x40] sm:$0xff]
    %v1046 = vld [vmem:[%s1036 + $0x48] sm:$0xff]
    %v1047 = vld [vmem:[%s1036 + $0x50] sm:$0xff]
    %v1048 = vld [vmem:[%s1036 + $0x58] sm:$0xff]
    %v1049 = vld [vmem:[%s1036 + $0x60] sm:$0xff]
    %v1050 = vld [vmem:[%s1036 + $0x68] sm:$0xff]
    %v1051 = vld [vmem:[%s1036 + $0x70] sm:$0xff]
    %v1052 = vld [vmem:[%s1036 + $0x78] sm:$0xff]
    %v1053 = vld [vmem:[%s1036 + $0x80] sm:$0xff]
    %v1054 = vld [vmem:[%s1036 + $0x88] sm:$0xff]
    %v1055 = vld [vmem:[%s1036 + $0x90] sm:$0xff]
    %v1056 = vld [vmem:[%s1036 + $0x98] sm:$0xff]
    %v1057 = vld [vmem:[%s1036 + $0xa0] sm:$0xff]
    %v1058 = vld [vmem:[%s1036 + $0xa8] sm:$0xff]
    %v1059 = vld [vmem:[%s1036 + $0xb0] sm:$0xff]
    %v1060 = vld [vmem:[%s1036 + $0xb8] sm:$0xff]
    %v1061 = vld [vmem:[%s1036 + $0xc0] sm:$0xff]
    %v1062 = vld [vmem:[%s1036 + $0xc8] sm:$0xff]
    %v1063 = vld [vmem:[%s1036 + $0xd0] sm:$0xff]
    %v1064 = vld [vmem:[%s1036 + $0xd8] sm:$0xff]
    %v1065 = vld [vmem:[%s1036 + $0xe0] sm:$0xff]
    %v1066 = vld [vmem:[%s1036 + $0xe8] sm:$0xff]
    %v1067 = vld [vmem:[%s1036 + $0xf0] sm:$0xff]
    %v1068 = vld [vmem:[%s1036 + $0xf8] sm:$0xff]
    %v1069 = vld [vmem:[%s1036 + $0x100] sm:$0xff]
    %v1070 = vld [vmem:[%s1036 + $0x108] sm:$0xff]
    %v1071 = vld [vmem:[%s1036 + $0x110] sm:$0xff]
    %v1072 = vld [vmem:[%s1036 + $0x118] sm:$0xff]
    %v1073 = vld [vmem:[%s1036 + $0x120] sm:$0xff]
    %v1074 = vld [vmem:[%s1036 + $0x128] sm:$0xff]
    %v1075 = vld [vmem:[%s1036 + $0x130] sm:$0xff]
    %v1076 = vld [vmem:[%s1036 + $0x138] sm:$0xff]
    %v1077 = vld [vmem:[%s1036 + $0x140] sm:$0xff]
    %v1078 = vld [vmem:[%s1036 + $0x148] sm:$0xff]
    %v1079 = vld [vmem:[%s1036 + $0x150] sm:$0xff]
    %v1080 = vld [vmem:[%s1036 + $0x158] sm:$0xff]
    %v1081 = vld [vmem:[%s1036 + $0x160] sm:$0xff]
    %v1082 = vld [vmem:[%s1036 + $0x168] sm:$0xff]
    %v1083 = vld [vmem:[%s1036 + $0x170] sm:$0xff]
    %v1084 = vld [vmem:[%s1036 + $0x178] sm:$0xff]
    %v1085 = vld [vmem:[%s1036 + $0x180] sm:$0xff]
    %v1086 = vld [vmem:[%s1036 + $0x188] sm:$0xff]
    %v1087 = vld [vmem:[%s1036 + $0x190] sm:$0xff]
    %v1088 = vld [vmem:[%s1036 + $0x198] sm:$0xff]
    %v1089 = vld [vmem:[%s1036 + $0x1a0] sm:$0xff]
    %v1090 = vld [vmem:[%s1036 + $0x1a8] sm:$0xff]
    %v1091 = vld [vmem:[%s1036 + $0x1b0] sm:$0xff]
    %v1092 = vld [vmem:[%s1036 + $0x1b8] sm:$0xff]
    %v1093 = vld [vmem:[%s1036 + $0x1c0] sm:$0xff]
    %v1094 = vld [vmem:[%s1036 + $0x1c8] sm:$0xff]
    %v1095 = vld [vmem:[%s1036 + $0x1d0] sm:$0xff]
    %v1096 = vld [vmem:[%s1036 + $0x1d8] sm:$0xff]
    %v1097 = vld [vmem:[%s1036 + $0x1e0] sm:$0xff]
    %v1098 = vld [vmem:[%s1036 + $0x1e8] sm:$0xff]
    %v1099 = vld [vmem:[%s1036 + $0x1f0] sm:$0xff]
    %v1100 = vld [vmem:[%s1036 + $0x1f8] sm:$0xff]
    %v1101 = vld [vmem:[%s1036 + $0x200] sm:$0xff]
    %v1102 = vld [vmem:[%s1036 + $0x208] sm:$0xff]
    %v1103 = vld [vmem:[%s1036 + $0x210] sm:$0xff]
    %v1104 = vld [vmem:[%s1036 + $0x218] sm:$0xff]
    %v1105 = vld [vmem:[%s1036 + $0x220] sm:$0xff]
    %v1106 = vld [vmem:[%s1036 + $0x228] sm:$0xff]
    %v1107 = vld [vmem:[%s1036 + $0x230] sm:$0xff]
    %v1108 = vld [vmem:[%s1036 + $0x238] sm:$0xff]
    %v1109 = vld [vmem:[%s1036 + $0x240] sm:$0xff]
    %v1110 = vld [vmem:[%s1036 + $0x248] sm:$0xff]
    %v1111 = vld [vmem:[%s1036 + $0x250] sm:$0xff]
    %v1112 = vld [vmem:[%s1036 + $0x258] sm:$0xff]
    %v1113 = vld [vmem:[%s1036 + $0x260] sm:$0xff]
    %v1114 = vld [vmem:[%s1036 + $0x268] sm:$0xff]
    %v1115 = vld [vmem:[%s1036 + $0x270] sm:$0xff]
    %v1116 = vld [vmem:[%s1036 + $0x278] sm:$0xff]
    %v1117 = vld [vmem:[%s1036 + $0x280] sm:$0xff]
    %v1118 = vld [vmem:[%s1036 + $0x288] sm:$0xff]
    %v1119 = vld [vmem:[%s1036 + $0x290] sm:$0xff]
    %v1120 = vld [vmem:[%s1036 + $0x298] sm:$0xff]
    %v1121 = vld [vmem:[%s1036 + $0x2a0] sm:$0xff]
    %v1122 = vld [vmem:[%s1036 + $0x2a8] sm:$0xff]
    %v1123 = vld [vmem:[%s1036 + $0x2b0] sm:$0xff]
    %v1124 = vld [vmem:[%s1036 + $0x2b8] sm:$0xff]
    %v1125 = vld [vmem:[%s1036 + $0x2c0] sm:$0xff]
    %v1126 = vld [vmem:[%s1036 + $0x2c8] sm:$0xff]
    %v1127 = vld [vmem:[%s1036 + $0x2d0] sm:$0xff]
    %v1128 = vld [vmem:[%s1036 + $0x2d8] sm:$0xff]
    %v1129 = vld [vmem:[%s1036 + $0x2e0] sm:$0xff]
    %v1130 = vld [vmem:[%s1036 + $0x2e8] sm:$0xff]
    %v1131 = vld [vmem:[%s1036 + $0x2f0] sm:$0xff]
    %v1132 = vld [vmem:[%s1036 + $0x2f8] sm:$0xff]
    %v1133 = vld [vmem:[%s1036 + $0x300] sm:$0xff]
    %v1134 = vld [vmem:[%s1036 + $0x308] sm:$0xff]
    %v1135 = vld [vmem:[%s1036 + $0x310] sm:$0xff]
    %v1136 = vld [vmem:[%s1036 + $0x318] sm:$0xff]
    %v1137 = vld [vmem:[%s1036 + $0x320] sm:$0xff]
    %v1138 = vld [vmem:[%s1036 + $0x328] sm:$0xff]
    %v1139 = vld [vmem:[%s1036 + $0x330] sm:$0xff]
    %v1140 = vld [vmem:[%s1036 + $0x338] sm:$0xff]
    %v1141 = vld [vmem:[%s1036 + $0x340] sm:$0xff]
    %v1142 = vld [vmem:[%s1036 + $0x348] sm:$0xff]
    %v1143 = vld [vmem:[%s1036 + $0x350] sm:$0xff]
    %v1144 = vld [vmem:[%s1036 + $0x358] sm:$0xff]
    %v1145 = vld [vmem:[%s1036 + $0x360] sm:$0xff]
    %v1146 = vld [vmem:[%s1036 + $0x368] sm:$0xff]
    %v1147 = vld [vmem:[%s1036 + $0x370] sm:$0xff]
    %v1148 = vld [vmem:[%s1036 + $0x378] sm:$0xff]
    %v1149 = vld [vmem:[%s1036 + $0x380] sm:$0xff]
    %v1150 = vld [vmem:[%s1036 + $0x388] sm:$0xff]
    %v1151 = vld [vmem:[%s1036 + $0x390] sm:$0xff]
    %v1152 = vld [vmem:[%s1036 + $0x398] sm:$0xff]
    %v1153 = vld [vmem:[%s1036 + $0x3a0] sm:$0xff]
    %v1154 = vld [vmem:[%s1036 + $0x3a8] sm:$0xff]
    %v1155 = vld [vmem:[%s1036 + $0x3b0] sm:$0xff]
    %v1156 = vld [vmem:[%s1036 + $0x3b8] sm:$0xff]
    %v1157 = vld [vmem:[%s1036 + $0x3c0] sm:$0xff]
    %v1158 = vld [vmem:[%s1036 + $0x3c8] sm:$0xff]
    %v1159 = vld [vmem:[%s1036 + $0x3d0] sm:$0xff]
    %v1160 = vld [vmem:[%s1036 + $0x3d8] sm:$0xff]
    %v1161 = vld [vmem:[%s1036 + $0x3e0] sm:$0xff]
    %v1162 = vld [vmem:[%s1036 + $0x3e8] sm:$0xff]
    %v1163 = vld [vmem:[%s1036 + $0x3f0] sm:$0xff]
    %v1164 = vld [vmem:[%s1036 + $0x3f8] sm:$0xff]
    %s1165 = scalar_lea.vmem [#allocation7], 4
    %v1166 = vld [vmem:[%s1165] sm:$0xf]
    %v1168 = vlaneseq
    %v1169 = vshrl.u32 %v1168, 7
    %v1170 = vsub.s32 0, %v1169
    %v1171 = vrot.slane %v1166, %v1170
    %v1172 = vlaneseq
    %v1173 = vshrl.u32 %v1172, 7
    %v1174 = vsub.s32 1, %v1173
    %v1175 = vrot.slane %v1166, %v1174
    %v1176 = vlaneseq
    %v1177 = vshrl.u32 %v1176, 7
    %v1178 = vsub.s32 2, %v1177
    %v1179 = vrot.slane %v1166, %v1178
    %v1180 = vlaneseq
    %v1181 = vshrl.u32 %v1180, 7
    %v1182 = vsub.s32 3, %v1181
    %v1183 = vrot.slane %v1166, %v1182
    %v1316 = vunpack.c.l.b16 %v1037
    %v1317 = vunpack.c.h.b16 %v1037
    %v1318 = vunpack.c.l.b16 %v1038
    %v1319 = vunpack.c.h.b16 %v1038
    %v1320 = vunpack.c.l.b16 %v1039
    %v1321 = vunpack.c.h.b16 %v1039
    %v1322 = vunpack.c.l.b16 %v1040
    %v1323 = vunpack.c.h.b16 %v1040
    %v1324 = vunpack.c.l.b16 %v1041
    %v1325 = vunpack.c.h.b16 %v1041
    %v1326 = vunpack.c.l.b16 %v1042
    %v1327 = vunpack.c.h.b16 %v1042
    %v1328 = vunpack.c.l.b16 %v1043
    %v1329 = vunpack.c.h.b16 %v1043
    %v1330 = vunpack.c.l.b16 %v1044
    %v1331 = vunpack.c.h.b16 %v1044
    %v1332 = vunpack.c.l.b16 %v1045
    %v1333 = vunpack.c.h.b16 %v1045
    %v1334 = vunpack.c.l.b16 %v1046
    %v1335 = vunpack.c.h.b16 %v1046
    %v1336 = vunpack.c.l.b16 %v1047
    %v1337 = vunpack.c.h.b16 %v1047
    %v1338 = vunpack.c.l.b16 %v1048
    %v1339 = vunpack.c.h.b16 %v1048
    %v1340 = vunpack.c.l.b16 %v1049
    %v1341 = vunpack.c.h.b16 %v1049
    %v1342 = vunpack.c.l.b16 %v1050
    %v1343 = vunpack.c.h.b16 %v1050
    %v1344 = vunpack.c.l.b16 %v1051
    %v1345 = vunpack.c.h.b16 %v1051
    %v1346 = vunpack.c.l.b16 %v1052
    %v1347 = vunpack.c.h.b16 %v1052
    %v1348 = vunpack.c.l.b16 %v1053
    %v1349 = vunpack.c.h.b16 %v1053
    %v1350 = vunpack.c.l.b16 %v1054
    %v1351 = vunpack.c.h.b16 %v1054
    %v1352 = vunpack.c.l.b16 %v1055
    %v1353 = vunpack.c.h.b16 %v1055
    %v1354 = vunpack.c.l.b16 %v1056
    %v1355 = vunpack.c.h.b16 %v1056
    %v1356 = vunpack.c.l.b16 %v1057
    %v1357 = vunpack.c.h.b16 %v1057
    %v1358 = vunpack.c.l.b16 %v1058
    %v1359 = vunpack.c.h.b16 %v1058
    %v1360 = vunpack.c.l.b16 %v1059
    %v1361 = vunpack.c.h.b16 %v1059
    %v1362 = vunpack.c.l.b16 %v1060
    %v1363 = vunpack.c.h.b16 %v1060
    %v1364 = vunpack.c.l.b16 %v1061
    %v1365 = vunpack.c.h.b16 %v1061
    %v1366 = vunpack.c.l.b16 %v1062
    %v1367 = vunpack.c.h.b16 %v1062
    %v1368 = vunpack.c.l.b16 %v1063
    %v1369 = vunpack.c.h.b16 %v1063
    %v1370 = vunpack.c.l.b16 %v1064
    %v1371 = vunpack.c.h.b16 %v1064
    %v1372 = vunpack.c.l.b16 %v1065
    %v1373 = vunpack.c.h.b16 %v1065
    %v1374 = vunpack.c.l.b16 %v1066
    %v1375 = vunpack.c.h.b16 %v1066
    %v1376 = vunpack.c.l.b16 %v1067
    %v1377 = vunpack.c.h.b16 %v1067
    %v1378 = vunpack.c.l.b16 %v1068
    %v1379 = vunpack.c.h.b16 %v1068
    %v1380 = vunpack.c.l.b16 %v1069
    %v1381 = vunpack.c.h.b16 %v1069
    %v1382 = vunpack.c.l.b16 %v1070
    %v1383 = vunpack.c.h.b16 %v1070
    %v1384 = vunpack.c.l.b16 %v1071
    %v1385 = vunpack.c.h.b16 %v1071
    %v1386 = vunpack.c.l.b16 %v1072
    %v1387 = vunpack.c.h.b16 %v1072
    %v1388 = vunpack.c.l.b16 %v1073
    %v1389 = vunpack.c.h.b16 %v1073
    %v1390 = vunpack.c.l.b16 %v1074
    %v1391 = vunpack.c.h.b16 %v1074
    %v1392 = vunpack.c.l.b16 %v1075
    %v1393 = vunpack.c.h.b16 %v1075
    %v1394 = vunpack.c.l.b16 %v1076
    %v1395 = vunpack.c.h.b16 %v1076
    %v1396 = vunpack.c.l.b16 %v1077
    %v1397 = vunpack.c.h.b16 %v1077
    %v1398 = vunpack.c.l.b16 %v1078
    %v1399 = vunpack.c.h.b16 %v1078
    %v1400 = vunpack.c.l.b16 %v1079
    %v1401 = vunpack.c.h.b16 %v1079
    %v1402 = vunpack.c.l.b16 %v1080
    %v1403 = vunpack.c.h.b16 %v1080
    %v1404 = vunpack.c.l.b16 %v1081
    %v1405 = vunpack.c.h.b16 %v1081
    %v1406 = vunpack.c.l.b16 %v1082
    %v1407 = vunpack.c.h.b16 %v1082
    %v1408 = vunpack.c.l.b16 %v1083
    %v1409 = vunpack.c.h.b16 %v1083
    %v1410 = vunpack.c.l.b16 %v1084
    %v1411 = vunpack.c.h.b16 %v1084
    %v1412 = vunpack.c.l.b16 %v1085
    %v1413 = vunpack.c.h.b16 %v1085
    %v1414 = vunpack.c.l.b16 %v1086
    %v1415 = vunpack.c.h.b16 %v1086
    %v1416 = vunpack.c.l.b16 %v1087
    %v1417 = vunpack.c.h.b16 %v1087
    %v1418 = vunpack.c.l.b16 %v1088
    %v1419 = vunpack.c.h.b16 %v1088
    %v1420 = vunpack.c.l.b16 %v1089
    %v1421 = vunpack.c.h.b16 %v1089
    %v1422 = vunpack.c.l.b16 %v1090
    %v1423 = vunpack.c.h.b16 %v1090
    %v1424 = vunpack.c.l.b16 %v1091
    %v1425 = vunpack.c.h.b16 %v1091
    %v1426 = vunpack.c.l.b16 %v1092
    %v1427 = vunpack.c.h.b16 %v1092
    %v1428 = vunpack.c.l.b16 %v1093
    %v1429 = vunpack.c.h.b16 %v1093
    %v1430 = vunpack.c.l.b16 %v1094
    %v1431 = vunpack.c.h.b16 %v1094
    %v1432 = vunpack.c.l.b16 %v1095
    %v1433 = vunpack.c.h.b16 %v1095
    %v1434 = vunpack.c.l.b16 %v1096
    %v1435 = vunpack.c.h.b16 %v1096
    %v1436 = vunpack.c.l.b16 %v1097
    %v1437 = vunpack.c.h.b16 %v1097
    %v1438 = vunpack.c.l.b16 %v1098
    %v1439 = vunpack.c.h.b16 %v1098
    %v1440 = vunpack.c.l.b16 %v1099
    %v1441 = vunpack.c.h.b16 %v1099
    %v1442 = vunpack.c.l.b16 %v1100
    %v1443 = vunpack.c.h.b16 %v1100
    %v1444 = vunpack.c.l.b16 %v1101
    %v1445 = vunpack.c.h.b16 %v1101
    %v1446 = vunpack.c.l.b16 %v1102
    %v1447 = vunpack.c.h.b16 %v1102
    %v1448 = vunpack.c.l.b16 %v1103
    %v1449 = vunpack.c.h.b16 %v1103
    %v1450 = vunpack.c.l.b16 %v1104
    %v1451 = vunpack.c.h.b16 %v1104
    %v1452 = vunpack.c.l.b16 %v1105
    %v1453 = vunpack.c.h.b16 %v1105
    %v1454 = vunpack.c.l.b16 %v1106
    %v1455 = vunpack.c.h.b16 %v1106
    %v1456 = vunpack.c.l.b16 %v1107
    %v1457 = vunpack.c.h.b16 %v1107
    %v1458 = vunpack.c.l.b16 %v1108
    %v1459 = vunpack.c.h.b16 %v1108
    %v1460 = vunpack.c.l.b16 %v1109
    %v1461 = vunpack.c.h.b16 %v1109
    %v1462 = vunpack.c.l.b16 %v1110
    %v1463 = vunpack.c.h.b16 %v1110
    %v1464 = vunpack.c.l.b16 %v1111
    %v1465 = vunpack.c.h.b16 %v1111
    %v1466 = vunpack.c.l.b16 %v1112
    %v1467 = vunpack.c.h.b16 %v1112
    %v1468 = vunpack.c.l.b16 %v1113
    %v1469 = vunpack.c.h.b16 %v1113
    %v1470 = vunpack.c.l.b16 %v1114
    %v1471 = vunpack.c.h.b16 %v1114
    %v1472 = vunpack.c.l.b16 %v1115
    %v1473 = vunpack.c.h.b16 %v1115
    %v1474 = vunpack.c.l.b16 %v1116
    %v1475 = vunpack.c.h.b16 %v1116
    %v1476 = vunpack.c.l.b16 %v1117
    %v1477 = vunpack.c.h.b16 %v1117
    %v1478 = vunpack.c.l.b16 %v1118
    %v1479 = vunpack.c.h.b16 %v1118
    %v1480 = vunpack.c.l.b16 %v1119
    %v1481 = vunpack.c.h.b16 %v1119
    %v1482 = vunpack.c.l.b16 %v1120
    %v1483 = vunpack.c.h.b16 %v1120
    %v1484 = vunpack.c.l.b16 %v1121
    %v1485 = vunpack.c.h.b16 %v1121
    %v1486 = vunpack.c.l.b16 %v1122
    %v1487 = vunpack.c.h.b16 %v1122
    %v1488 = vunpack.c.l.b16 %v1123
    %v1489 = vunpack.c.h.b16 %v1123
    %v1490 = vunpack.c.l.b16 %v1124
    %v1491 = vunpack.c.h.b16 %v1124
    %v1492 = vunpack.c.l.b16 %v1125
    %v1493 = vunpack.c.h.b16 %v1125
    %v1494 = vunpack.c.l.b16 %v1126
    %v1495 = vunpack.c.h.b16 %v1126
    %v1496 = vunpack.c.l.b16 %v1127
    %v1497 = vunpack.c.h.b16 %v1127
    %v1498 = vunpack.c.l.b16 %v1128
    %v1499 = vunpack.c.h.b16 %v1128
    %v1500 = vunpack.c.l.b16 %v1129
    %v1501 = vunpack.c.h.b16 %v1129
    %v1502 = vunpack.c.l.b16 %v1130
    %v1503 = vunpack.c.h.b16 %v1130
    %v1504 = vunpack.c.l.b16 %v1131
    %v1505 = vunpack.c.h.b16 %v1131
    %v1506 = vunpack.c.l.b16 %v1132
    %v1507 = vunpack.c.h.b16 %v1132
    %v1508 = vunpack.c.l.b16 %v1133
    %v1509 = vunpack.c.h.b16 %v1133
    %v1510 = vunpack.c.l.b16 %v1134
    %v1511 = vunpack.c.h.b16 %v1134
    %v1512 = vunpack.c.l.b16 %v1135
    %v1513 = vunpack.c.h.b16 %v1135
    %v1514 = vunpack.c.l.b16 %v1136
    %v1515 = vunpack.c.h.b16 %v1136
    %v1516 = vunpack.c.l.b16 %v1137
    %v1517 = vunpack.c.h.b16 %v1137
    %v1518 = vunpack.c.l.b16 %v1138
    %v1519 = vunpack.c.h.b16 %v1138
    %v1520 = vunpack.c.l.b16 %v1139
    %v1521 = vunpack.c.h.b16 %v1139
    %v1522 = vunpack.c.l.b16 %v1140
    %v1523 = vunpack.c.h.b16 %v1140
    %v1524 = vunpack.c.l.b16 %v1141
    %v1525 = vunpack.c.h.b16 %v1141
    %v1526 = vunpack.c.l.b16 %v1142
    %v1527 = vunpack.c.h.b16 %v1142
    %v1528 = vunpack.c.l.b16 %v1143
    %v1529 = vunpack.c.h.b16 %v1143
    %v1530 = vunpack.c.l.b16 %v1144
    %v1531 = vunpack.c.h.b16 %v1144
    %v1532 = vunpack.c.l.b16 %v1145
    %v1533 = vunpack.c.h.b16 %v1145
    %v1534 = vunpack.c.l.b16 %v1146
    %v1535 = vunpack.c.h.b16 %v1146
    %v1536 = vunpack.c.l.b16 %v1147
    %v1537 = vunpack.c.h.b16 %v1147
    %v1538 = vunpack.c.l.b16 %v1148
    %v1539 = vunpack.c.h.b16 %v1148
    %v1540 = vunpack.c.l.b16 %v1149
    %v1541 = vunpack.c.h.b16 %v1149
    %v1542 = vunpack.c.l.b16 %v1150
    %v1543 = vunpack.c.h.b16 %v1150
    %v1544 = vunpack.c.l.b16 %v1151
    %v1545 = vunpack.c.h.b16 %v1151
    %v1546 = vunpack.c.l.b16 %v1152
    %v1547 = vunpack.c.h.b16 %v1152
    %v1548 = vunpack.c.l.b16 %v1153
    %v1549 = vunpack.c.h.b16 %v1153
    %v1550 = vunpack.c.l.b16 %v1154
    %v1551 = vunpack.c.h.b16 %v1154
    %v1552 = vunpack.c.l.b16 %v1155
    %v1553 = vunpack.c.h.b16 %v1155
    %v1554 = vunpack.c.l.b16 %v1156
    %v1555 = vunpack.c.h.b16 %v1156
    %v1556 = vunpack.c.l.b16 %v1157
    %v1557 = vunpack.c.h.b16 %v1157
    %v1558 = vunpack.c.l.b16 %v1158
    %v1559 = vunpack.c.h.b16 %v1158
    %v1560 = vunpack.c.l.b16 %v1159
    %v1561 = vunpack.c.h.b16 %v1159
    %v1562 = vunpack.c.l.b16 %v1160
    %v1563 = vunpack.c.h.b16 %v1160
    %v1564 = vunpack.c.l.b16 %v1161
    %v1565 = vunpack.c.h.b16 %v1161
    %v1566 = vunpack.c.l.b16 %v1162
    %v1567 = vunpack.c.h.b16 %v1162
    %v1568 = vunpack.c.l.b16 %v1163
    %v1569 = vunpack.c.h.b16 %v1163
    %v1570 = vunpack.c.l.b16 %v1164
    %v1571 = vunpack.c.h.b16 %v1164
    %v1572 = vpack.c.b16 %v1320, %v1316
    %v1573 = vpack.c.b16 %v1321, %v1317
    %v1574 = vpack.c.b16 %v1322, %v1318
    %v1575 = vpack.c.b16 %v1323, %v1319
    %v1576 = vpack.c.b16 %v1328, %v1324
    %v1577 = vpack.c.b16 %v1329, %v1325
    %v1578 = vpack.c.b16 %v1330, %v1326
    %v1579 = vpack.c.b16 %v1331, %v1327
    %v1580 = vpack.c.b16 %v1336, %v1332
    %v1581 = vpack.c.b16 %v1337, %v1333
    %v1582 = vpack.c.b16 %v1338, %v1334
    %v1583 = vpack.c.b16 %v1339, %v1335
    %v1584 = vpack.c.b16 %v1344, %v1340
    %v1585 = vpack.c.b16 %v1345, %v1341
    %v1586 = vpack.c.b16 %v1346, %v1342
    %v1587 = vpack.c.b16 %v1347, %v1343
    %v1588 = vpack.c.b16 %v1352, %v1348
    %v1589 = vpack.c.b16 %v1353, %v1349
    %v1590 = vpack.c.b16 %v1354, %v1350
    %v1591 = vpack.c.b16 %v1355, %v1351
    %v1592 = vpack.c.b16 %v1360, %v1356
    %v1593 = vpack.c.b16 %v1361, %v1357
    %v1594 = vpack.c.b16 %v1362, %v1358
    %v1595 = vpack.c.b16 %v1363, %v1359
    %v1596 = vpack.c.b16 %v1368, %v1364
    %v1597 = vpack.c.b16 %v1369, %v1365
    %v1598 = vpack.c.b16 %v1370, %v1366
    %v1599 = vpack.c.b16 %v1371, %v1367
    %v1600 = vpack.c.b16 %v1376, %v1372
    %v1601 = vpack.c.b16 %v1377, %v1373
    %v1602 = vpack.c.b16 %v1378, %v1374
    %v1603 = vpack.c.b16 %v1379, %v1375
    %v1604 = vpack.c.b16 %v1384, %v1380
    %v1605 = vpack.c.b16 %v1385, %v1381
    %v1606 = vpack.c.b16 %v1386, %v1382
    %v1607 = vpack.c.b16 %v1387, %v1383
    %v1608 = vpack.c.b16 %v1392, %v1388
    %v1609 = vpack.c.b16 %v1393, %v1389
    %v1610 = vpack.c.b16 %v1394, %v1390
    %v1611 = vpack.c.b16 %v1395, %v1391
    %v1612 = vpack.c.b16 %v1400, %v1396
    %v1613 = vpack.c.b16 %v1401, %v1397
    %v1614 = vpack.c.b16 %v1402, %v1398
    %v1615 = vpack.c.b16 %v1403, %v1399
    %v1616 = vpack.c.b16 %v1408, %v1404
    %v1617 = vpack.c.b16 %v1409, %v1405
    %v1618 = vpack.c.b16 %v1410, %v1406
    %v1619 = vpack.c.b16 %v1411, %v1407
    %v1620 = vpack.c.b16 %v1416, %v1412
    %v1621 = vpack.c.b16 %v1417, %v1413
    %v1622 = vpack.c.b16 %v1418, %v1414
    %v1623 = vpack.c.b16 %v1419, %v1415
    %v1624 = vpack.c.b16 %v1424, %v1420
    %v1625 = vpack.c.b16 %v1425, %v1421
    %v1626 = vpack.c.b16 %v1426, %v1422
    %v1627 = vpack.c.b16 %v1427, %v1423
    %v1628 = vpack.c.b16 %v1432, %v1428
    %v1629 = vpack.c.b16 %v1433, %v1429
    %v1630 = vpack.c.b16 %v1434, %v1430
    %v1631 = vpack.c.b16 %v1435, %v1431
    %v1632 = vpack.c.b16 %v1440, %v1436
    %v1633 = vpack.c.b16 %v1441, %v1437
    %v1634 = vpack.c.b16 %v1442, %v1438
    %v1635 = vpack.c.b16 %v1443, %v1439
    %v1636 = vpack.c.b16 %v1448, %v1444
    %v1637 = vpack.c.b16 %v1449, %v1445
    %v1638 = vpack.c.b16 %v1450, %v1446
    %v1639 = vpack.c.b16 %v1451, %v1447
    %v1640 = vpack.c.b16 %v1456, %v1452
    %v1641 = vpack.c.b16 %v1457, %v1453
    %v1642 = vpack.c.b16 %v1458, %v1454
    %v1643 = vpack.c.b16 %v1459, %v1455
    %v1644 = vpack.c.b16 %v1464, %v1460
    %v1645 = vpack.c.b16 %v1465, %v1461
    %v1646 = vpack.c.b16 %v1466, %v1462
    %v1647 = vpack.c.b16 %v1467, %v1463
    %v1648 = vpack.c.b16 %v1472, %v1468
    %v1649 = vpack.c.b16 %v1473, %v1469
    %v1650 = vpack.c.b16 %v1474, %v1470
    %v1651 = vpack.c.b16 %v1475, %v1471
    %v1652 = vpack.c.b16 %v1480, %v1476
    %v1653 = vpack.c.b16 %v1481, %v1477
    %v1654 = vpack.c.b16 %v1482, %v1478
    %v1655 = vpack.c.b16 %v1483, %v1479
    %v1656 = vpack.c.b16 %v1488, %v1484
    %v1657 = vpack.c.b16 %v1489, %v1485
    %v1658 = vpack.c.b16 %v1490, %v1486
    %v1659 = vpack.c.b16 %v1491, %v1487
    %v1660 = vpack.c.b16 %v1496, %v1492
    %v1661 = vpack.c.b16 %v1497, %v1493
    %v1662 = vpack.c.b16 %v1498, %v1494
    %v1663 = vpack.c.b16 %v1499, %v1495
    %v1664 = vpack.c.b16 %v1504, %v1500
    %v1665 = vpack.c.b16 %v1505, %v1501
    %v1666 = vpack.c.b16 %v1506, %v1502
    %v1667 = vpack.c.b16 %v1507, %v1503
    %v1668 = vpack.c.b16 %v1512, %v1508
    %v1669 = vpack.c.b16 %v1513, %v1509
    %v1670 = vpack.c.b16 %v1514, %v1510
    %v1671 = vpack.c.b16 %v1515, %v1511
    %v1672 = vpack.c.b16 %v1520, %v1516
    %v1673 = vpack.c.b16 %v1521, %v1517
    %v1674 = vpack.c.b16 %v1522, %v1518
    %v1675 = vpack.c.b16 %v1523, %v1519
    %v1676 = vpack.c.b16 %v1528, %v1524
    %v1677 = vpack.c.b16 %v1529, %v1525
    %v1678 = vpack.c.b16 %v1530, %v1526
    %v1679 = vpack.c.b16 %v1531, %v1527
    %v1680 = vpack.c.b16 %v1536, %v1532
    %v1681 = vpack.c.b16 %v1537, %v1533
    %v1682 = vpack.c.b16 %v1538, %v1534
    %v1683 = vpack.c.b16 %v1539, %v1535
    %v1684 = vpack.c.b16 %v1544, %v1540
    %v1685 = vpack.c.b16 %v1545, %v1541
    %v1686 = vpack.c.b16 %v1546, %v1542
    %v1687 = vpack.c.b16 %v1547, %v1543
    %v1688 = vpack.c.b16 %v1552, %v1548
    %v1689 = vpack.c.b16 %v1553, %v1549
    %v1690 = vpack.c.b16 %v1554, %v1550
    %v1691 = vpack.c.b16 %v1555, %v1551
    %v1692 = vpack.c.b16 %v1560, %v1556
    %v1693 = vpack.c.b16 %v1561, %v1557
    %v1694 = vpack.c.b16 %v1562, %v1558
    %v1695 = vpack.c.b16 %v1563, %v1559
    %v1696 = vpack.c.b16 %v1568, %v1564
    %v1697 = vpack.c.b16 %v1569, %v1565
    %v1698 = vpack.c.b16 %v1570, %v1566
    %v1699 = vpack.c.b16 %v1571, %v1567
    %1828 = vmatprep.subr.bf16.mxu0 %v1573
    %1829 = vmatpush1.bf16.msra.mxu0 %v1572
    %1830 = vmatprep.subr.bf16.mxu0 %v1577
    %1831 = vmatpush1.bf16.msra.mxu0 %v1576
    %1832 = vmatprep.subr.bf16.mxu0 %v1581
    %1833 = vmatpush1.bf16.msra.mxu0 %v1580
    %1834 = vmatprep.subr.bf16.mxu0 %v1585
    %1835 = vmatpush1.bf16.msra.mxu0 %v1584
    %1836 = vmatprep.subr.bf16.mxu0 %v1589
    %1837 = vmatpush1.bf16.msra.mxu0 %v1588
    %1838 = vmatprep.subr.bf16.mxu0 %v1593
    %1839 = vmatpush1.bf16.msra.mxu0 %v1592
    %1840 = vmatprep.subr.bf16.mxu0 %v1597
    %1841 = vmatpush1.bf16.msra.mxu0 %v1596
    %1842 = vmatprep.subr.bf16.mxu0 %v1601
    %1843 = vmatpush1.bf16.msra.mxu0 %v1600
    %1844 = vmatprep.subr.bf16.mxu0 %v1605
    %1845 = vmatpush1.bf16.msra.mxu0 %v1604
    %1846 = vmatprep.subr.bf16.mxu0 %v1609
    %1847 = vmatpush1.bf16.msra.mxu0 %v1608
    %1848 = vmatprep.subr.bf16.mxu0 %v1613
    %1849 = vmatpush1.bf16.msra.mxu0 %v1612
    %1850 = vmatprep.subr.bf16.mxu0 %v1617
    %1851 = vmatpush1.bf16.msra.mxu0 %v1616
    %1852 = vmatprep.subr.bf16.mxu0 %v1621
    %1853 = vmatpush1.bf16.msra.mxu0 %v1620
    %1854 = vmatprep.subr.bf16.mxu0 %v1625
    %1855 = vmatpush1.bf16.msra.mxu0 %v1624
    %1856 = vmatprep.subr.bf16.mxu0 %v1629
    %1857 = vmatpush1.bf16.msra.mxu0 %v1628
    %1858 = vmatprep.subr.bf16.mxu0 %v1633
    %1859 = vmatpush1.bf16.msra.mxu0 %v1632
    %1860 = vmatprep.mubr.bf16.mxu0 %v1033
    %1861 = vmatmul.mubr.bf16.gmra.mrb[0].mxu0 %v1032
    %v1862 = vpop.f32.mrb[0].mxu0
    %v1863 = vadd.f32 %v1171, %v1862
    %v1864 = vpop.f32.mrb[0].mxu0
    %v1865 = vadd.f32 %v1175, %v1864
    %v1866 = vpop.f32.mrb[0].mxu0
    %v1867 = vpop.f32.mrb[0].mxu0
    %1868 = vdwg.mxu0
    %1869 = vmatprep.subr.bf16.mxu0 %v1637
    %1870 = vmatpush1.bf16.msra.mxu0 %v1636
    %1871 = vmatprep.subr.bf16.mxu0 %v1641
    %1872 = vmatpush1.bf16.msra.mxu0 %v1640
    %1873 = vmatprep.subr.bf16.mxu0 %v1645
    %1874 = vmatpush1.bf16.msra.mxu0 %v1644
    %1875 = vmatprep.subr.bf16.mxu0 %v1649
    %1876 = vmatpush1.bf16.msra.mxu0 %v1648
    %1877 = vmatprep.subr.bf16.mxu0 %v1653
    %1878 = vmatpush1.bf16.msra.mxu0 %v1652
    %1879 = vmatprep.subr.bf16.mxu0 %v1657
    %1880 = vmatpush1.bf16.msra.mxu0 %v1656
    %1881 = vmatprep.subr.bf16.mxu0 %v1661
    %1882 = vmatpush1.bf16.msra.mxu0 %v1660
    %1883 = vmatprep.subr.bf16.mxu0 %v1665
    %1884 = vmatpush1.bf16.msra.mxu0 %v1664
    %1885 = vmatprep.subr.bf16.mxu0 %v1669
    %1886 = vmatpush1.bf16.msra.mxu0 %v1668
    %1887 = vmatprep.subr.bf16.mxu0 %v1673
    %1888 = vmatpush1.bf16.msra.mxu0 %v1672
    %1889 = vmatprep.subr.bf16.mxu0 %v1677
    %1890 = vmatpush1.bf16.msra.mxu0 %v1676
    %1891 = vmatprep.subr.bf16.mxu0 %v1681
    %1892 = vmatpush1.bf16.msra.mxu0 %v1680
    %1893 = vmatprep.subr.bf16.mxu0 %v1685
    %1894 = vmatpush1.bf16.msra.mxu0 %v1684
    %1895 = vmatprep.subr.bf16.mxu0 %v1689
    %1896 = vmatpush1.bf16.msra.mxu0 %v1688
    %1897 = vmatprep.subr.bf16.mxu0 %v1693
    %1898 = vmatpush1.bf16.msra.mxu0 %v1692
    %1899 = vmatprep.subr.bf16.mxu0 %v1697
    %1900 = vmatpush1.bf16.msra.mxu0 %v1696
    %1901 = vmatprep.mubr.bf16.mxu0 %v1035
    %1902 = vmatmul.mubr.bf16.gmra.mrb[0].mxu0 %v1034
    %v1903 = vpop.f32.mrb[0].mxu0
    %v1904 = vadd.f32 %v1863, %v1903
    %v1905 = vpop.f32.mrb[0].mxu0
    %v1906 = vadd.f32 %v1865, %v1905
    %v1907 = vpop.f32.mrb[0].mxu0
    %v1908 = vpop.f32.mrb[0].mxu0
    %1909 = vdwg.mxu0
    %1910 = vmatprep.subr.bf16.mxu0 %v1575
    %1911 = vmatpush1.bf16.msra.mxu0 %v1574
    %1912 = vmatprep.subr.bf16.mxu0 %v1579
    %1913 = vmatpush1.bf16.msra.mxu0 %v1578
    %1914 = vmatprep.subr.bf16.mxu0 %v1583
    %1915 = vmatpush1.bf16.msra.mxu0 %v1582
    %1916 = vmatprep.subr.bf16.mxu0 %v1587
    %1917 = vmatpush1.bf16.msra.mxu0 %v1586
    %1918 = vmatprep.subr.bf16.mxu0 %v1591
    %1919 = vmatpush1.bf16.msra.mxu0 %v1590
    %1920 = vmatprep.subr.bf16.mxu0 %v1595
    %1921 = vmatpush1.bf16.msra.mxu0 %v1594
    %1922 = vmatprep.subr.bf16.mxu0 %v1599
    %1923 = vmatpush1.bf16.msra.mxu0 %v1598
    %1924 = vmatprep.subr.bf16.mxu0 %v1603
    %1925 = vmatpush1.bf16.msra.mxu0 %v1602
    %1926 = vmatprep.subr.bf16.mxu0 %v1607
    %1927 = vmatpush1.bf16.msra.mxu0 %v1606
    %1928 = vmatprep.subr.bf16.mxu0 %v1611
    %1929 = vmatpush1.bf16.msra.mxu0 %v1610
    %1930 = vmatprep.subr.bf16.mxu0 %v1615
    %1931 = vmatpush1.bf16.msra.mxu0 %v1614
    %1932 = vmatprep.subr.bf16.mxu0 %v1619
    %1933 = vmatpush1.bf16.msra.mxu0 %v1618
    %1934 = vmatprep.subr.bf16.mxu0 %v1623
    %1935 = vmatpush1.bf16.msra.mxu0 %v1622
    %1936 = vmatprep.subr.bf16.mxu0 %v1627
    %1937 = vmatpush1.bf16.msra.mxu0 %v1626
    %1938 = vmatprep.subr.bf16.mxu0 %v1631
    %1939 = vmatpush1.bf16.msra.mxu0 %v1630
    %1940 = vmatprep.subr.bf16.mxu0 %v1635
    %1941 = vmatpush1.bf16.msra.mxu0 %v1634
    %1942 = vmatprep.mubr.bf16.mxu0 %v1033
    %1943 = vmatmul.mubr.bf16.gmra.mrb[0].mxu0 %v1032
    %v1944 = vpop.f32.mrb[0].mxu0
    %v1945 = vadd.f32 %v1179, %v1944
    %v1946 = vpop.f32.mrb[0].mxu0
    %v1947 = vadd.f32 %v1183, %v1946
    %v1948 = vpop.f32.mrb[0].mxu0
    %v1949 = vpop.f32.mrb[0].mxu0
    %1950 = vdwg.mxu0
    %1951 = vmatprep.subr.bf16.mxu0 %v1639
    %1952 = vmatpush1.bf16.msra.mxu0 %v1638
    %1953 = vmatprep.subr.bf16.mxu0 %v1643
    %1954 = vmatpush1.bf16.msra.mxu0 %v1642
    %1955 = vmatprep.subr.bf16.mxu0 %v1647
    %1956 = vmatpush1.bf16.msra.mxu0 %v1646
    %1957 = vmatprep.subr.bf16.mxu0 %v1651
    %1958 = vmatpush1.bf16.msra.mxu0 %v1650
    %1959 = vmatprep.subr.bf16.mxu0 %v1655
    %1960 = vmatpush1.bf16.msra.mxu0 %v1654
    %1961 = vmatprep.subr.bf16.mxu0 %v1659
    %1962 = vmatpush1.bf16.msra.mxu0 %v1658
    %1963 = vmatprep.subr.bf16.mxu0 %v1663
    %1964 = vmatpush1.bf16.msra.mxu0 %v1662
    %1965 = vmatprep.subr.bf16.mxu0 %v1667
    %1966 = vmatpush1.bf16.msra.mxu0 %v1666
    %1967 = vmatprep.subr.bf16.mxu0 %v1671
    %1968 = vmatpush1.bf16.msra.mxu0 %v1670
    %1969 = vmatprep.subr.bf16.mxu0 %v1675
    %1970 = vmatpush1.bf16.msra.mxu0 %v1674
    %1971 = vmatprep.subr.bf16.mxu0 %v1679
    %1972 = vmatpush1.bf16.msra.mxu0 %v1678
    %1973 = vmatprep.subr.bf16.mxu0 %v1683
    %1974 = vmatpush1.bf16.msra.mxu0 %v1682
    %1975 = vmatprep.subr.bf16.mxu0 %v1687
    %1976 = vmatpush1.bf16.msra.mxu0 %v1686
    %1977 = vmatprep.subr.bf16.mxu0 %v1691
    %1978 = vmatpush1.bf16.msra.mxu0 %v1690
    %1979 = vmatprep.subr.bf16.mxu0 %v1695
    %1980 = vmatpush1.bf16.msra.mxu0 %v1694
    %1981 = vmatprep.subr.bf16.mxu0 %v1699
    %1982 = vmatpush1.bf16.msra.mxu0 %v1698
    %1983 = vmatprep.mubr.bf16.mxu0 %v1035
    %1984 = vmatmul.mubr.bf16.gmra.mrb[0].mxu0 %v1034
    %v1985 = vpop.f32.mrb[0].mxu0
    %v1986 = vadd.f32 %v1945, %v1985
    %v1987 = vpop.f32.mrb[0].mxu0
    %v1988 = vadd.f32 %v1947, %v1987
    %v1989 = vpop.f32.mrb[0].mxu0
    %v1990 = vpop.f32.mrb[0].mxu0
    %1991 = vdwg.mxu0
    %v1992 = vmul.f32 %v1904, 0.2
    %v1993 = vmul.f32 %v1906, 0.2
    %v1994 = vmul.f32 %v1986, 0.2
    %v1995 = vmul.f32 %v1988, 0.2
    %v1996 = vmax.f32 %v1904, %v1992
    %v1997 = vmax.f32 %v1906, %v1993
    %v1998 = vmax.f32 %v1986, %v1994
    %v1999 = vmax.f32 %v1988, %v1995
    %v2000 = vpack.c.bf16 %v1996, %v1996
    %v2001 = vpack.c.bf16 %v1997, %v1997
    %v2002 = vpack.c.bf16 %v1998, %v1998
    %v2003 = vpack.c.bf16 %v1999, %v1999
    %s2004 = scalar_lea.vmem [#allocation5], 2048
    %v2005 = vld [vmem:[%s2004] sm:$0xff]
    %v2006 = vld [vmem:[%s2004 + $0x8] sm:$0xff]
    %v2007 = vld [vmem:[%s2004 + $0x10] sm:$0xff]
    %v2008 = vld [vmem:[%s2004 + $0x18] sm:$0xff]
    %v2009 = vld [vmem:[%s2004 + $0x20] sm:$0xff]
    %v2010 = vld [vmem:[%s2004 + $0x28] sm:$0xff]
    %v2011 = vld [vmem:[%s2004 + $0x30] sm:$0xff]
    %v2012 = vld [vmem:[%s2004 + $0x38] sm:$0xff]
    %v2013 = vld [vmem:[%s2004 + $0x40] sm:$0xff]
    %v2014 = vld [vmem:[%s2004 + $0x48] sm:$0xff]
    %v2015 = vld [vmem:[%s2004 + $0x50] sm:$0xff]
    %v2016 = vld [vmem:[%s2004 + $0x58] sm:$0xff]
    %v2017 = vld [vmem:[%s2004 + $0x60] sm:$0xff]
    %v2018 = vld [vmem:[%s2004 + $0x68] sm:$0xff]
    %v2019 = vld [vmem:[%s2004 + $0x70] sm:$0xff]
    %v2020 = vld [vmem:[%s2004 + $0x78] sm:$0xff]
    %v2021 = vld [vmem:[%s2004 + $0x80] sm:$0xff]
    %v2022 = vld [vmem:[%s2004 + $0x88] sm:$0xff]
    %v2023 = vld [vmem:[%s2004 + $0x90] sm:$0xff]
    %v2024 = vld [vmem:[%s2004 + $0x98] sm:$0xff]
    %v2025 = vld [vmem:[%s2004 + $0xa0] sm:$0xff]
    %v2026 = vld [vmem:[%s2004 + $0xa8] sm:$0xff]
    %v2027 = vld [vmem:[%s2004 + $0xb0] sm:$0xff]
    %v2028 = vld [vmem:[%s2004 + $0xb8] sm:$0xff]
    %v2029 = vld [vmem:[%s2004 + $0xc0] sm:$0xff]
    %v2030 = vld [vmem:[%s2004 + $0xc8] sm:$0xff]
    %v2031 = vld [vmem:[%s2004 + $0xd0] sm:$0xff]
    %v2032 = vld [vmem:[%s2004 + $0xd8] sm:$0xff]
    %v2033 = vld [vmem:[%s2004 + $0xe0] sm:$0xff]
    %v2034 = vld [vmem:[%s2004 + $0xe8] sm:$0xff]
    %v2035 = vld [vmem:[%s2004 + $0xf0] sm:$0xff]
    %v2036 = vld [vmem:[%s2004 + $0xf8] sm:$0xff]
    %v2037 = vld [vmem:[%s2004 + $0x100] sm:$0xff]
    %v2038 = vld [vmem:[%s2004 + $0x108] sm:$0xff]
    %v2039 = vld [vmem:[%s2004 + $0x110] sm:$0xff]
    %v2040 = vld [vmem:[%s2004 + $0x118] sm:$0xff]
    %v2041 = vld [vmem:[%s2004 + $0x120] sm:$0xff]
    %v2042 = vld [vmem:[%s2004 + $0x128] sm:$0xff]
    %v2043 = vld [vmem:[%s2004 + $0x130] sm:$0xff]
    %v2044 = vld [vmem:[%s2004 + $0x138] sm:$0xff]
    %v2045 = vld [vmem:[%s2004 + $0x140] sm:$0xff]
    %v2046 = vld [vmem:[%s2004 + $0x148] sm:$0xff]
    %v2047 = vld [vmem:[%s2004 + $0x150] sm:$0xff]
    %v2048 = vld [vmem:[%s2004 + $0x158] sm:$0xff]
    %v2049 = vld [vmem:[%s2004 + $0x160] sm:$0xff]
    %v2050 = vld [vmem:[%s2004 + $0x168] sm:$0xff]
    %v2051 = vld [vmem:[%s2004 + $0x170] sm:$0xff]
    %v2052 = vld [vmem:[%s2004 + $0x178] sm:$0xff]
    %v2053 = vld [vmem:[%s2004 + $0x180] sm:$0xff]
    %v2054 = vld [vmem:[%s2004 + $0x188] sm:$0xff]
    %v2055 = vld [vmem:[%s2004 + $0x190] sm:$0xff]
    %v2056 = vld [vmem:[%s2004 + $0x198] sm:$0xff]
    %v2057 = vld [vmem:[%s2004 + $0x1a0] sm:$0xff]
    %v2058 = vld [vmem:[%s2004 + $0x1a8] sm:$0xff]
    %v2059 = vld [vmem:[%s2004 + $0x1b0] sm:$0xff]
    %v2060 = vld [vmem:[%s2004 + $0x1b8] sm:$0xff]
    %v2061 = vld [vmem:[%s2004 + $0x1c0] sm:$0xff]
    %v2062 = vld [vmem:[%s2004 + $0x1c8] sm:$0xff]
    %v2063 = vld [vmem:[%s2004 + $0x1d0] sm:$0xff]
    %v2064 = vld [vmem:[%s2004 + $0x1d8] sm:$0xff]
    %v2065 = vld [vmem:[%s2004 + $0x1e0] sm:$0xff]
    %v2066 = vld [vmem:[%s2004 + $0x1e8] sm:$0xff]
    %v2067 = vld [vmem:[%s2004 + $0x1f0] sm:$0xff]
    %v2068 = vld [vmem:[%s2004 + $0x1f8] sm:$0xff]
    %v2069 = vld [vmem:[%s2004 + $0x200] sm:$0xff]
    %v2070 = vld [vmem:[%s2004 + $0x208] sm:$0xff]
    %v2071 = vld [vmem:[%s2004 + $0x210] sm:$0xff]
    %v2072 = vld [vmem:[%s2004 + $0x218] sm:$0xff]
    %v2073 = vld [vmem:[%s2004 + $0x220] sm:$0xff]
    %v2074 = vld [vmem:[%s2004 + $0x228] sm:$0xff]
    %v2075 = vld [vmem:[%s2004 + $0x230] sm:$0xff]
    %v2076 = vld [vmem:[%s2004 + $0x238] sm:$0xff]
    %v2077 = vld [vmem:[%s2004 + $0x240] sm:$0xff]
    %v2078 = vld [vmem:[%s2004 + $0x248] sm:$0xff]
    %v2079 = vld [vmem:[%s2004 + $0x250] sm:$0xff]
    %v2080 = vld [vmem:[%s2004 + $0x258] sm:$0xff]
    %v2081 = vld [vmem:[%s2004 + $0x260] sm:$0xff]
    %v2082 = vld [vmem:[%s2004 + $0x268] sm:$0xff]
    %v2083 = vld [vmem:[%s2004 + $0x270] sm:$0xff]
    %v2084 = vld [vmem:[%s2004 + $0x278] sm:$0xff]
    %v2085 = vld [vmem:[%s2004 + $0x280] sm:$0xff]
    %v2086 = vld [vmem:[%s2004 + $0x288] sm:$0xff]
    %v2087 = vld [vmem:[%s2004 + $0x290] sm:$0xff]
    %v2088 = vld [vmem:[%s2004 + $0x298] sm:$0xff]
    %v2089 = vld [vmem:[%s2004 + $0x2a0] sm:$0xff]
    %v2090 = vld [vmem:[%s2004 + $0x2a8] sm:$0xff]
    %v2091 = vld [vmem:[%s2004 + $0x2b0] sm:$0xff]
    %v2092 = vld [vmem:[%s2004 + $0x2b8] sm:$0xff]
    %v2093 = vld [vmem:[%s2004 + $0x2c0] sm:$0xff]
    %v2094 = vld [vmem:[%s2004 + $0x2c8] sm:$0xff]
    %v2095 = vld [vmem:[%s2004 + $0x2d0] sm:$0xff]
    %v2096 = vld [vmem:[%s2004 + $0x2d8] sm:$0xff]
    %v2097 = vld [vmem:[%s2004 + $0x2e0] sm:$0xff]
    %v2098 = vld [vmem:[%s2004 + $0x2e8] sm:$0xff]
    %v2099 = vld [vmem:[%s2004 + $0x2f0] sm:$0xff]
    %v2100 = vld [vmem:[%s2004 + $0x2f8] sm:$0xff]
    %v2101 = vld [vmem:[%s2004 + $0x300] sm:$0xff]
    %v2102 = vld [vmem:[%s2004 + $0x308] sm:$0xff]
    %v2103 = vld [vmem:[%s2004 + $0x310] sm:$0xff]
    %v2104 = vld [vmem:[%s2004 + $0x318] sm:$0xff]
    %v2105 = vld [vmem:[%s2004 + $0x320] sm:$0xff]
    %v2106 = vld [vmem:[%s2004 + $0x328] sm:$0xff]
    %v2107 = vld [vmem:[%s2004 + $0x330] sm:$0xff]
    %v2108 = vld [vmem:[%s2004 + $0x338] sm:$0xff]
    %v2109 = vld [vmem:[%s2004 + $0x340] sm:$0xff]
    %v2110 = vld [vmem:[%s2004 + $0x348] sm:$0xff]
    %v2111 = vld [vmem:[%s2004 + $0x350] sm:$0xff]
    %v2112 = vld [vmem:[%s2004 + $0x358] sm:$0xff]
    %v2113 = vld [vmem:[%s2004 + $0x360] sm:$0xff]
    %v2114 = vld [vmem:[%s2004 + $0x368] sm:$0xff]
    %v2115 = vld [vmem:[%s2004 + $0x370] sm:$0xff]
    %v2116 = vld [vmem:[%s2004 + $0x378] sm:$0xff]
    %v2117 = vld [vmem:[%s2004 + $0x380] sm:$0xff]
    %v2118 = vld [vmem:[%s2004 + $0x388] sm:$0xff]
    %v2119 = vld [vmem:[%s2004 + $0x390] sm:$0xff]
    %v2120 = vld [vmem:[%s2004 + $0x398] sm:$0xff]
    %v2121 = vld [vmem:[%s2004 + $0x3a0] sm:$0xff]
    %v2122 = vld [vmem:[%s2004 + $0x3a8] sm:$0xff]
    %v2123 = vld [vmem:[%s2004 + $0x3b0] sm:$0xff]
    %v2124 = vld [vmem:[%s2004 + $0x3b8] sm:$0xff]
    %v2125 = vld [vmem:[%s2004 + $0x3c0] sm:$0xff]
    %v2126 = vld [vmem:[%s2004 + $0x3c8] sm:$0xff]
    %v2127 = vld [vmem:[%s2004 + $0x3d0] sm:$0xff]
    %v2128 = vld [vmem:[%s2004 + $0x3d8] sm:$0xff]
    %v2129 = vld [vmem:[%s2004 + $0x3e0] sm:$0xff]
    %v2130 = vld [vmem:[%s2004 + $0x3e8] sm:$0xff]
    %v2131 = vld [vmem:[%s2004 + $0x3f0] sm:$0xff]
    %v2132 = vld [vmem:[%s2004 + $0x3f8] sm:$0xff]
    %s2133 = scalar_lea.vmem [#allocation7], 8
    %v2134 = vld [vmem:[%s2133] sm:$0xf]
    %v2136 = vlaneseq
    %v2137 = vshrl.u32 %v2136, 7
    %v2138 = vsub.s32 0, %v2137
    %v2139 = vrot.slane %v2134, %v2138
    %v2140 = vlaneseq
    %v2141 = vshrl.u32 %v2140, 7
    %v2142 = vsub.s32 1, %v2141
    %v2143 = vrot.slane %v2134, %v2142
    %v2144 = vlaneseq
    %v2145 = vshrl.u32 %v2144, 7
    %v2146 = vsub.s32 2, %v2145
    %v2147 = vrot.slane %v2134, %v2146
    %v2148 = vlaneseq
    %v2149 = vshrl.u32 %v2148, 7
    %v2150 = vsub.s32 3, %v2149
    %v2151 = vrot.slane %v2134, %v2150
    %v2284 = vunpack.c.l.b16 %v2005
    %v2285 = vunpack.c.h.b16 %v2005
    %v2286 = vunpack.c.l.b16 %v2006
    %v2287 = vunpack.c.h.b16 %v2006
    %v2288 = vunpack.c.l.b16 %v2007
    %v2289 = vunpack.c.h.b16 %v2007
    %v2290 = vunpack.c.l.b16 %v2008
    %v2291 = vunpack.c.h.b16 %v2008
    %v2292 = vunpack.c.l.b16 %v2009
    %v2293 = vunpack.c.h.b16 %v2009
    %v2294 = vunpack.c.l.b16 %v2010
    %v2295 = vunpack.c.h.b16 %v2010
    %v2296 = vunpack.c.l.b16 %v2011
    %v2297 = vunpack.c.h.b16 %v2011
    %v2298 = vunpack.c.l.b16 %v2012
    %v2299 = vunpack.c.h.b16 %v2012
    %v2300 = vunpack.c.l.b16 %v2013
    %v2301 = vunpack.c.h.b16 %v2013
    %v2302 = vunpack.c.l.b16 %v2014
    %v2303 = vunpack.c.h.b16 %v2014
    %v2304 = vunpack.c.l.b16 %v2015
    %v2305 = vunpack.c.h.b16 %v2015
    %v2306 = vunpack.c.l.b16 %v2016
    %v2307 = vunpack.c.h.b16 %v2016
    %v2308 = vunpack.c.l.b16 %v2017
    %v2309 = vunpack.c.h.b16 %v2017
    %v2310 = vunpack.c.l.b16 %v2018
    %v2311 = vunpack.c.h.b16 %v2018
    %v2312 = vunpack.c.l.b16 %v2019
    %v2313 = vunpack.c.h.b16 %v2019
    %v2314 = vunpack.c.l.b16 %v2020
    %v2315 = vunpack.c.h.b16 %v2020
    %v2316 = vunpack.c.l.b16 %v2021
    %v2317 = vunpack.c.h.b16 %v2021
    %v2318 = vunpack.c.l.b16 %v2022
    %v2319 = vunpack.c.h.b16 %v2022
    %v2320 = vunpack.c.l.b16 %v2023
    %v2321 = vunpack.c.h.b16 %v2023
    %v2322 = vunpack.c.l.b16 %v2024
    %v2323 = vunpack.c.h.b16 %v2024
    %v2324 = vunpack.c.l.b16 %v2025
    %v2325 = vunpack.c.h.b16 %v2025
    %v2326 = vunpack.c.l.b16 %v2026
    %v2327 = vunpack.c.h.b16 %v2026
    %v2328 = vunpack.c.l.b16 %v2027
    %v2329 = vunpack.c.h.b16 %v2027
    %v2330 = vunpack.c.l.b16 %v2028
    %v2331 = vunpack.c.h.b16 %v2028
    %v2332 = vunpack.c.l.b16 %v2029
    %v2333 = vunpack.c.h.b16 %v2029
    %v2334 = vunpack.c.l.b16 %v2030
    %v2335 = vunpack.c.h.b16 %v2030
    %v2336 = vunpack.c.l.b16 %v2031
    %v2337 = vunpack.c.h.b16 %v2031
    %v2338 = vunpack.c.l.b16 %v2032
    %v2339 = vunpack.c.h.b16 %v2032
    %v2340 = vunpack.c.l.b16 %v2033
    %v2341 = vunpack.c.h.b16 %v2033
    %v2342 = vunpack.c.l.b16 %v2034
    %v2343 = vunpack.c.h.b16 %v2034
    %v2344 = vunpack.c.l.b16 %v2035
    %v2345 = vunpack.c.h.b16 %v2035
    %v2346 = vunpack.c.l.b16 %v2036
    %v2347 = vunpack.c.h.b16 %v2036
    %v2348 = vunpack.c.l.b16 %v2037
    %v2349 = vunpack.c.h.b16 %v2037
    %v2350 = vunpack.c.l.b16 %v2038
    %v2351 = vunpack.c.h.b16 %v2038
    %v2352 = vunpack.c.l.b16 %v2039
    %v2353 = vunpack.c.h.b16 %v2039
    %v2354 = vunpack.c.l.b16 %v2040
    %v2355 = vunpack.c.h.b16 %v2040
    %v2356 = vunpack.c.l.b16 %v2041
    %v2357 = vunpack.c.h.b16 %v2041
    %v2358 = vunpack.c.l.b16 %v2042
    %v2359 = vunpack.c.h.b16 %v2042
    %v2360 = vunpack.c.l.b16 %v2043
    %v2361 = vunpack.c.h.b16 %v2043
    %v2362 = vunpack.c.l.b16 %v2044
    %v2363 = vunpack.c.h.b16 %v2044
    %v2364 = vunpack.c.l.b16 %v2045
    %v2365 = vunpack.c.h.b16 %v2045
    %v2366 = vunpack.c.l.b16 %v2046
    %v2367 = vunpack.c.h.b16 %v2046
    %v2368 = vunpack.c.l.b16 %v2047
    %v2369 = vunpack.c.h.b16 %v2047
    %v2370 = vunpack.c.l.b16 %v2048
    %v2371 = vunpack.c.h.b16 %v2048
    %v2372 = vunpack.c.l.b16 %v2049
    %v2373 = vunpack.c.h.b16 %v2049
    %v2374 = vunpack.c.l.b16 %v2050
    %v2375 = vunpack.c.h.b16 %v2050
    %v2376 = vunpack.c.l.b16 %v2051
    %v2377 = vunpack.c.h.b16 %v2051
    %v2378 = vunpack.c.l.b16 %v2052
    %v2379 = vunpack.c.h.b16 %v2052
    %v2380 = vunpack.c.l.b16 %v2053
    %v2381 = vunpack.c.h.b16 %v2053
    %v2382 = vunpack.c.l.b16 %v2054
    %v2383 = vunpack.c.h.b16 %v2054
    %v2384 = vunpack.c.l.b16 %v2055
    %v2385 = vunpack.c.h.b16 %v2055
    %v2386 = vunpack.c.l.b16 %v2056
    %v2387 = vunpack.c.h.b16 %v2056
    %v2388 = vunpack.c.l.b16 %v2057
    %v2389 = vunpack.c.h.b16 %v2057
    %v2390 = vunpack.c.l.b16 %v2058
    %v2391 = vunpack.c.h.b16 %v2058
    %v2392 = vunpack.c.l.b16 %v2059
    %v2393 = vunpack.c.h.b16 %v2059
    %v2394 = vunpack.c.l.b16 %v2060
    %v2395 = vunpack.c.h.b16 %v2060
    %v2396 = vunpack.c.l.b16 %v2061
    %v2397 = vunpack.c.h.b16 %v2061
    %v2398 = vunpack.c.l.b16 %v2062
    %v2399 = vunpack.c.h.b16 %v2062
    %v2400 = vunpack.c.l.b16 %v2063
    %v2401 = vunpack.c.h.b16 %v2063
    %v2402 = vunpack.c.l.b16 %v2064
    %v2403 = vunpack.c.h.b16 %v2064
    %v2404 = vunpack.c.l.b16 %v2065
    %v2405 = vunpack.c.h.b16 %v2065
    %v2406 = vunpack.c.l.b16 %v2066
    %v2407 = vunpack.c.h.b16 %v2066
    %v2408 = vunpack.c.l.b16 %v2067
    %v2409 = vunpack.c.h.b16 %v2067
    %v2410 = vunpack.c.l.b16 %v2068
    %v2411 = vunpack.c.h.b16 %v2068
    %v2412 = vunpack.c.l.b16 %v2069
    %v2413 = vunpack.c.h.b16 %v2069
    %v2414 = vunpack.c.l.b16 %v2070
    %v2415 = vunpack.c.h.b16 %v2070
    %v2416 = vunpack.c.l.b16 %v2071
    %v2417 = vunpack.c.h.b16 %v2071
    %v2418 = vunpack.c.l.b16 %v2072
    %v2419 = vunpack.c.h.b16 %v2072
    %v2420 = vunpack.c.l.b16 %v2073
    %v2421 = vunpack.c.h.b16 %v2073
    %v2422 = vunpack.c.l.b16 %v2074
    %v2423 = vunpack.c.h.b16 %v2074
    %v2424 = vunpack.c.l.b16 %v2075
    %v2425 = vunpack.c.h.b16 %v2075
    %v2426 = vunpack.c.l.b16 %v2076
    %v2427 = vunpack.c.h.b16 %v2076
    %v2428 = vunpack.c.l.b16 %v2077
    %v2429 = vunpack.c.h.b16 %v2077
    %v2430 = vunpack.c.l.b16 %v2078
    %v2431 = vunpack.c.h.b16 %v2078
    %v2432 = vunpack.c.l.b16 %v2079
    %v2433 = vunpack.c.h.b16 %v2079
    %v2434 = vunpack.c.l.b16 %v2080
    %v2435 = vunpack.c.h.b16 %v2080
    %v2436 = vunpack.c.l.b16 %v2081
    %v2437 = vunpack.c.h.b16 %v2081
    %v2438 = vunpack.c.l.b16 %v2082
    %v2439 = vunpack.c.h.b16 %v2082
    %v2440 = vunpack.c.l.b16 %v2083
    %v2441 = vunpack.c.h.b16 %v2083
    %v2442 = vunpack.c.l.b16 %v2084
    %v2443 = vunpack.c.h.b16 %v2084
    %v2444 = vunpack.c.l.b16 %v2085
    %v2445 = vunpack.c.h.b16 %v2085
    %v2446 = vunpack.c.l.b16 %v2086
    %v2447 = vunpack.c.h.b16 %v2086
    %v2448 = vunpack.c.l.b16 %v2087
    %v2449 = vunpack.c.h.b16 %v2087
    %v2450 = vunpack.c.l.b16 %v2088
    %v2451 = vunpack.c.h.b16 %v2088
    %v2452 = vunpack.c.l.b16 %v2089
    %v2453 = vunpack.c.h.b16 %v2089
    %v2454 = vunpack.c.l.b16 %v2090
    %v2455 = vunpack.c.h.b16 %v2090
    %v2456 = vunpack.c.l.b16 %v2091
    %v2457 = vunpack.c.h.b16 %v2091
    %v2458 = vunpack.c.l.b16 %v2092
    %v2459 = vunpack.c.h.b16 %v2092
    %v2460 = vunpack.c.l.b16 %v2093
    %v2461 = vunpack.c.h.b16 %v2093
    %v2462 = vunpack.c.l.b16 %v2094
    %v2463 = vunpack.c.h.b16 %v2094
    %v2464 = vunpack.c.l.b16 %v2095
    %v2465 = vunpack.c.h.b16 %v2095
    %v2466 = vunpack.c.l.b16 %v2096
    %v2467 = vunpack.c.h.b16 %v2096
    %v2468 = vunpack.c.l.b16 %v2097
    %v2469 = vunpack.c.h.b16 %v2097
    %v2470 = vunpack.c.l.b16 %v2098
    %v2471 = vunpack.c.h.b16 %v2098
    %v2472 = vunpack.c.l.b16 %v2099
    %v2473 = vunpack.c.h.b16 %v2099
    %v2474 = vunpack.c.l.b16 %v2100
    %v2475 = vunpack.c.h.b16 %v2100
    %v2476 = vunpack.c.l.b16 %v2101
    %v2477 = vunpack.c.h.b16 %v2101
    %v2478 = vunpack.c.l.b16 %v2102
    %v2479 = vunpack.c.h.b16 %v2102
    %v2480 = vunpack.c.l.b16 %v2103
    %v2481 = vunpack.c.h.b16 %v2103
    %v2482 = vunpack.c.l.b16 %v2104
    %v2483 = vunpack.c.h.b16 %v2104
    %v2484 = vunpack.c.l.b16 %v2105
    %v2485 = vunpack.c.h.b16 %v2105
    %v2486 = vunpack.c.l.b16 %v2106
    %v2487 = vunpack.c.h.b16 %v2106
    %v2488 = vunpack.c.l.b16 %v2107
    %v2489 = vunpack.c.h.b16 %v2107
    %v2490 = vunpack.c.l.b16 %v2108
    %v2491 = vunpack.c.h.b16 %v2108
    %v2492 = vunpack.c.l.b16 %v2109
    %v2493 = vunpack.c.h.b16 %v2109
    %v2494 = vunpack.c.l.b16 %v2110
    %v2495 = vunpack.c.h.b16 %v2110
    %v2496 = vunpack.c.l.b16 %v2111
    %v2497 = vunpack.c.h.b16 %v2111
    %v2498 = vunpack.c.l.b16 %v2112
    %v2499 = vunpack.c.h.b16 %v2112
    %v2500 = vunpack.c.l.b16 %v2113
    %v2501 = vunpack.c.h.b16 %v2113
    %v2502 = vunpack.c.l.b16 %v2114
    %v2503 = vunpack.c.h.b16 %v2114
    %v2504 = vunpack.c.l.b16 %v2115
    %v2505 = vunpack.c.h.b16 %v2115
    %v2506 = vunpack.c.l.b16 %v2116
    %v2507 = vunpack.c.h.b16 %v2116
    %v2508 = vunpack.c.l.b16 %v2117
    %v2509 = vunpack.c.h.b16 %v2117
    %v2510 = vunpack.c.l.b16 %v2118
    %v2511 = vunpack.c.h.b16 %v2118
    %v2512 = vunpack.c.l.b16 %v2119
    %v2513 = vunpack.c.h.b16 %v2119
    %v2514 = vunpack.c.l.b16 %v2120
    %v2515 = vunpack.c.h.b16 %v2120
    %v2516 = vunpack.c.l.b16 %v2121
    %v2517 = vunpack.c.h.b16 %v2121
    %v2518 = vunpack.c.l.b16 %v2122
    %v2519 = vunpack.c.h.b16 %v2122
    %v2520 = vunpack.c.l.b16 %v2123
    %v2521 = vunpack.c.h.b16 %v2123
    %v2522 = vunpack.c.l.b16 %v2124
    %v2523 = vunpack.c.h.b16 %v2124
    %v2524 = vunpack.c.l.b16 %v2125
    %v2525 = vunpack.c.h.b16 %v2125
    %v2526 = vunpack.c.l.b16 %v2126
    %v2527 = vunpack.c.h.b16 %v2126
    %v2528 = vunpack.c.l.b16 %v2127
    %v2529 = vunpack.c.h.b16 %v2127
    %v2530 = vunpack.c.l.b16 %v2128
    %v2531 = vunpack.c.h.b16 %v2128
    %v2532 = vunpack.c.l.b16 %v2129
    %v2533 = vunpack.c.h.b16 %v2129
    %v2534 = vunpack.c.l.b16 %v2130
    %v2535 = vunpack.c.h.b16 %v2130
    %v2536 = vunpack.c.l.b16 %v2131
    %v2537 = vunpack.c.h.b16 %v2131
    %v2538 = vunpack.c.l.b16 %v2132
    %v2539 = vunpack.c.h.b16 %v2132
    %v2540 = vpack.c.b16 %v2288, %v2284
    %v2541 = vpack.c.b16 %v2289, %v2285
    %v2542 = vpack.c.b16 %v2290, %v2286
    %v2543 = vpack.c.b16 %v2291, %v2287
    %v2544 = vpack.c.b16 %v2296, %v2292
    %v2545 = vpack.c.b16 %v2297, %v2293
    %v2546 = vpack.c.b16 %v2298, %v2294
    %v2547 = vpack.c.b16 %v2299, %v2295
    %v2548 = vpack.c.b16 %v2304, %v2300
    %v2549 = vpack.c.b16 %v2305, %v2301
    %v2550 = vpack.c.b16 %v2306, %v2302
    %v2551 = vpack.c.b16 %v2307, %v2303
    %v2552 = vpack.c.b16 %v2312, %v2308
    %v2553 = vpack.c.b16 %v2313, %v2309
    %v2554 = vpack.c.b16 %v2314, %v2310
    %v2555 = vpack.c.b16 %v2315, %v2311
    %v2556 = vpack.c.b16 %v2320, %v2316
    %v2557 = vpack.c.b16 %v2321, %v2317
    %v2558 = vpack.c.b16 %v2322, %v2318
    %v2559 = vpack.c.b16 %v2323, %v2319
    %v2560 = vpack.c.b16 %v2328, %v2324
    %v2561 = vpack.c.b16 %v2329, %v2325
    %v2562 = vpack.c.b16 %v2330, %v2326
    %v2563 = vpack.c.b16 %v2331, %v2327
    %v2564 = vpack.c.b16 %v2336, %v2332
    %v2565 = vpack.c.b16 %v2337, %v2333
    %v2566 = vpack.c.b16 %v2338, %v2334
    %v2567 = vpack.c.b16 %v2339, %v2335
    %v2568 = vpack.c.b16 %v2344, %v2340
    %v2569 = vpack.c.b16 %v2345, %v2341
    %v2570 = vpack.c.b16 %v2346, %v2342
    %v2571 = vpack.c.b16 %v2347, %v2343
    %v2572 = vpack.c.b16 %v2352, %v2348
    %v2573 = vpack.c.b16 %v2353, %v2349
    %v2574 = vpack.c.b16 %v2354, %v2350
    %v2575 = vpack.c.b16 %v2355, %v2351
    %v2576 = vpack.c.b16 %v2360, %v2356
    %v2577 = vpack.c.b16 %v2361, %v2357
    %v2578 = vpack.c.b16 %v2362, %v2358
    %v2579 = vpack.c.b16 %v2363, %v2359
    %v2580 = vpack.c.b16 %v2368, %v2364
    %v2581 = vpack.c.b16 %v2369, %v2365
    %v2582 = vpack.c.b16 %v2370, %v2366
    %v2583 = vpack.c.b16 %v2371, %v2367
    %v2584 = vpack.c.b16 %v2376, %v2372
    %v2585 = vpack.c.b16 %v2377, %v2373
    %v2586 = vpack.c.b16 %v2378, %v2374
    %v2587 = vpack.c.b16 %v2379, %v2375
    %v2588 = vpack.c.b16 %v2384, %v2380
    %v2589 = vpack.c.b16 %v2385, %v2381
    %v2590 = vpack.c.b16 %v2386, %v2382
    %v2591 = vpack.c.b16 %v2387, %v2383
    %v2592 = vpack.c.b16 %v2392, %v2388
    %v2593 = vpack.c.b16 %v2393, %v2389
    %v2594 = vpack.c.b16 %v2394, %v2390
    %v2595 = vpack.c.b16 %v2395, %v2391
    %v2596 = vpack.c.b16 %v2400, %v2396
    %v2597 = vpack.c.b16 %v2401, %v2397
    %v2598 = vpack.c.b16 %v2402, %v2398
    %v2599 = vpack.c.b16 %v2403, %v2399
    %v2600 = vpack.c.b16 %v2408, %v2404
    %v2601 = vpack.c.b16 %v2409, %v2405
    %v2602 = vpack.c.b16 %v2410, %v2406
    %v2603 = vpack.c.b16 %v2411, %v2407
    %v2604 = vpack.c.b16 %v2416, %v2412
    %v2605 = vpack.c.b16 %v2417, %v2413
    %v2606 = vpack.c.b16 %v2418, %v2414
    %v2607 = vpack.c.b16 %v2419, %v2415
    %v2608 = vpack.c.b16 %v2424, %v2420
    %v2609 = vpack.c.b16 %v2425, %v2421
    %v2610 = vpack.c.b16 %v2426, %v2422
    %v2611 = vpack.c.b16 %v2427, %v2423
    %v2612 = vpack.c.b16 %v2432, %v2428
    %v2613 = vpack.c.b16 %v2433, %v2429
    %v2614 = vpack.c.b16 %v2434, %v2430
    %v2615 = vpack.c.b16 %v2435, %v2431
    %v2616 = vpack.c.b16 %v2440, %v2436
    %v2617 = vpack.c.b16 %v2441, %v2437
    %v2618 = vpack.c.b16 %v2442, %v2438
    %v2619 = vpack.c.b16 %v2443, %v2439
    %v2620 = vpack.c.b16 %v2448, %v2444
    %v2621 = vpack.c.b16 %v2449, %v2445
    %v2622 = vpack.c.b16 %v2450, %v2446
    %v2623 = vpack.c.b16 %v2451, %v2447
    %v2624 = vpack.c.b16 %v2456, %v2452
    %v2625 = vpack.c.b16 %v2457, %v2453
    %v2626 = vpack.c.b16 %v2458, %v2454
    %v2627 = vpack.c.b16 %v2459, %v2455
    %v2628 = vpack.c.b16 %v2464, %v2460
    %v2629 = vpack.c.b16 %v2465, %v2461
    %v2630 = vpack.c.b16 %v2466, %v2462
    %v2631 = vpack.c.b16 %v2467, %v2463
    %v2632 = vpack.c.b16 %v2472, %v2468
    %v2633 = vpack.c.b16 %v2473, %v2469
    %v2634 = vpack.c.b16 %v2474, %v2470
    %v2635 = vpack.c.b16 %v2475, %v2471
    %v2636 = vpack.c.b16 %v2480, %v2476
    %v2637 = vpack.c.b16 %v2481, %v2477
    %v2638 = vpack.c.b16 %v2482, %v2478
    %v2639 = vpack.c.b16 %v2483, %v2479
    %v2640 = vpack.c.b16 %v2488, %v2484
    %v2641 = vpack.c.b16 %v2489, %v2485
    %v2642 = vpack.c.b16 %v2490, %v2486
    %v2643 = vpack.c.b16 %v2491, %v2487
    %v2644 = vpack.c.b16 %v2496, %v2492
    %v2645 = vpack.c.b16 %v2497, %v2493
    %v2646 = vpack.c.b16 %v2498, %v2494
    %v2647 = vpack.c.b16 %v2499, %v2495
    %v2648 = vpack.c.b16 %v2504, %v2500
    %v2649 = vpack.c.b16 %v2505, %v2501
    %v2650 = vpack.c.b16 %v2506, %v2502
    %v2651 = vpack.c.b16 %v2507, %v2503
    %v2652 = vpack.c.b16 %v2512, %v2508
    %v2653 = vpack.c.b16 %v2513, %v2509
    %v2654 = vpack.c.b16 %v2514, %v2510
    %v2655 = vpack.c.b16 %v2515, %v2511
    %v2656 = vpack.c.b16 %v2520, %v2516
    %v2657 = vpack.c.b16 %v2521, %v2517
    %v2658 = vpack.c.b16 %v2522, %v2518
    %v2659 = vpack.c.b16 %v2523, %v2519
    %v2660 = vpack.c.b16 %v2528, %v2524
    %v2661 = vpack.c.b16 %v2529, %v2525
    %v2662 = vpack.c.b16 %v2530, %v2526
    %v2663 = vpack.c.b16 %v2531, %v2527
    %v2664 = vpack.c.b16 %v2536, %v2532
    %v2665 = vpack.c.b16 %v2537, %v2533
    %v2666 = vpack.c.b16 %v2538, %v2534
    %v2667 = vpack.c.b16 %v2539, %v2535
    %2796 = vmatprep.subr.bf16.mxu0 %v2541
    %2797 = vmatpush1.bf16.msra.mxu0 %v2540
    %2798 = vmatprep.subr.bf16.mxu0 %v2545
    %2799 = vmatpush1.bf16.msra.mxu0 %v2544
    %2800 = vmatprep.subr.bf16.mxu0 %v2549
    %2801 = vmatpush1.bf16.msra.mxu0 %v2548
    %2802 = vmatprep.subr.bf16.mxu0 %v2553
    %2803 = vmatpush1.bf16.msra.mxu0 %v2552
    %2804 = vmatprep.subr.bf16.mxu0 %v2557
    %2805 = vmatpush1.bf16.msra.mxu0 %v2556
    %2806 = vmatprep.subr.bf16.mxu0 %v2561
    %2807 = vmatpush1.bf16.msra.mxu0 %v2560
    %2808 = vmatprep.subr.bf16.mxu0 %v2565
    %2809 = vmatpush1.bf16.msra.mxu0 %v2564
    %2810 = vmatprep.subr.bf16.mxu0 %v2569
    %2811 = vmatpush1.bf16.msra.mxu0 %v2568
    %2812 = vmatprep.subr.bf16.mxu0 %v2573
    %2813 = vmatpush1.bf16.msra.mxu0 %v2572
    %2814 = vmatprep.subr.bf16.mxu0 %v2577
    %2815 = vmatpush1.bf16.msra.mxu0 %v2576
    %2816 = vmatprep.subr.bf16.mxu0 %v2581
    %2817 = vmatpush1.bf16.msra.mxu0 %v2580
    %2818 = vmatprep.subr.bf16.mxu0 %v2585
    %2819 = vmatpush1.bf16.msra.mxu0 %v2584
    %2820 = vmatprep.subr.bf16.mxu0 %v2589
    %2821 = vmatpush1.bf16.msra.mxu0 %v2588
    %2822 = vmatprep.subr.bf16.mxu0 %v2593
    %2823 = vmatpush1.bf16.msra.mxu0 %v2592
    %2824 = vmatprep.subr.bf16.mxu0 %v2597
    %2825 = vmatpush1.bf16.msra.mxu0 %v2596
    %2826 = vmatprep.subr.bf16.mxu0 %v2601
    %2827 = vmatpush1.bf16.msra.mxu0 %v2600
    %2828 = vmatprep.mubr.bf16.mxu0 %v2001
    %2829 = vmatmul.mubr.bf16.gmra.mrb[0].mxu0 %v2000
    %v2830 = vpop.f32.mrb[0].mxu0
    %v2831 = vadd.f32 %v2139, %v2830
    %v2832 = vpop.f32.mrb[0].mxu0
    %v2833 = vadd.f32 %v2143, %v2832
    %v2834 = vpop.f32.mrb[0].mxu0
    %v2835 = vpop.f32.mrb[0].mxu0
    %2836 = vdwg.mxu0
    %2837 = vmatprep.subr.bf16.mxu0 %v2605
    %2838 = vmatpush1.bf16.msra.mxu0 %v2604
    %2839 = vmatprep.subr.bf16.mxu0 %v2609
    %2840 = vmatpush1.bf16.msra.mxu0 %v2608
    %2841 = vmatprep.subr.bf16.mxu0 %v2613
    %2842 = vmatpush1.bf16.msra.mxu0 %v2612
    %2843 = vmatprep.subr.bf16.mxu0 %v2617
    %2844 = vmatpush1.bf16.msra.mxu0 %v2616
    %2845 = vmatprep.subr.bf16.mxu0 %v2621
    %2846 = vmatpush1.bf16.msra.mxu0 %v2620
    %2847 = vmatprep.subr.bf16.mxu0 %v2625
    %2848 = vmatpush1.bf16.msra.mxu0 %v2624
    %2849 = vmatprep.subr.bf16.mxu0 %v2629
    %2850 = vmatpush1.bf16.msra.mxu0 %v2628
    %2851 = vmatprep.subr.bf16.mxu0 %v2633
    %2852 = vmatpush1.bf16.msra.mxu0 %v2632
    %2853 = vmatprep.subr.bf16.mxu0 %v2637
    %2854 = vmatpush1.bf16.msra.mxu0 %v2636
    %2855 = vmatprep.subr.bf16.mxu0 %v2641
    %2856 = vmatpush1.bf16.msra.mxu0 %v2640
    %2857 = vmatprep.subr.bf16.mxu0 %v2645
    %2858 = vmatpush1.bf16.msra.mxu0 %v2644
    %2859 = vmatprep.subr.bf16.mxu0 %v2649
    %2860 = vmatpush1.bf16.msra.mxu0 %v2648
    %2861 = vmatprep.subr.bf16.mxu0 %v2653
    %2862 = vmatpush1.bf16.msra.mxu0 %v2652
    %2863 = vmatprep.subr.bf16.mxu0 %v2657
    %2864 = vmatpush1.bf16.msra.mxu0 %v2656
    %2865 = vmatprep.subr.bf16.mxu0 %v2661
    %2866 = vmatpush1.bf16.msra.mxu0 %v2660
    %2867 = vmatprep.subr.bf16.mxu0 %v2665
    %2868 = vmatpush1.bf16.msra.mxu0 %v2664
    %2869 = vmatprep.mubr.bf16.mxu0 %v2003
    %2870 = vmatmul.mubr.bf16.gmra.mrb[0].mxu0 %v2002
    %v2871 = vpop.f32.mrb[0].mxu0
    %v2872 = vadd.f32 %v2831, %v2871
    %v2873 = vpop.f32.mrb[0].mxu0
    %v2874 = vadd.f32 %v2833, %v2873
    %v2875 = vpop.f32.mrb[0].mxu0
    %v2876 = vpop.f32.mrb[0].mxu0
    %2877 = vdwg.mxu0
    %2878 = vmatprep.subr.bf16.mxu0 %v2543
    %2879 = vmatpush1.bf16.msra.mxu0 %v2542
    %2880 = vmatprep.subr.bf16.mxu0 %v2547
    %2881 = vmatpush1.bf16.msra.mxu0 %v2546
    %2882 = vmatprep.subr.bf16.mxu0 %v2551
    %2883 = vmatpush1.bf16.msra.mxu0 %v2550
    %2884 = vmatprep.subr.bf16.mxu0 %v2555
    %2885 = vmatpush1.bf16.msra.mxu0 %v2554
    %2886 = vmatprep.subr.bf16.mxu0 %v2559
    %2887 = vmatpush1.bf16.msra.mxu0 %v2558
    %2888 = vmatprep.subr.bf16.mxu0 %v2563
    %2889 = vmatpush1.bf16.msra.mxu0 %v2562
    %2890 = vmatprep.subr.bf16.mxu0 %v2567
    %2891 = vmatpush1.bf16.msra.mxu0 %v2566
    %2892 = vmatprep.subr.bf16.mxu0 %v2571
    %2893 = vmatpush1.bf16.msra.mxu0 %v2570
    %2894 = vmatprep.subr.bf16.mxu0 %v2575
    %2895 = vmatpush1.bf16.msra.mxu0 %v2574
    %2896 = vmatprep.subr.bf16.mxu0 %v2579
    %2897 = vmatpush1.bf16.msra.mxu0 %v2578
    %2898 = vmatprep.subr.bf16.mxu0 %v2583
    %2899 = vmatpush1.bf16.msra.mxu0 %v2582
    %2900 = vmatprep.subr.bf16.mxu0 %v2587
    %2901 = vmatpush1.bf16.msra.mxu0 %v2586
    %2902 = vmatprep.subr.bf16.mxu0 %v2591
    %2903 = vmatpush1.bf16.msra.mxu0 %v2590
    %2904 = vmatprep.subr.bf16.mxu0 %v2595
    %2905 = vmatpush1.bf16.msra.mxu0 %v2594
    %2906 = vmatprep.subr.bf16.mxu0 %v2599
    %2907 = vmatpush1.bf16.msra.mxu0 %v2598
    %2908 = vmatprep.subr.bf16.mxu0 %v2603
    %2909 = vmatpush1.bf16.msra.mxu0 %v2602
    %2910 = vmatprep.mubr.bf16.mxu0 %v2001
    %2911 = vmatmul.mubr.bf16.gmra.mrb[0].mxu0 %v2000
    %v2912 = vpop.f32.mrb[0].mxu0
    %v2913 = vadd.f32 %v2147, %v2912
    %v2914 = vpop.f32.mrb[0].mxu0
    %v2915 = vadd.f32 %v2151, %v2914
    %v2916 = vpop.f32.mrb[0].mxu0
    %v2917 = vpop.f32.mrb[0].mxu0
    %2918 = vdwg.mxu0
    %2919 = vmatprep.subr.bf16.mxu0 %v2607
    %2920 = vmatpush1.bf16.msra.mxu0 %v2606
    %2921 = vmatprep.subr.bf16.mxu0 %v2611
    %2922 = vmatpush1.bf16.msra.mxu0 %v2610
    %2923 = vmatprep.subr.bf16.mxu0 %v2615
    %2924 = vmatpush1.bf16.msra.mxu0 %v2614
    %2925 = vmatprep.subr.bf16.mxu0 %v2619
    %2926 = vmatpush1.bf16.msra.mxu0 %v2618
    %2927 = vmatprep.subr.bf16.mxu0 %v2623
    %2928 = vmatpush1.bf16.msra.mxu0 %v2622
    %2929 = vmatprep.subr.bf16.mxu0 %v2627
    %2930 = vmatpush1.bf16.msra.mxu0 %v2626
    %2931 = vmatprep.subr.bf16.mxu0 %v2631
    %2932 = vmatpush1.bf16.msra.mxu0 %v2630
    %2933 = vmatprep.subr.bf16.mxu0 %v2635
    %2934 = vmatpush1.bf16.msra.mxu0 %v2634
    %2935 = vmatprep.subr.bf16.mxu0 %v2639
    %2936 = vmatpush1.bf16.msra.mxu0 %v2638
    %2937 = vmatprep.subr.bf16.mxu0 %v2643
    %2938 = vmatpush1.bf16.msra.mxu0 %v2642
    %2939 = vmatprep.subr.bf16.mxu0 %v2647
    %2940 = vmatpush1.bf16.msra.mxu0 %v2646
    %2941 = vmatprep.subr.bf16.mxu0 %v2651
    %2942 = vmatpush1.bf16.msra.mxu0 %v2650
    %2943 = vmatprep.subr.bf16.mxu0 %v2655
    %2944 = vmatpush1.bf16.msra.mxu0 %v2654
    %2945 = vmatprep.subr.bf16.mxu0 %v2659
    %2946 = vmatpush1.bf16.msra.mxu0 %v2658
    %2947 = vmatprep.subr.bf16.mxu0 %v2663
    %2948 = vmatpush1.bf16.msra.mxu0 %v2662
    %2949 = vmatprep.subr.bf16.mxu0 %v2667
    %2950 = vmatpush1.bf16.msra.mxu0 %v2666
    %2951 = vmatprep.mubr.bf16.mxu0 %v2003
    %2952 = vmatmul.mubr.bf16.gmra.mrb[0].mxu0 %v2002
    %v2953 = vpop.f32.mrb[0].mxu0
    %v2954 = vadd.f32 %v2913, %v2953
    %v2955 = vpop.f32.mrb[0].mxu0
    %v2956 = vadd.f32 %v2915, %v2955
    %v2957 = vpop.f32.mrb[0].mxu0
    %v2958 = vpop.f32.mrb[0].mxu0
    %2959 = vdwg.mxu0
    %v2960 = vmul.f32 %v2872, 0.2
    %v2961 = vmul.f32 %v2874, 0.2
    %v2962 = vmul.f32 %v2954, 0.2
    %v2963 = vmul.f32 %v2956, 0.2
    %v2964 = vmax.f32 %v2872, %v2960
    %v2965 = vmax.f32 %v2874, %v2961
    %v2966 = vmax.f32 %v2954, %v2962
    %v2967 = vmax.f32 %v2956, %v2963
    %v2968 = vpack.c.bf16 %v2964, %v2964
    %v2969 = vpack.c.bf16 %v2965, %v2965
    %v2970 = vpack.c.bf16 %v2966, %v2966
    %v2971 = vpack.c.bf16 %v2967, %v2967
    %s2972 = scalar_lea.vmem [#allocation5], 3072
    %v2973 = vld [vmem:[%s2972] sm:$0xff]
    %v2974 = vld [vmem:[%s2972 + $0x8] sm:$0xff]
    %v2975 = vld [vmem:[%s2972 + $0x10] sm:$0xff]
    %v2976 = vld [vmem:[%s2972 + $0x18] sm:$0xff]
    %v2977 = vld [vmem:[%s2972 + $0x20] sm:$0xff]
    %v2978 = vld [vmem:[%s2972 + $0x28] sm:$0xff]
    %v2979 = vld [vmem:[%s2972 + $0x30] sm:$0xff]
    %v2980 = vld [vmem:[%s2972 + $0x38] sm:$0xff]
    %v2981 = vld [vmem:[%s2972 + $0x40] sm:$0xff]
    %v2982 = vld [vmem:[%s2972 + $0x48] sm:$0xff]
    %v2983 = vld [vmem:[%s2972 + $0x50] sm:$0xff]
    %v2984 = vld [vmem:[%s2972 + $0x58] sm:$0xff]
    %v2985 = vld [vmem:[%s2972 + $0x60] sm:$0xff]
    %v2986 = vld [vmem:[%s2972 + $0x68] sm:$0xff]
    %v2987 = vld [vmem:[%s2972 + $0x70] sm:$0xff]
    %v2988 = vld [vmem:[%s2972 + $0x78] sm:$0xff]
    %v2989 = vld [vmem:[%s2972 + $0x80] sm:$0xff]
    %v2990 = vld [vmem:[%s2972 + $0x88] sm:$0xff]
    %v2991 = vld [vmem:[%s2972 + $0x90] sm:$0xff]
    %v2992 = vld [vmem:[%s2972 + $0x98] sm:$0xff]
    %v2993 = vld [vmem:[%s2972 + $0xa0] sm:$0xff]
    %v2994 = vld [vmem:[%s2972 + $0xa8] sm:$0xff]
    %v2995 = vld [vmem:[%s2972 + $0xb0] sm:$0xff]
    %v2996 = vld [vmem:[%s2972 + $0xb8] sm:$0xff]
    %v2997 = vld [vmem:[%s2972 + $0xc0] sm:$0xff]
    %v2998 = vld [vmem:[%s2972 + $0xc8] sm:$0xff]
    %v2999 = vld [vmem:[%s2972 + $0xd0] sm:$0xff]
    %v3000 = vld [vmem:[%s2972 + $0xd8] sm:$0xff]
    %v3001 = vld [vmem:[%s2972 + $0xe0] sm:$0xff]
    %v3002 = vld [vmem:[%s2972 + $0xe8] sm:$0xff]
    %v3003 = vld [vmem:[%s2972 + $0xf0] sm:$0xff]
    %v3004 = vld [vmem:[%s2972 + $0xf8] sm:$0xff]
    %v3005 = vld [vmem:[%s2972 + $0x100] sm:$0xff]
    %v3006 = vld [vmem:[%s2972 + $0x108] sm:$0xff]
    %v3007 = vld [vmem:[%s2972 + $0x110] sm:$0xff]
    %v3008 = vld [vmem:[%s2972 + $0x118] sm:$0xff]
    %v3009 = vld [vmem:[%s2972 + $0x120] sm:$0xff]
    %v3010 = vld [vmem:[%s2972 + $0x128] sm:$0xff]
    %v3011 = vld [vmem:[%s2972 + $0x130] sm:$0xff]
    %v3012 = vld [vmem:[%s2972 + $0x138] sm:$0xff]
    %v3013 = vld [vmem:[%s2972 + $0x140] sm:$0xff]
    %v3014 = vld [vmem:[%s2972 + $0x148] sm:$0xff]
    %v3015 = vld [vmem:[%s2972 + $0x150] sm:$0xff]
    %v3016 = vld [vmem:[%s2972 + $0x158] sm:$0xff]
    %v3017 = vld [vmem:[%s2972 + $0x160] sm:$0xff]
    %v3018 = vld [vmem:[%s2972 + $0x168] sm:$0xff]
    %v3019 = vld [vmem:[%s2972 + $0x170] sm:$0xff]
    %v3020 = vld [vmem:[%s2972 + $0x178] sm:$0xff]
    %v3021 = vld [vmem:[%s2972 + $0x180] sm:$0xff]
    %v3022 = vld [vmem:[%s2972 + $0x188] sm:$0xff]
    %v3023 = vld [vmem:[%s2972 + $0x190] sm:$0xff]
    %v3024 = vld [vmem:[%s2972 + $0x198] sm:$0xff]
    %v3025 = vld [vmem:[%s2972 + $0x1a0] sm:$0xff]
    %v3026 = vld [vmem:[%s2972 + $0x1a8] sm:$0xff]
    %v3027 = vld [vmem:[%s2972 + $0x1b0] sm:$0xff]
    %v3028 = vld [vmem:[%s2972 + $0x1b8] sm:$0xff]
    %v3029 = vld [vmem:[%s2972 + $0x1c0] sm:$0xff]
    %v3030 = vld [vmem:[%s2972 + $0x1c8] sm:$0xff]
    %v3031 = vld [vmem:[%s2972 + $0x1d0] sm:$0xff]
    %v3032 = vld [vmem:[%s2972 + $0x1d8] sm:$0xff]
    %v3033 = vld [vmem:[%s2972 + $0x1e0] sm:$0xff]
    %v3034 = vld [vmem:[%s2972 + $0x1e8] sm:$0xff]
    %v3035 = vld [vmem:[%s2972 + $0x1f0] sm:$0xff]
    %v3036 = vld [vmem:[%s2972 + $0x1f8] sm:$0xff]
    %v3037 = vld [vmem:[%s2972 + $0x200] sm:$0xff]
    %v3038 = vld [vmem:[%s2972 + $0x208] sm:$0xff]
    %v3039 = vld [vmem:[%s2972 + $0x210] sm:$0xff]
    %v3040 = vld [vmem:[%s2972 + $0x218] sm:$0xff]
    %v3041 = vld [vmem:[%s2972 + $0x220] sm:$0xff]
    %v3042 = vld [vmem:[%s2972 + $0x228] sm:$0xff]
    %v3043 = vld [vmem:[%s2972 + $0x230] sm:$0xff]
    %v3044 = vld [vmem:[%s2972 + $0x238] sm:$0xff]
    %v3045 = vld [vmem:[%s2972 + $0x240] sm:$0xff]
    %v3046 = vld [vmem:[%s2972 + $0x248] sm:$0xff]
    %v3047 = vld [vmem:[%s2972 + $0x250] sm:$0xff]
    %v3048 = vld [vmem:[%s2972 + $0x258] sm:$0xff]
    %v3049 = vld [vmem:[%s2972 + $0x260] sm:$0xff]
    %v3050 = vld [vmem:[%s2972 + $0x268] sm:$0xff]
    %v3051 = vld [vmem:[%s2972 + $0x270] sm:$0xff]
    %v3052 = vld [vmem:[%s2972 + $0x278] sm:$0xff]
    %v3053 = vld [vmem:[%s2972 + $0x280] sm:$0xff]
    %v3054 = vld [vmem:[%s2972 + $0x288] sm:$0xff]
    %v3055 = vld [vmem:[%s2972 + $0x290] sm:$0xff]
    %v3056 = vld [vmem:[%s2972 + $0x298] sm:$0xff]
    %v3057 = vld [vmem:[%s2972 + $0x2a0] sm:$0xff]
    %v3058 = vld [vmem:[%s2972 + $0x2a8] sm:$0xff]
    %v3059 = vld [vmem:[%s2972 + $0x2b0] sm:$0xff]
    %v3060 = vld [vmem:[%s2972 + $0x2b8] sm:$0xff]
    %v3061 = vld [vmem:[%s2972 + $0x2c0] sm:$0xff]
    %v3062 = vld [vmem:[%s2972 + $0x2c8] sm:$0xff]
    %v3063 = vld [vmem:[%s2972 + $0x2d0] sm:$0xff]
    %v3064 = vld [vmem:[%s2972 + $0x2d8] sm:$0xff]
    %v3065 = vld [vmem:[%s2972 + $0x2e0] sm:$0xff]
    %v3066 = vld [vmem:[%s2972 + $0x2e8] sm:$0xff]
    %v3067 = vld [vmem:[%s2972 + $0x2f0] sm:$0xff]
    %v3068 = vld [vmem:[%s2972 + $0x2f8] sm:$0xff]
    %v3069 = vld [vmem:[%s2972 + $0x300] sm:$0xff]
    %v3070 = vld [vmem:[%s2972 + $0x308] sm:$0xff]
    %v3071 = vld [vmem:[%s2972 + $0x310] sm:$0xff]
    %v3072 = vld [vmem:[%s2972 + $0x318] sm:$0xff]
    %v3073 = vld [vmem:[%s2972 + $0x320] sm:$0xff]
    %v3074 = vld [vmem:[%s2972 + $0x328] sm:$0xff]
    %v3075 = vld [vmem:[%s2972 + $0x330] sm:$0xff]
    %v3076 = vld [vmem:[%s2972 + $0x338] sm:$0xff]
    %v3077 = vld [vmem:[%s2972 + $0x340] sm:$0xff]
    %v3078 = vld [vmem:[%s2972 + $0x348] sm:$0xff]
    %v3079 = vld [vmem:[%s2972 + $0x350] sm:$0xff]
    %v3080 = vld [vmem:[%s2972 + $0x358] sm:$0xff]
    %v3081 = vld [vmem:[%s2972 + $0x360] sm:$0xff]
    %v3082 = vld [vmem:[%s2972 + $0x368] sm:$0xff]
    %v3083 = vld [vmem:[%s2972 + $0x370] sm:$0xff]
    %v3084 = vld [vmem:[%s2972 + $0x378] sm:$0xff]
    %v3085 = vld [vmem:[%s2972 + $0x380] sm:$0xff]
    %v3086 = vld [vmem:[%s2972 + $0x388] sm:$0xff]
    %v3087 = vld [vmem:[%s2972 + $0x390] sm:$0xff]
    %v3088 = vld [vmem:[%s2972 + $0x398] sm:$0xff]
    %v3089 = vld [vmem:[%s2972 + $0x3a0] sm:$0xff]
    %v3090 = vld [vmem:[%s2972 + $0x3a8] sm:$0xff]
    %v3091 = vld [vmem:[%s2972 + $0x3b0] sm:$0xff]
    %v3092 = vld [vmem:[%s2972 + $0x3b8] sm:$0xff]
    %v3093 = vld [vmem:[%s2972 + $0x3c0] sm:$0xff]
    %v3094 = vld [vmem:[%s2972 + $0x3c8] sm:$0xff]
    %v3095 = vld [vmem:[%s2972 + $0x3d0] sm:$0xff]
    %v3096 = vld [vmem:[%s2972 + $0x3d8] sm:$0xff]
    %v3097 = vld [vmem:[%s2972 + $0x3e0] sm:$0xff]
    %v3098 = vld [vmem:[%s2972 + $0x3e8] sm:$0xff]
    %v3099 = vld [vmem:[%s2972 + $0x3f0] sm:$0xff]
    %v3100 = vld [vmem:[%s2972 + $0x3f8] sm:$0xff]
    %s3101 = scalar_lea.vmem [#allocation7], 12
    %v3102 = vld [vmem:[%s3101] sm:$0xf]
    %v3104 = vlaneseq
    %v3105 = vshrl.u32 %v3104, 7
    %v3106 = vsub.s32 0, %v3105
    %v3107 = vrot.slane %v3102, %v3106
    %v3108 = vlaneseq
    %v3109 = vshrl.u32 %v3108, 7
    %v3110 = vsub.s32 1, %v3109
    %v3111 = vrot.slane %v3102, %v3110
    %v3112 = vlaneseq
    %v3113 = vshrl.u32 %v3112, 7
    %v3114 = vsub.s32 2, %v3113
    %v3115 = vrot.slane %v3102, %v3114
    %v3116 = vlaneseq
    %v3117 = vshrl.u32 %v3116, 7
    %v3118 = vsub.s32 3, %v3117
    %v3119 = vrot.slane %v3102, %v3118
    %v3252 = vunpack.c.l.b16 %v2973
    %v3253 = vunpack.c.h.b16 %v2973
    %v3254 = vunpack.c.l.b16 %v2974
    %v3255 = vunpack.c.h.b16 %v2974
    %v3256 = vunpack.c.l.b16 %v2975
    %v3257 = vunpack.c.h.b16 %v2975
    %v3258 = vunpack.c.l.b16 %v2976
    %v3259 = vunpack.c.h.b16 %v2976
    %v3260 = vunpack.c.l.b16 %v2977
    %v3261 = vunpack.c.h.b16 %v2977
    %v3262 = vunpack.c.l.b16 %v2978
    %v3263 = vunpack.c.h.b16 %v2978
    %v3264 = vunpack.c.l.b16 %v2979
    %v3265 = vunpack.c.h.b16 %v2979
    %v3266 = vunpack.c.l.b16 %v2980
    %v3267 = vunpack.c.h.b16 %v2980
    %v3268 = vunpack.c.l.b16 %v2981
    %v3269 = vunpack.c.h.b16 %v2981
    %v3270 = vunpack.c.l.b16 %v2982
    %v3271 = vunpack.c.h.b16 %v2982
    %v3272 = vunpack.c.l.b16 %v2983
    %v3273 = vunpack.c.h.b16 %v2983
    %v3274 = vunpack.c.l.b16 %v2984
    %v3275 = vunpack.c.h.b16 %v2984
    %v3276 = vunpack.c.l.b16 %v2985
    %v3277 = vunpack.c.h.b16 %v2985
    %v3278 = vunpack.c.l.b16 %v2986
    %v3279 = vunpack.c.h.b16 %v2986
    %v3280 = vunpack.c.l.b16 %v2987
    %v3281 = vunpack.c.h.b16 %v2987
    %v3282 = vunpack.c.l.b16 %v2988
    %v3283 = vunpack.c.h.b16 %v2988
    %v3284 = vunpack.c.l.b16 %v2989
    %v3285 = vunpack.c.h.b16 %v2989
    %v3286 = vunpack.c.l.b16 %v2990
    %v3287 = vunpack.c.h.b16 %v2990
    %v3288 = vunpack.c.l.b16 %v2991
    %v3289 = vunpack.c.h.b16 %v2991
    %v3290 = vunpack.c.l.b16 %v2992
    %v3291 = vunpack.c.h.b16 %v2992
    %v3292 = vunpack.c.l.b16 %v2993
    %v3293 = vunpack.c.h.b16 %v2993
    %v3294 = vunpack.c.l.b16 %v2994
    %v3295 = vunpack.c.h.b16 %v2994
    %v3296 = vunpack.c.l.b16 %v2995
    %v3297 = vunpack.c.h.b16 %v2995
    %v3298 = vunpack.c.l.b16 %v2996
    %v3299 = vunpack.c.h.b16 %v2996
    %v3300 = vunpack.c.l.b16 %v2997
    %v3301 = vunpack.c.h.b16 %v2997
    %v3302 = vunpack.c.l.b16 %v2998
    %v3303 = vunpack.c.h.b16 %v2998
    %v3304 = vunpack.c.l.b16 %v2999
    %v3305 = vunpack.c.h.b16 %v2999
    %v3306 = vunpack.c.l.b16 %v3000
    %v3307 = vunpack.c.h.b16 %v3000
    %v3308 = vunpack.c.l.b16 %v3001
    %v3309 = vunpack.c.h.b16 %v3001
    %v3310 = vunpack.c.l.b16 %v3002
    %v3311 = vunpack.c.h.b16 %v3002
    %v3312 = vunpack.c.l.b16 %v3003
    %v3313 = vunpack.c.h.b16 %v3003
    %v3314 = vunpack.c.l.b16 %v3004
    %v3315 = vunpack.c.h.b16 %v3004
    %v3316 = vunpack.c.l.b16 %v3005
    %v3317 = vunpack.c.h.b16 %v3005
    %v3318 = vunpack.c.l.b16 %v3006
    %v3319 = vunpack.c.h.b16 %v3006
    %v3320 = vunpack.c.l.b16 %v3007
    %v3321 = vunpack.c.h.b16 %v3007
    %v3322 = vunpack.c.l.b16 %v3008
    %v3323 = vunpack.c.h.b16 %v3008
    %v3324 = vunpack.c.l.b16 %v3009
    %v3325 = vunpack.c.h.b16 %v3009
    %v3326 = vunpack.c.l.b16 %v3010
    %v3327 = vunpack.c.h.b16 %v3010
    %v3328 = vunpack.c.l.b16 %v3011
    %v3329 = vunpack.c.h.b16 %v3011
    %v3330 = vunpack.c.l.b16 %v3012
    %v3331 = vunpack.c.h.b16 %v3012
    %v3332 = vunpack.c.l.b16 %v3013
    %v3333 = vunpack.c.h.b16 %v3013
    %v3334 = vunpack.c.l.b16 %v3014
    %v3335 = vunpack.c.h.b16 %v3014
    %v3336 = vunpack.c.l.b16 %v3015
    %v3337 = vunpack.c.h.b16 %v3015
    %v3338 = vunpack.c.l.b16 %v3016
    %v3339 = vunpack.c.h.b16 %v3016
    %v3340 = vunpack.c.l.b16 %v3017
    %v3341 = vunpack.c.h.b16 %v3017
    %v3342 = vunpack.c.l.b16 %v3018
    %v3343 = vunpack.c.h.b16 %v3018
    %v3344 = vunpack.c.l.b16 %v3019
    %v3345 = vunpack.c.h.b16 %v3019
    %v3346 = vunpack.c.l.b16 %v3020
    %v3347 = vunpack.c.h.b16 %v3020
    %v3348 = vunpack.c.l.b16 %v3021
    %v3349 = vunpack.c.h.b16 %v3021
    %v3350 = vunpack.c.l.b16 %v3022
    %v3351 = vunpack.c.h.b16 %v3022
    %v3352 = vunpack.c.l.b16 %v3023
    %v3353 = vunpack.c.h.b16 %v3023
    %v3354 = vunpack.c.l.b16 %v3024
    %v3355 = vunpack.c.h.b16 %v3024
    %v3356 = vunpack.c.l.b16 %v3025
    %v3357 = vunpack.c.h.b16 %v3025
    %v3358 = vunpack.c.l.b16 %v3026
    %v3359 = vunpack.c.h.b16 %v3026
    %v3360 = vunpack.c.l.b16 %v3027
    %v3361 = vunpack.c.h.b16 %v3027
    %v3362 = vunpack.c.l.b16 %v3028
    %v3363 = vunpack.c.h.b16 %v3028
    %v3364 = vunpack.c.l.b16 %v3029
    %v3365 = vunpack.c.h.b16 %v3029
    %v3366 = vunpack.c.l.b16 %v3030
    %v3367 = vunpack.c.h.b16 %v3030
    %v3368 = vunpack.c.l.b16 %v3031
    %v3369 = vunpack.c.h.b16 %v3031
    %v3370 = vunpack.c.l.b16 %v3032
    %v3371 = vunpack.c.h.b16 %v3032
    %v3372 = vunpack.c.l.b16 %v3033
    %v3373 = vunpack.c.h.b16 %v3033
    %v3374 = vunpack.c.l.b16 %v3034
    %v3375 = vunpack.c.h.b16 %v3034
    %v3376 = vunpack.c.l.b16 %v3035
    %v3377 = vunpack.c.h.b16 %v3035
    %v3378 = vunpack.c.l.b16 %v3036
    %v3379 = vunpack.c.h.b16 %v3036
    %v3380 = vunpack.c.l.b16 %v3037
    %v3381 = vunpack.c.h.b16 %v3037
    %v3382 = vunpack.c.l.b16 %v3038
    %v3383 = vunpack.c.h.b16 %v3038
    %v3384 = vunpack.c.l.b16 %v3039
    %v3385 = vunpack.c.h.b16 %v3039
    %v3386 = vunpack.c.l.b16 %v3040
    %v3387 = vunpack.c.h.b16 %v3040
    %v3388 = vunpack.c.l.b16 %v3041
    %v3389 = vunpack.c.h.b16 %v3041
    %v3390 = vunpack.c.l.b16 %v3042
    %v3391 = vunpack.c.h.b16 %v3042
    %v3392 = vunpack.c.l.b16 %v3043
    %v3393 = vunpack.c.h.b16 %v3043
    %v3394 = vunpack.c.l.b16 %v3044
    %v3395 = vunpack.c.h.b16 %v3044
    %v3396 = vunpack.c.l.b16 %v3045
    %v3397 = vunpack.c.h.b16 %v3045
    %v3398 = vunpack.c.l.b16 %v3046
    %v3399 = vunpack.c.h.b16 %v3046
    %v3400 = vunpack.c.l.b16 %v3047
    %v3401 = vunpack.c.h.b16 %v3047
    %v3402 = vunpack.c.l.b16 %v3048
    %v3403 = vunpack.c.h.b16 %v3048
    %v3404 = vunpack.c.l.b16 %v3049
    %v3405 = vunpack.c.h.b16 %v3049
    %v3406 = vunpack.c.l.b16 %v3050
    %v3407 = vunpack.c.h.b16 %v3050
    %v3408 = vunpack.c.l.b16 %v3051
    %v3409 = vunpack.c.h.b16 %v3051
    %v3410 = vunpack.c.l.b16 %v3052
    %v3411 = vunpack.c.h.b16 %v3052
    %v3412 = vunpack.c.l.b16 %v3053
    %v3413 = vunpack.c.h.b16 %v3053
    %v3414 = vunpack.c.l.b16 %v3054
    %v3415 = vunpack.c.h.b16 %v3054
    %v3416 = vunpack.c.l.b16 %v3055
    %v3417 = vunpack.c.h.b16 %v3055
    %v3418 = vunpack.c.l.b16 %v3056
    %v3419 = vunpack.c.h.b16 %v3056
    %v3420 = vunpack.c.l.b16 %v3057
    %v3421 = vunpack.c.h.b16 %v3057
    %v3422 = vunpack.c.l.b16 %v3058
    %v3423 = vunpack.c.h.b16 %v3058
    %v3424 = vunpack.c.l.b16 %v3059
    %v3425 = vunpack.c.h.b16 %v3059
    %v3426 = vunpack.c.l.b16 %v3060
    %v3427 = vunpack.c.h.b16 %v3060
    %v3428 = vunpack.c.l.b16 %v3061
    %v3429 = vunpack.c.h.b16 %v3061
    %v3430 = vunpack.c.l.b16 %v3062
    %v3431 = vunpack.c.h.b16 %v3062
    %v3432 = vunpack.c.l.b16 %v3063
    %v3433 = vunpack.c.h.b16 %v3063
    %v3434 = vunpack.c.l.b16 %v3064
    %v3435 = vunpack.c.h.b16 %v3064
    %v3436 = vunpack.c.l.b16 %v3065
    %v3437 = vunpack.c.h.b16 %v3065
    %v3438 = vunpack.c.l.b16 %v3066
    %v3439 = vunpack.c.h.b16 %v3066
    %v3440 = vunpack.c.l.b16 %v3067
    %v3441 = vunpack.c.h.b16 %v3067
    %v3442 = vunpack.c.l.b16 %v3068
    %v3443 = vunpack.c.h.b16 %v3068
    %v3444 = vunpack.c.l.b16 %v3069
    %v3445 = vunpack.c.h.b16 %v3069
    %v3446 = vunpack.c.l.b16 %v3070
    %v3447 = vunpack.c.h.b16 %v3070
    %v3448 = vunpack.c.l.b16 %v3071
    %v3449 = vunpack.c.h.b16 %v3071
    %v3450 = vunpack.c.l.b16 %v3072
    %v3451 = vunpack.c.h.b16 %v3072
    %v3452 = vunpack.c.l.b16 %v3073
    %v3453 = vunpack.c.h.b16 %v3073
    %v3454 = vunpack.c.l.b16 %v3074
    %v3455 = vunpack.c.h.b16 %v3074
    %v3456 = vunpack.c.l.b16 %v3075
    %v3457 = vunpack.c.h.b16 %v3075
    %v3458 = vunpack.c.l.b16 %v3076
    %v3459 = vunpack.c.h.b16 %v3076
    %v3460 = vunpack.c.l.b16 %v3077
    %v3461 = vunpack.c.h.b16 %v3077
    %v3462 = vunpack.c.l.b16 %v3078
    %v3463 = vunpack.c.h.b16 %v3078
    %v3464 = vunpack.c.l.b16 %v3079
    %v3465 = vunpack.c.h.b16 %v3079
    %v3466 = vunpack.c.l.b16 %v3080
    %v3467 = vunpack.c.h.b16 %v3080
    %v3468 = vunpack.c.l.b16 %v3081
    %v3469 = vunpack.c.h.b16 %v3081
    %v3470 = vunpack.c.l.b16 %v3082
    %v3471 = vunpack.c.h.b16 %v3082
    %v3472 = vunpack.c.l.b16 %v3083
    %v3473 = vunpack.c.h.b16 %v3083
    %v3474 = vunpack.c.l.b16 %v3084
    %v3475 = vunpack.c.h.b16 %v3084
    %v3476 = vunpack.c.l.b16 %v3085
    %v3477 = vunpack.c.h.b16 %v3085
    %v3478 = vunpack.c.l.b16 %v3086
    %v3479 = vunpack.c.h.b16 %v3086
    %v3480 = vunpack.c.l.b16 %v3087
    %v3481 = vunpack.c.h.b16 %v3087
    %v3482 = vunpack.c.l.b16 %v3088
    %v3483 = vunpack.c.h.b16 %v3088
    %v3484 = vunpack.c.l.b16 %v3089
    %v3485 = vunpack.c.h.b16 %v3089
    %v3486 = vunpack.c.l.b16 %v3090
    %v3487 = vunpack.c.h.b16 %v3090
    %v3488 = vunpack.c.l.b16 %v3091
    %v3489 = vunpack.c.h.b16 %v3091
    %v3490 = vunpack.c.l.b16 %v3092
    %v3491 = vunpack.c.h.b16 %v3092
    %v3492 = vunpack.c.l.b16 %v3093
    %v3493 = vunpack.c.h.b16 %v3093
    %v3494 = vunpack.c.l.b16 %v3094
    %v3495 = vunpack.c.h.b16 %v3094
    %v3496 = vunpack.c.l.b16 %v3095
    %v3497 = vunpack.c.h.b16 %v3095
    %v3498 = vunpack.c.l.b16 %v3096
    %v3499 = vunpack.c.h.b16 %v3096
    %v3500 = vunpack.c.l.b16 %v3097
    %v3501 = vunpack.c.h.b16 %v3097
    %v3502 = vunpack.c.l.b16 %v3098
    %v3503 = vunpack.c.h.b16 %v3098
    %v3504 = vunpack.c.l.b16 %v3099
    %v3505 = vunpack.c.h.b16 %v3099
    %v3506 = vunpack.c.l.b16 %v3100
    %v3507 = vunpack.c.h.b16 %v3100
    %v3508 = vpack.c.b16 %v3256, %v3252
    %v3509 = vpack.c.b16 %v3257, %v3253
    %v3510 = vpack.c.b16 %v3258, %v3254
    %v3511 = vpack.c.b16 %v3259, %v3255
    %v3512 = vpack.c.b16 %v3264, %v3260
    %v3513 = vpack.c.b16 %v3265, %v3261
    %v3514 = vpack.c.b16 %v3266, %v3262
    %v3515 = vpack.c.b16 %v3267, %v3263
    %v3516 = vpack.c.b16 %v3272, %v3268
    %v3517 = vpack.c.b16 %v3273, %v3269
    %v3518 = vpack.c.b16 %v3274, %v3270
    %v3519 = vpack.c.b16 %v3275, %v3271
    %v3520 = vpack.c.b16 %v3280, %v3276
    %v3521 = vpack.c.b16 %v3281, %v3277
    %v3522 = vpack.c.b16 %v3282, %v3278
    %v3523 = vpack.c.b16 %v3283, %v3279
    %v3524 = vpack.c.b16 %v3288, %v3284
    %v3525 = vpack.c.b16 %v3289, %v3285
    %v3526 = vpack.c.b16 %v3290, %v3286
    %v3527 = vpack.c.b16 %v3291, %v3287
    %v3528 = vpack.c.b16 %v3296, %v3292
    %v3529 = vpack.c.b16 %v3297, %v3293
    %v3530 = vpack.c.b16 %v3298, %v3294
    %v3531 = vpack.c.b16 %v3299, %v3295
    %v3532 = vpack.c.b16 %v3304, %v3300
    %v3533 = vpack.c.b16 %v3305, %v3301
    %v3534 = vpack.c.b16 %v3306, %v3302
    %v3535 = vpack.c.b16 %v3307, %v3303
    %v3536 = vpack.c.b16 %v3312, %v3308
    %v3537 = vpack.c.b16 %v3313, %v3309
    %v3538 = vpack.c.b16 %v3314, %v3310
    %v3539 = vpack.c.b16 %v3315, %v3311
    %v3540 = vpack.c.b16 %v3320, %v3316
    %v3541 = vpack.c.b16 %v3321, %v3317
    %v3542 = vpack.c.b16 %v3322, %v3318
    %v3543 = vpack.c.b16 %v3323, %v3319
    %v3544 = vpack.c.b16 %v3328, %v3324
    %v3545 = vpack.c.b16 %v3329, %v3325
    %v3546 = vpack.c.b16 %v3330, %v3326
    %v3547 = vpack.c.b16 %v3331, %v3327
    %v3548 = vpack.c.b16 %v3336, %v3332
    %v3549 = vpack.c.b16 %v3337, %v3333
    %v3550 = vpack.c.b16 %v3338, %v3334
    %v3551 = vpack.c.b16 %v3339, %v3335
    %v3552 = vpack.c.b16 %v3344, %v3340
    %v3553 = vpack.c.b16 %v3345, %v3341
    %v3554 = vpack.c.b16 %v3346, %v3342
    %v3555 = vpack.c.b16 %v3347, %v3343
    %v3556 = vpack.c.b16 %v3352, %v3348
    %v3557 = vpack.c.b16 %v3353, %v3349
    %v3558 = vpack.c.b16 %v3354, %v3350
    %v3559 = vpack.c.b16 %v3355, %v3351
    %v3560 = vpack.c.b16 %v3360, %v3356
    %v3561 = vpack.c.b16 %v3361, %v3357
    %v3562 = vpack.c.b16 %v3362, %v3358
    %v3563 = vpack.c.b16 %v3363, %v3359
    %v3564 = vpack.c.b16 %v3368, %v3364
    %v3565 = vpack.c.b16 %v3369, %v3365
    %v3566 = vpack.c.b16 %v3370, %v3366
    %v3567 = vpack.c.b16 %v3371, %v3367
    %v3568 = vpack.c.b16 %v3376, %v3372
    %v3569 = vpack.c.b16 %v3377, %v3373
    %v3570 = vpack.c.b16 %v3378, %v3374
    %v3571 = vpack.c.b16 %v3379, %v3375
    %v3572 = vpack.c.b16 %v3384, %v3380
    %v3573 = vpack.c.b16 %v3385, %v3381
    %v3574 = vpack.c.b16 %v3386, %v3382
    %v3575 = vpack.c.b16 %v3387, %v3383
    %v3576 = vpack.c.b16 %v3392, %v3388
    %v3577 = vpack.c.b16 %v3393, %v3389
    %v3578 = vpack.c.b16 %v3394, %v3390
    %v3579 = vpack.c.b16 %v3395, %v3391
    %v3580 = vpack.c.b16 %v3400, %v3396
    %v3581 = vpack.c.b16 %v3401, %v3397
    %v3582 = vpack.c.b16 %v3402, %v3398
    %v3583 = vpack.c.b16 %v3403, %v3399
    %v3584 = vpack.c.b16 %v3408, %v3404
    %v3585 = vpack.c.b16 %v3409, %v3405
    %v3586 = vpack.c.b16 %v3410, %v3406
    %v3587 = vpack.c.b16 %v3411, %v3407
    %v3588 = vpack.c.b16 %v3416, %v3412
    %v3589 = vpack.c.b16 %v3417, %v3413
    %v3590 = vpack.c.b16 %v3418, %v3414
    %v3591 = vpack.c.b16 %v3419, %v3415
    %v3592 = vpack.c.b16 %v3424, %v3420
    %v3593 = vpack.c.b16 %v3425, %v3421
    %v3594 = vpack.c.b16 %v3426, %v3422
    %v3595 = vpack.c.b16 %v3427, %v3423
    %v3596 = vpack.c.b16 %v3432, %v3428
    %v3597 = vpack.c.b16 %v3433, %v3429
    %v3598 = vpack.c.b16 %v3434, %v3430
    %v3599 = vpack.c.b16 %v3435, %v3431
    %v3600 = vpack.c.b16 %v3440, %v3436
    %v3601 = vpack.c.b16 %v3441, %v3437
    %v3602 = vpack.c.b16 %v3442, %v3438
    %v3603 = vpack.c.b16 %v3443, %v3439
    %v3604 = vpack.c.b16 %v3448, %v3444
    %v3605 = vpack.c.b16 %v3449, %v3445
    %v3606 = vpack.c.b16 %v3450, %v3446
    %v3607 = vpack.c.b16 %v3451, %v3447
    %v3608 = vpack.c.b16 %v3456, %v3452
    %v3609 = vpack.c.b16 %v3457, %v3453
    %v3610 = vpack.c.b16 %v3458, %v3454
    %v3611 = vpack.c.b16 %v3459, %v3455
    %v3612 = vpack.c.b16 %v3464, %v3460
    %v3613 = vpack.c.b16 %v3465, %v3461
    %v3614 = vpack.c.b16 %v3466, %v3462
    %v3615 = vpack.c.b16 %v3467, %v3463
    %v3616 = vpack.c.b16 %v3472, %v3468
    %v3617 = vpack.c.b16 %v3473, %v3469
    %v3618 = vpack.c.b16 %v3474, %v3470
    %v3619 = vpack.c.b16 %v3475, %v3471
    %v3620 = vpack.c.b16 %v3480, %v3476
    %v3621 = vpack.c.b16 %v3481, %v3477
    %v3622 = vpack.c.b16 %v3482, %v3478
    %v3623 = vpack.c.b16 %v3483, %v3479
    %v3624 = vpack.c.b16 %v3488, %v3484
    %v3625 = vpack.c.b16 %v3489, %v3485
    %v3626 = vpack.c.b16 %v3490, %v3486
    %v3627 = vpack.c.b16 %v3491, %v3487
    %v3628 = vpack.c.b16 %v3496, %v3492
    %v3629 = vpack.c.b16 %v3497, %v3493
    %v3630 = vpack.c.b16 %v3498, %v3494
    %v3631 = vpack.c.b16 %v3499, %v3495
    %v3632 = vpack.c.b16 %v3504, %v3500
    %v3633 = vpack.c.b16 %v3505, %v3501
    %v3634 = vpack.c.b16 %v3506, %v3502
    %v3635 = vpack.c.b16 %v3507, %v3503
    %3764 = vmatprep.subr.bf16.mxu0 %v3509
    %3765 = vmatpush1.bf16.msra.mxu0 %v3508
    %3766 = vmatprep.subr.bf16.mxu0 %v3513
    %3767 = vmatpush1.bf16.msra.mxu0 %v3512
    %3768 = vmatprep.subr.bf16.mxu0 %v3517
    %3769 = vmatpush1.bf16.msra.mxu0 %v3516
    %3770 = vmatprep.subr.bf16.mxu0 %v3521
    %3771 = vmatpush1.bf16.msra.mxu0 %v3520
    %3772 = vmatprep.subr.bf16.mxu0 %v3525
    %3773 = vmatpush1.bf16.msra.mxu0 %v3524
    %3774 = vmatprep.subr.bf16.mxu0 %v3529
    %3775 = vmatpush1.bf16.msra.mxu0 %v3528
    %3776 = vmatprep.subr.bf16.mxu0 %v3533
    %3777 = vmatpush1.bf16.msra.mxu0 %v3532
    %3778 = vmatprep.subr.bf16.mxu0 %v3537
    %3779 = vmatpush1.bf16.msra.mxu0 %v3536
    %3780 = vmatprep.subr.bf16.mxu0 %v3541
    %3781 = vmatpush1.bf16.msra.mxu0 %v3540
    %3782 = vmatprep.subr.bf16.mxu0 %v3545
    %3783 = vmatpush1.bf16.msra.mxu0 %v3544
    %3784 = vmatprep.subr.bf16.mxu0 %v3549
    %3785 = vmatpush1.bf16.msra.mxu0 %v3548
    %3786 = vmatprep.subr.bf16.mxu0 %v3553
    %3787 = vmatpush1.bf16.msra.mxu0 %v3552
    %3788 = vmatprep.subr.bf16.mxu0 %v3557
    %3789 = vmatpush1.bf16.msra.mxu0 %v3556
    %3790 = vmatprep.subr.bf16.mxu0 %v3561
    %3791 = vmatpush1.bf16.msra.mxu0 %v3560
    %3792 = vmatprep.subr.bf16.mxu0 %v3565
    %3793 = vmatpush1.bf16.msra.mxu0 %v3564
    %3794 = vmatprep.subr.bf16.mxu0 %v3569
    %3795 = vmatpush1.bf16.msra.mxu0 %v3568
    %3796 = vmatprep.mubr.bf16.mxu0 %v2969
    %3797 = vmatmul.mubr.bf16.gmra.mrb[0].mxu0 %v2968
    %v3798 = vpop.f32.mrb[0].mxu0
    %v3799 = vadd.f32 %v3107, %v3798
    %v3800 = vpop.f32.mrb[0].mxu0
    %v3801 = vadd.f32 %v3111, %v3800
    %v3802 = vpop.f32.mrb[0].mxu0
    %v3803 = vpop.f32.mrb[0].mxu0
    %3804 = vdwg.mxu0
    %3805 = vmatprep.subr.bf16.mxu0 %v3573
    %3806 = vmatpush1.bf16.msra.mxu0 %v3572
    %3807 = vmatprep.subr.bf16.mxu0 %v3577
    %3808 = vmatpush1.bf16.msra.mxu0 %v3576
    %3809 = vmatprep.subr.bf16.mxu0 %v3581
    %3810 = vmatpush1.bf16.msra.mxu0 %v3580
    %3811 = vmatprep.subr.bf16.mxu0 %v3585
    %3812 = vmatpush1.bf16.msra.mxu0 %v3584
    %3813 = vmatprep.subr.bf16.mxu0 %v3589
    %3814 = vmatpush1.bf16.msra.mxu0 %v3588
    %3815 = vmatprep.subr.bf16.mxu0 %v3593
    %3816 = vmatpush1.bf16.msra.mxu0 %v3592
    %3817 = vmatprep.subr.bf16.mxu0 %v3597
    %3818 = vmatpush1.bf16.msra.mxu0 %v3596
    %3819 = vmatprep.subr.bf16.mxu0 %v3601
    %3820 = vmatpush1.bf16.msra.mxu0 %v3600
    %3821 = vmatprep.subr.bf16.mxu0 %v3605
    %3822 = vmatpush1.bf16.msra.mxu0 %v3604
    %3823 = vmatprep.subr.bf16.mxu0 %v3609
    %3824 = vmatpush1.bf16.msra.mxu0 %v3608
    %3825 = vmatprep.subr.bf16.mxu0 %v3613
    %3826 = vmatpush1.bf16.msra.mxu0 %v3612
    %3827 = vmatprep.subr.bf16.mxu0 %v3617
    %3828 = vmatpush1.bf16.msra.mxu0 %v3616
    %3829 = vmatprep.subr.bf16.mxu0 %v3621
    %3830 = vmatpush1.bf16.msra.mxu0 %v3620
    %3831 = vmatprep.subr.bf16.mxu0 %v3625
    %3832 = vmatpush1.bf16.msra.mxu0 %v3624
    %3833 = vmatprep.subr.bf16.mxu0 %v3629
    %3834 = vmatpush1.bf16.msra.mxu0 %v3628
    %3835 = vmatprep.subr.bf16.mxu0 %v3633
    %3836 = vmatpush1.bf16.msra.mxu0 %v3632
    %3837 = vmatprep.mubr.bf16.mxu0 %v2971
    %3838 = vmatmul.mubr.bf16.gmra.mrb[0].mxu0 %v2970
    %v3839 = vpop.f32.mrb[0].mxu0
    %v3840 = vadd.f32 %v3799, %v3839
    %v3841 = vpop.f32.mrb[0].mxu0
    %v3842 = vadd.f32 %v3801, %v3841
    %v3843 = vpop.f32.mrb[0].mxu0
    %v3844 = vpop.f32.mrb[0].mxu0
    %3845 = vdwg.mxu0
    %3846 = vmatprep.subr.bf16.mxu0 %v3511
    %3847 = vmatpush1.bf16.msra.mxu0 %v3510
    %3848 = vmatprep.subr.bf16.mxu0 %v3515
    %3849 = vmatpush1.bf16.msra.mxu0 %v3514
    %3850 = vmatprep.subr.bf16.mxu0 %v3519
    %3851 = vmatpush1.bf16.msra.mxu0 %v3518
    %3852 = vmatprep.subr.bf16.mxu0 %v3523
    %3853 = vmatpush1.bf16.msra.mxu0 %v3522
    %3854 = vmatprep.subr.bf16.mxu0 %v3527
    %3855 = vmatpush1.bf16.msra.mxu0 %v3526
    %3856 = vmatprep.subr.bf16.mxu0 %v3531
    %3857 = vmatpush1.bf16.msra.mxu0 %v3530
    %3858 = vmatprep.subr.bf16.mxu0 %v3535
    %3859 = vmatpush1.bf16.msra.mxu0 %v3534
    %3860 = vmatprep.subr.bf16.mxu0 %v3539
    %3861 = vmatpush1.bf16.msra.mxu0 %v3538
    %3862 = vmatprep.subr.bf16.mxu0 %v3543
    %3863 = vmatpush1.bf16.msra.mxu0 %v3542
    %3864 = vmatprep.subr.bf16.mxu0 %v3547
    %3865 = vmatpush1.bf16.msra.mxu0 %v3546
    %3866 = vmatprep.subr.bf16.mxu0 %v3551
    %3867 = vmatpush1.bf16.msra.mxu0 %v3550
    %3868 = vmatprep.subr.bf16.mxu0 %v3555
    %3869 = vmatpush1.bf16.msra.mxu0 %v3554
    %3870 = vmatprep.subr.bf16.mxu0 %v3559
    %3871 = vmatpush1.bf16.msra.mxu0 %v3558
    %3872 = vmatprep.subr.bf16.mxu0 %v3563
    %3873 = vmatpush1.bf16.msra.mxu0 %v3562
    %3874 = vmatprep.subr.bf16.mxu0 %v3567
    %3875 = vmatpush1.bf16.msra.mxu0 %v3566
    %3876 = vmatprep.subr.bf16.mxu0 %v3571
    %3877 = vmatpush1.bf16.msra.mxu0 %v3570
    %3878 = vmatprep.mubr.bf16.mxu0 %v2969
    %3879 = vmatmul.mubr.bf16.gmra.mrb[0].mxu0 %v2968
    %v3880 = vpop.f32.mrb[0].mxu0
    %v3881 = vadd.f32 %v3115, %v3880
    %v3882 = vpop.f32.mrb[0].mxu0
    %v3883 = vadd.f32 %v3119, %v3882
    %v3884 = vpop.f32.mrb[0].mxu0
    %v3885 = vpop.f32.mrb[0].mxu0
    %3886 = vdwg.mxu0
    %3887 = vmatprep.subr.bf16.mxu0 %v3575
    %3888 = vmatpush1.bf16.msra.mxu0 %v3574
    %3889 = vmatprep.subr.bf16.mxu0 %v3579
    %3890 = vmatpush1.bf16.msra.mxu0 %v3578
    %3891 = vmatprep.subr.bf16.mxu0 %v3583
    %3892 = vmatpush1.bf16.msra.mxu0 %v3582
    %3893 = vmatprep.subr.bf16.mxu0 %v3587
    %3894 = vmatpush1.bf16.msra.mxu0 %v3586
    %3895 = vmatprep.subr.bf16.mxu0 %v3591
    %3896 = vmatpush1.bf16.msra.mxu0 %v3590
    %3897 = vmatprep.subr.bf16.mxu0 %v3595
    %3898 = vmatpush1.bf16.msra.mxu0 %v3594
    %3899 = vmatprep.subr.bf16.mxu0 %v3599
    %3900 = vmatpush1.bf16.msra.mxu0 %v3598
    %3901 = vmatprep.subr.bf16.mxu0 %v3603
    %3902 = vmatpush1.bf16.msra.mxu0 %v3602
    %3903 = vmatprep.subr.bf16.mxu0 %v3607
    %3904 = vmatpush1.bf16.msra.mxu0 %v3606
    %3905 = vmatprep.subr.bf16.mxu0 %v3611
    %3906 = vmatpush1.bf16.msra.mxu0 %v3610
    %3907 = vmatprep.subr.bf16.mxu0 %v3615
    %3908 = vmatpush1.bf16.msra.mxu0 %v3614
    %3909 = vmatprep.subr.bf16.mxu0 %v3619
    %3910 = vmatpush1.bf16.msra.mxu0 %v3618
    %3911 = vmatprep.subr.bf16.mxu0 %v3623
    %3912 = vmatpush1.bf16.msra.mxu0 %v3622
    %3913 = vmatprep.subr.bf16.mxu0 %v3627
    %3914 = vmatpush1.bf16.msra.mxu0 %v3626
    %3915 = vmatprep.subr.bf16.mxu0 %v3631
    %3916 = vmatpush1.bf16.msra.mxu0 %v3630
    %3917 = vmatprep.subr.bf16.mxu0 %v3635
    %3918 = vmatpush1.bf16.msra.mxu0 %v3634
    %3919 = vmatprep.mubr.bf16.mxu0 %v2971
    %3920 = vmatmul.mubr.bf16.gmra.mrb[0].mxu0 %v2970
    %v3921 = vpop.f32.mrb[0].mxu0
    %v3922 = vadd.f32 %v3881, %v3921
    %v3923 = vpop.f32.mrb[0].mxu0
    %v3924 = vadd.f32 %v3883, %v3923
    %v3925 = vpop.f32.mrb[0].mxu0
    %v3926 = vpop.f32.mrb[0].mxu0
    %3927 = vdwg.mxu0
    %v3928 = vmul.f32 %v3840, 0.2
    %v3929 = vmul.f32 %v3842, 0.2
    %v3930 = vmul.f32 %v3922, 0.2
    %v3931 = vmul.f32 %v3924, 0.2
    %v3932 = vmax.f32 %v3840, %v3928
    %v3933 = vmax.f32 %v3842, %v3929
    %v3934 = vmax.f32 %v3922, %v3930
    %v3935 = vmax.f32 %v3924, %v3931
    %3936 = vst [vmem:[#allocation8] sm:$0xff] %v3932
    %3937 = vst [vmem:[#allocation8 + $0x8] sm:$0xff] %v3933
    %3938 = vst [vmem:[#allocation8 + $0x10] sm:$0xff] %v3934
    %3939 = vst [vmem:[#allocation8 + $0x18] sm:$0xff] %v3935
    // Predicated region
    $region26: #{tpu_custom_call.1} parent=1 // pred_check
      _
    $region27: #{tpu_custom_call.1} parent=1 // pred_check_branch
      %3941 = sbr.rel (0) target = $region29
    $region28: #{tpu_custom_call.1} parent=1 // pred_region
      %s3943 = ssub.s32 512, 512
      %3944 = vsyncadd [#allocation4], %s3943
      %s3946 = sshll.u32 [#allocation8], 4
      %s3947 = int_to_ptr.vmem [resolvable:$true] %s3946
      %3949 = dma.vmem_to_hbm [thread:$0]  %s3947, 512, %s3, [#allocation4]
    $region29: #{tpu_custom_call.1} parent=1 // pred_fallthru
      _
    // Predicated region
    $region30: #{tpu_custom_call.1} parent=1 // pred_check
      _
    $region31: #{tpu_custom_call.1} parent=1 // pred_check_branch
      %3951 = sbr.rel (0) target = $region33
    $region32: #{tpu_custom_call.1} parent=1 // pred_region
      %3952 = dma.done [#allocation4], 512
    $region33: #{tpu_custom_call.1} parent=1 // pred_fallthru
      _
    %3953 = vsyncpa [#allocation3], 1
    %3954 = vsyncpa [#allocation6], 1
    %3955 = vsyncpa [#allocation4], 1

</llo_original>
